<compile_context>
chip_gen: v6e
topology: v6e:2x2x1
jax: 0.10.0
libtpu: 0.0.40
codegen_flags: <defaults>
</compile_context>

<pallas_src>
import jax
import jax.numpy as jnp
from jax.experimental import pallas as pl
from jax.experimental.pallas import tpu as pltpu


def mlp_kernel(x_ref, w1_ref, b1_ref, w2_ref, b2_ref, w3_ref, b3_ref,
               w4_ref, b4_ref, o_ref):
    # Activations are (features, TB): batch lives on the lane/N axis, so every
    # MXU matmul runs with full-width N = TB.
    # Layer 1: (64, 8) @ (8, TB) + (64, 1) -> ReLU
    h = jnp.dot(w1_ref[...], x_ref[...], preferred_element_type=jnp.float32)
    h = jnp.maximum(h + b1_ref[...], 0.0)
    # Layer 2: (128, 64) @ (64, TB) + (128, 1) -> ReLU
    h = jnp.dot(w2_ref[...], h.astype(w2_ref.dtype),
                preferred_element_type=jnp.float32)
    h = jnp.maximum(h + b2_ref[...], 0.0)
    # Layer 3: (64, 128) @ (128, TB) + (64, 1) -> ReLU
    h = jnp.dot(w3_ref[...], h.astype(w3_ref.dtype),
                preferred_element_type=jnp.float32)
    h = jnp.maximum(h + b3_ref[...], 0.0)
    # Layer 4 (out_features = 1) on the VPU/XLU instead of an MXU push:
    # (64, TB) * (64, 1) -> sublane reduce -> (1, TB), then + scalar bias.
    out = jnp.sum(h * w4_ref[...], axis=0, keepdims=True) + b4_ref[...]
    o_ref[...] = out.astype(o_ref.dtype)
    # TODO(synk): if a v5e bundle dump shows the single vector-store slot
    # saturating at large TB, chunk the lane axis with a short
    # lax.fori_loop(..., unroll=True) so inter-layer activations stay in vregs.


def _resident_spec(shape):
    """Constant index_map => block stays VMEM-resident across the whole grid.
    Single-buffered: it is never re-fetched, so a second buffer is wasted."""
    try:
        return pl.BlockSpec(shape, lambda i: (0, 0),
                            pipeline_mode=pl.Buffered(1))
    except (TypeError, AttributeError):   # older jax without pipeline_mode
        return pl.BlockSpec(shape, lambda i: (0, 0))


def mlp_forward(x, params, *, tb=2048, use_bf16=False, x_is_transposed=False):
    """Fused MLP forward (inference / eval mode: dropout is identity).

    x: (B, F) float32, or (F, B) float32 if x_is_transposed=True (preferred
       upstream layout -- avoids the wrapper-side transpose copy entirely).
    Returns (B, 1) float32.
    """
    if x_is_transposed:
        F, B = x.shape
    else:
        B, F = x.shape

    # ---- tile sizing -------------------------------------------------------
    # Big tiles amortize the ~0.35 us per-grid-step overhead; cap so that any
    # padded batch >= 256 still yields >= 2 tiles (megacore split on v7x).
    tb = max(128, pl.cdiv(tb, 128) * 128)
    b128 = pl.cdiv(B, 128) * 128
    tb = min(tb, b128)
    if b128 >= 256:
        tb = max(128, min(tb, (b128 // 2) // 128 * 128))
    b_pad = pl.cdiv(B, tb) * tb
    n_tiles = b_pad // tb

    # Pad the tiny feature dim to a full sublane group (5 -> 8).
    f_pad = max(8, pl.cdiv(F, 8) * 8)

    mm_dtype = jnp.bfloat16 if use_bf16 else jnp.float32

    # ---- data prep: ONE fused pad/copy (no separate transpose HBM pass) ----
    if x_is_transposed:
        x_t = jnp.pad(x, ((0, f_pad - F), (0, b_pad - B)))
    else:
        x_t = jnp.pad(x.T, ((0, f_pad - F), (0, b_pad - B)))
    x_t = x_t.astype(mm_dtype)

    # Weights: PyTorch-native (out, in); w1 zero-padded on the feature axis.
    w1 = jnp.pad(params["w1"], ((0, 0), (0, f_pad - F))).astype(mm_dtype)
    w2 = params["w2"].astype(mm_dtype)
    w3 = params["w3"].astype(mm_dtype)
    w4 = params["w4"]                      # VPU epilogue operand: keep f32
    b1, b2, b3, b4 = params["b1"], params["b2"], params["b3"], params["b4"]

    out = pl.pallas_call(
        mlp_kernel,
        out_shape=jax.ShapeDtypeStruct((1, b_pad), jnp.float32),
        grid=(n_tiles,),
        in_specs=[
            pl.BlockSpec((f_pad, tb), lambda i: (0, i)),  # x tile (lane-dense)
            _resident_spec(w1.shape), _resident_spec(b1.shape),
            _resident_spec(w2.shape), _resident_spec(b2.shape),
            _resident_spec(w3.shape), _resident_spec(b3.shape),
            _resident_spec(w4.shape), _resident_spec(b4.shape),
        ],
        out_specs=pl.BlockSpec((1, tb), lambda i: (0, i)),
        compiler_params=pltpu.CompilerParams(
            dimension_semantics=("parallel",),
            # ~67 KB resident weights + 2x(f_pad*tb*4) input bufs +
            # 2x(tb*4) output bufs + Mosaic temporaries for the (128,tb)
            # intermediates: 32 MiB is ample up to tb ~ 8-16K.  Raise toward
            # ~48 MiB beyond that on v7x (64 MiB/TC); v5e/v6e can go to 64 MiB.
            vmem_limit_bytes=32 << 20,
        ),
    )(x_t, w1, b1, w2, b2, w3, b3, w4, b4)

    return out[0, :B].reshape(B, 1)


def init_params(key, input_ftrs=5):
    """Deterministic init mimicking PyTorch's default Linear init
    (uniform(-1/sqrt(fan_in), 1/sqrt(fan_in))).

    Layout for the kernel:
      w1..w3 : PyTorch-native (out, in);  b1..b3 : (out, 1)
      w4     : (in, 1)  (= PyTorch w4.T, for the VPU broadcast-reduce)
      b4     : (1, 1)
    """
    dims = [(input_ftrs, 64), (64, 128), (128, 64), (64, 1)]
    params = {}
    for i, (fan_in, fan_out) in enumerate(dims, start=1):
        key, kw, kb = jax.random.split(key, 3)
        bound = 1.0 / (fan_in ** 0.5)
        if i < 4:
            params[f"w{i}"] = jax.random.uniform(
                kw, (fan_out, fan_in), jnp.float32, -bound, bound)
            params[f"b{i}"] = jax.random.uniform(
                kb, (fan_out, 1), jnp.float32, -bound, bound)
        else:  # final layer stored as a column for the VPU epilogue
            params[f"w{i}"] = jax.random.uniform(
                kw, (fan_in, fan_out), jnp.float32, -bound, bound)   # (64, 1)
            params[f"b{i}"] = jax.random.uniform(
                kb, (1, fan_out), jnp.float32, -bound, bound)        # (1, 1)
    return params


def reference_forward(x, params):
    h = jnp.maximum(x @ params["w1"].T + params["b1"].T, 0.0)
    h = jnp.maximum(h @ params["w2"].T + params["b2"].T, 0.0)
    h = jnp.maximum(h @ params["w3"].T + params["b3"].T, 0.0)
    return h @ params["w4"] + params["b4"]


if __name__ == "__main__":
    key = jax.random.PRNGKey(0)
    key, kx = jax.random.split(key)
    params = init_params(key, input_ftrs=5)

    # Non-multiple-of-128 batch: exercises feature padding (5->8), batch
    # padding, a multi-tile grid (tb=2048 -> 3 tiles) and the megacore split.
    B = 5000
    x = jax.random.normal(kx, (B, 5), jnp.float32)

    ref = reference_forward(x, params)

    # f32 MXU operands: strict tolerance.
    out_f32 = jax.block_until_ready(mlp_forward(x, params, tb=2048))
    assert out_f32.shape == (B, 1), out_f32.shape
    assert jnp.allclose(out_f32, ref, atol=1e-4, rtol=1e-4), \
        f"f32 max err {jnp.max(jnp.abs(out_f32 - ref))}"

    # bf16 MXU operands (f32 accumulation): tolerance-gated fast path.
    out_bf16 = jax.block_until_ready(
        mlp_forward(x, params, tb=2048, use_bf16=True))
    assert out_bf16.shape == (B, 1), out_bf16.shape
    assert jnp.allclose(out_bf16, ref, atol=5e-2, rtol=5e-2), \
        f"bf16 max err {jnp.max(jnp.abs(out_bf16 - ref))}"

    print("KERNEL_OK")
</pallas_src>

<mosaic_0001>
module attributes {stable_mosaic.version = 11 : i64} {
  func.func @mlp_kernel(%arg0: i32, %arg1: memref<8x2048xf32, #tpu.memory_space<vmem>>, %arg2: memref<64x8xf32, #tpu.memory_space<vmem>>, %arg3: memref<64x1xf32, #tpu.memory_space<vmem>>, %arg4: memref<128x64xf32, #tpu.memory_space<vmem>>, %arg5: memref<128x1xf32, #tpu.memory_space<vmem>>, %arg6: memref<64x128xf32, #tpu.memory_space<vmem>>, %arg7: memref<64x1xf32, #tpu.memory_space<vmem>>, %arg8: memref<64x1xf32, #tpu.memory_space<vmem>>, %arg9: memref<1x1xf32, #tpu.memory_space<vmem>>, %arg10: memref<1x2048xf32, #tpu.memory_space<vmem>>) attributes {dimension_semantics = [#tpu.dimension_semantics<parallel>], iteration_bounds = array<i64: 3>, scalar_prefetch = 0 : i64, scratch_operands = 0 : i64, tpu.core_type = #tpu.core_type<tc>, window_params = [{transform_indices = @transform_0, window_bounds = array<i64: 8, 2048>}, {pipeline_mode = #tpu.pipeline_mode<synchronous>, transform_indices = @transform_1, window_bounds = array<i64: 64, 8>}, {pipeline_mode = #tpu.pipeline_mode<synchronous>, transform_indices = @transform_2, window_bounds = array<i64: 64, 1>}, {pipeline_mode = #tpu.pipeline_mode<synchronous>, transform_indices = @transform_3, window_bounds = array<i64: 128, 64>}, {pipeline_mode = #tpu.pipeline_mode<synchronous>, transform_indices = @transform_4, window_bounds = array<i64: 128, 1>}, {pipeline_mode = #tpu.pipeline_mode<synchronous>, transform_indices = @transform_5, window_bounds = array<i64: 64, 128>}, {pipeline_mode = #tpu.pipeline_mode<synchronous>, transform_indices = @transform_6, window_bounds = array<i64: 64, 1>}, {pipeline_mode = #tpu.pipeline_mode<synchronous>, transform_indices = @transform_7, window_bounds = array<i64: 64, 1>}, {pipeline_mode = #tpu.pipeline_mode<synchronous>, transform_indices = @transform_8, window_bounds = array<i64: 1, 1>}, {transform_indices = @transform_9, window_bounds = array<i64: 1, 2048>}]} {
    %c0 = arith.constant 0 : index
    %c0_0 = arith.constant 0 : index
    %0 = vector.load %arg2[%c0, %c0_0] : memref<64x8xf32, #tpu.memory_space<vmem>>, vector<64x8xf32>
    %c0_1 = arith.constant 0 : index
    %c0_2 = arith.constant 0 : index
    %1 = vector.load %arg1[%c0_1, %c0_2] : memref<8x2048xf32, #tpu.memory_space<vmem>>, vector<8x2048xf32>
    %cst = arith.constant dense<0.000000e+00> : vector<64x2048xf32>
    %2 = tpu.matmul %0, %1, %cst {dimension_numbers = #tpu.dot_dimension_numbers<[1], [0], [0], [1], [0, 0, 1, 1], [], []>} : vector<64x8xf32>, vector<8x2048xf32>, vector<64x2048xf32> -> vector<64x2048xf32>
    %c0_3 = arith.constant 0 : index
    %c0_4 = arith.constant 0 : index
    %3 = vector.load %arg3[%c0_3, %c0_4] : memref<64x1xf32, #tpu.memory_space<vmem>>, vector<64x1xf32>
    %4 = vector.broadcast %3 : vector<64x1xf32> to vector<64x2048xf32>
    %5 = arith.addf %2, %4 : vector<64x2048xf32>
    %cst_5 = arith.constant 0.000000e+00 : f32
    %6 = vector.broadcast %cst_5 : f32 to vector<64x2048xf32>
    %7 = arith.maximumf %5, %6 : vector<64x2048xf32>
    %c0_6 = arith.constant 0 : index
    %c0_7 = arith.constant 0 : index
    %8 = vector.load %arg4[%c0_6, %c0_7] : memref<128x64xf32, #tpu.memory_space<vmem>>, vector<128x64xf32>
    %cst_8 = arith.constant dense<0.000000e+00> : vector<128x2048xf32>
    %9 = tpu.matmul %8, %7, %cst_8 {dimension_numbers = #tpu.dot_dimension_numbers<[1], [0], [0], [1], [0, 0, 1, 1], [], []>} : vector<128x64xf32>, vector<64x2048xf32>, vector<128x2048xf32> -> vector<128x2048xf32>
    %c0_9 = arith.constant 0 : index
    %c0_10 = arith.constant 0 : index
    %10 = vector.load %arg5[%c0_9, %c0_10] : memref<128x1xf32, #tpu.memory_space<vmem>>, vector<128x1xf32>
    %11 = vector.broadcast %10 : vector<128x1xf32> to vector<128x2048xf32>
    %12 = arith.addf %9, %11 : vector<128x2048xf32>
    %cst_11 = arith.constant 0.000000e+00 : f32
    %13 = vector.broadcast %cst_11 : f32 to vector<128x2048xf32>
    %14 = arith.maximumf %12, %13 : vector<128x2048xf32>
    %c0_12 = arith.constant 0 : index
    %c0_13 = arith.constant 0 : index
    %15 = vector.load %arg6[%c0_12, %c0_13] : memref<64x128xf32, #tpu.memory_space<vmem>>, vector<64x128xf32>
    %cst_14 = arith.constant dense<0.000000e+00> : vector<64x2048xf32>
    %16 = tpu.matmul %15, %14, %cst_14 {dimension_numbers = #tpu.dot_dimension_numbers<[1], [0], [0], [1], [0, 0, 1, 1], [], []>} : vector<64x128xf32>, vector<128x2048xf32>, vector<64x2048xf32> -> vector<64x2048xf32>
    %c0_15 = arith.constant 0 : index
    %c0_16 = arith.constant 0 : index
    %17 = vector.load %arg7[%c0_15, %c0_16] : memref<64x1xf32, #tpu.memory_space<vmem>>, vector<64x1xf32>
    %18 = vector.broadcast %17 : vector<64x1xf32> to vector<64x2048xf32>
    %19 = arith.addf %16, %18 : vector<64x2048xf32>
    %cst_17 = arith.constant 0.000000e+00 : f32
    %20 = vector.broadcast %cst_17 : f32 to vector<64x2048xf32>
    %21 = arith.maximumf %19, %20 : vector<64x2048xf32>
    %c0_18 = arith.constant 0 : index
    %c0_19 = arith.constant 0 : index
    %22 = vector.load %arg8[%c0_18, %c0_19] : memref<64x1xf32, #tpu.memory_space<vmem>>, vector<64x1xf32>
    %23 = vector.broadcast %22 : vector<64x1xf32> to vector<64x2048xf32>
    %24 = arith.mulf %21, %23 : vector<64x2048xf32>
    %cst_20 = arith.constant dense<0.000000e+00> : vector<2048xf32>
    %25 = vector.multi_reduction <add>, %24, %cst_20 [0] : vector<64x2048xf32> to vector<2048xf32>
    %26 = vector.shape_cast %25 : vector<2048xf32> to vector<1x2048xf32>
    %c0_21 = arith.constant 0 : index
    %c0_22 = arith.constant 0 : index
    %27 = vector.load %arg9[%c0_21, %c0_22] : memref<1x1xf32, #tpu.memory_space<vmem>>, vector<1x1xf32>
    %28 = vector.broadcast %27 : vector<1x1xf32> to vector<1x2048xf32>
    %29 = arith.addf %26, %28 : vector<1x2048xf32>
    %c0_23 = arith.constant 0 : index
    %c0_24 = arith.constant 0 : index
    %30 = vector.load %arg10[%c0_23, %c0_24] : memref<1x2048xf32, #tpu.memory_space<vmem>>, vector<1x2048xf32>
    tpu.vector_store %arg10[%c0_23, %c0_24], %29 {strides = array<i32>} : memref<1x2048xf32, #tpu.memory_space<vmem>>, vector<1x2048xf32>,
    return
  }
  func.func @transform_0(%arg0: i32) -> (i32, i32) {
    %c0_i32 = arith.constant 0 : i32
    %c0_i32_0 = arith.constant 0 : i32
    return %c0_i32, %arg0 : i32, i32
  }
  func.func @transform_1(%arg0: i32) -> (i32, i32) {
    %c0_i32 = arith.constant 0 : i32
    %c0_i32_0 = arith.constant 0 : i32
    %c0_i32_1 = arith.constant 0 : i32
    return %c0_i32, %c0_i32_0 : i32, i32
  }
  func.func @transform_2(%arg0: i32) -> (i32, i32) {
    %c0_i32 = arith.constant 0 : i32
    %c0_i32_0 = arith.constant 0 : i32
    %c0_i32_1 = arith.constant 0 : i32
    return %c0_i32, %c0_i32_0 : i32, i32
  }
  func.func @transform_3(%arg0: i32) -> (i32, i32) {
    %c0_i32 = arith.constant 0 : i32
    %c0_i32_0 = arith.constant 0 : i32
    %c0_i32_1 = arith.constant 0 : i32
    return %c0_i32, %c0_i32_0 : i32, i32
  }
  func.func @transform_4(%arg0: i32) -> (i32, i32) {
    %c0_i32 = arith.constant 0 : i32
    %c0_i32_0 = arith.constant 0 : i32
    %c0_i32_1 = arith.constant 0 : i32
    return %c0_i32, %c0_i32_0 : i32, i32
  }
  func.func @transform_5(%arg0: i32) -> (i32, i32) {
    %c0_i32 = arith.constant 0 : i32
    %c0_i32_0 = arith.constant 0 : i32
    %c0_i32_1 = arith.constant 0 : i32
    return %c0_i32, %c0_i32_0 : i32, i32
  }
  func.func @transform_6(%arg0: i32) -> (i32, i32) {
    %c0_i32 = arith.constant 0 : i32
    %c0_i32_0 = arith.constant 0 : i32
    %c0_i32_1 = arith.constant 0 : i32
    return %c0_i32, %c0_i32_0 : i32, i32
  }
  func.func @transform_7(%arg0: i32) -> (i32, i32) {
    %c0_i32 = arith.constant 0 : i32
    %c0_i32_0 = arith.constant 0 : i32
    %c0_i32_1 = arith.constant 0 : i32
    return %c0_i32, %c0_i32_0 : i32, i32
  }
  func.func @transform_8(%arg0: i32) -> (i32, i32) {
    %c0_i32 = arith.constant 0 : i32
    %c0_i32_0 = arith.constant 0 : i32
    %c0_i32_1 = arith.constant 0 : i32
    return %c0_i32, %c0_i32_0 : i32, i32
  }
  func.func @transform_9(%arg0: i32) -> (i32, i32) {
    %c0_i32 = arith.constant 0 : i32
    %c0_i32_0 = arith.constant 0 : i32
    return %c0_i32, %arg0 : i32, i32
  }
}

</mosaic_0001>

<llo_original>
// kernel: tpu_custom_call.1
$region0: #{tpu_custom_call.1}
  #allocation0 [shape = 'u32[]', space=smem, size = 0x4, offset = 0x4, fixed_abs, tag = 'smem constant byte address 0x4 - core index']
  #allocation1 [shape = 'u32[144,128]{1,0:T(1,128)}', space=vmem, size = 0x12000, scoped, tag = 'internal scratch']
  #allocation2 [shape = 'f32[1,1]{1,0:T(1,128)S(1)}', space=vmem, size = 0x200, scoped, tag = 'scoped memory for tpu_custom_call.1']
  %s0 = inlined_call_operand.vmem [shape: f32[8,6144], index: 0, kind: input, shape index: {}]
  %s1 = inlined_call_operand.vmem [shape: f32[64,8], index: 1, kind: input, shape index: {}]
  %s2 = inlined_call_operand.vmem [shape: f32[64,1], index: 2, kind: input, shape index: {}]
  %s3 = inlined_call_operand.vmem [shape: f32[128,64], index: 3, kind: input, shape index: {}]
  %s4 = inlined_call_operand.vmem [shape: f32[128,1], index: 4, kind: input, shape index: {}]
  %s5 = inlined_call_operand.vmem [shape: f32[64,128], index: 5, kind: input, shape index: {}]
  %s6 = inlined_call_operand.vmem [shape: f32[64,1], index: 6, kind: input, shape index: {}]
  %s7 = inlined_call_operand.vmem [shape: f32[64,1], index: 7, kind: input, shape index: {}]
  %s8 = inlined_call_operand.<no memory space> [shape: f32[1,1], index: 8, kind: input, shape index: {}]
  %s9 = inlined_call_operand.hbm [shape: f32[1,6144], index: 9, kind: output, shape index: {}]
  %s10 = sld [smem:[#allocation0]]
  $region69: #{tpu_custom_call.1} parent=0
    _
  %s12 = ssub.s32 1, %s10
  %s13 = scalar_select 0, %s12, %s10
  %v14 = vstv %s8
  %15 = vst [vmem:[#allocation2] sm:$0x1] %v14
  $region1: #{tpu_custom_call.1} parent=0
    #allocation3 [shape = 'u8[16384]{0}', space=vmem, size = 0x4000, scoped, tag = 'output window, operand 0']
    #allocation4 [shape = 's32[2]{0}', space=sflag, size = 0x8, scoped, tag = 'scoped memory for tpu_custom_call.1']
    %16 = vsyncpa [#allocation4], 0
    %s17 = scalar_lea.sflag [#allocation4], 1
    %18 = vsyncpa %s17, 0
    loop: start=0, step=1, limit=5
    $region2: #{tpu_custom_call.1} parent=1 // loop_pre_header
      _
    $region3: #{tpu_custom_call.1} parent=1 // loop_header
      %s20 = sphi 0, %s24
      %p21 = scmp.ge.s32.totalorder %s20, 5
      %s30 = sphi 0, %s32
      %s33 = sphi 0, %s30
      %s34 = sphi 0, %s33
      %s50 = sphi 0, %s34
      %s54 = sphi 0, %s54
      %s56 = sphi 0, %s54
      %s57 = sphi 0, %s56
      %s71 = sphi 0, %s57
      %s75 = sphi 0, %s75
      %s77 = sphi 0, %s75
      %s78 = sphi 0, %s77
      %s92 = sphi 0, %s78
      %s96 = sphi 0, %s96
      %s98 = sphi 0, %s96
      %s99 = sphi 0, %s98
      %s113 = sphi 0, %s99
      %s117 = sphi 0, %s117
      %s119 = sphi 0, %s117
      %s120 = sphi 0, %s119
      %s134 = sphi 0, %s120
      %s138 = sphi 0, %s138
      %s140 = sphi 0, %s138
      %s141 = sphi 0, %s140
      %s155 = sphi 0, %s141
      %s159 = sphi 0, %s159
      %s161 = sphi 0, %s159
      %s162 = sphi 0, %s161
      %s176 = sphi 0, %s162
      %s180 = sphi 0, %s180
      %s182 = sphi 0, %s180
      %s183 = sphi 0, %s182
      %s197 = sphi 0, %s183
      %s201 = sphi 0, %s201
      %s203 = sphi 0, %s201
      %s204 = sphi 0, %s203
      %s218 = sphi 0, %s204
      %s224 = sphi 0, %s226
      %s227 = sphi 0, %s224
      %s228 = sphi 0, %s227
      %s244 = sphi 0, %s228
    $region4: #{tpu_custom_call.1} parent=1 // loop_header_branch
      %23 = sbr.rel (%p21) target = $region8
    $region5: #{tpu_custom_call.1} parent=1 // loop_body
      %s25 = ssub.s32 %s20, 1
      %s26 = ssub.s32 %s20, 2
      %s27 = sadd.s32 %s20, 1
      %s28 = ssub.s32 %s20, %s27
      %p29 = scmp.eq.s32.totalorder %s28, 0
      %s31 = sadd.s32 %s30, 1
      %s32 = scalar_select %p29, %s30, %s31
      %p35 = pneg %p29
      %p36 = scmp.eq.s32.totalorder %s20, 2
      %p37 = por %p35, %p36
      %p38 = scmp.ne.s32.totalorder %s30, %s33
      %p39 = scmp.eq.s32.totalorder %s20, 0
      %p40 = por %p38, %p39
      %p41 = scmp.ne.s32.totalorder %s30, %s33
      %p42 = scmp.eq.s32.totalorder %s25, 2
      %p43 = por %p41, %p42
      %p44 = scmp.ne.s32.totalorder %s33, %s34
      %p45 = scmp.eq.s32.totalorder %s25, 0
      %p46 = por %p44, %p45
      %p47 = scmp.ne.s32.totalorder %s33, %s34
      %p48 = scmp.eq.s32.totalorder %s26, 2
      %p49 = por %p47, %p48
      %p51 = scmp.ne.s32.totalorder %s34, %s50
      %p52 = scmp.eq.s32.totalorder %s26, 0
      %p53 = por %p51, %p52
      %s55 = sadd.s32 %s54, 1
      %p58 = scmp.eq.s32.totalorder %s20, 2
      %p59 = scmp.ne.s32.totalorder %s54, %s56
      %p60 = scmp.eq.s32.totalorder %s20, 0
      %p61 = por %p59, %p60
      %p62 = scmp.ne.s32.totalorder %s54, %s56
      %p63 = scmp.eq.s32.totalorder %s25, 2
      %p64 = por %p62, %p63
      %p65 = scmp.ne.s32.totalorder %s56, %s57
      %p66 = scmp.eq.s32.totalorder %s25, 0
      %p67 = por %p65, %p66
      %p68 = scmp.ne.s32.totalorder %s56, %s57
      %p69 = scmp.eq.s32.totalorder %s26, 2
      %p70 = por %p68, %p69
      %p72 = scmp.ne.s32.totalorder %s57, %s71
      %p73 = scmp.eq.s32.totalorder %s26, 0
      %p74 = por %p72, %p73
      %s76 = sadd.s32 %s75, 1
      %p79 = scmp.eq.s32.totalorder %s20, 2
      %p80 = scmp.ne.s32.totalorder %s75, %s77
      %p81 = scmp.eq.s32.totalorder %s20, 0
      %p82 = por %p80, %p81
      %p83 = scmp.ne.s32.totalorder %s75, %s77
      %p84 = scmp.eq.s32.totalorder %s25, 2
      %p85 = por %p83, %p84
      %p86 = scmp.ne.s32.totalorder %s77, %s78
      %p87 = scmp.eq.s32.totalorder %s25, 0
      %p88 = por %p86, %p87
      %p89 = scmp.ne.s32.totalorder %s77, %s78
      %p90 = scmp.eq.s32.totalorder %s26, 2
      %p91 = por %p89, %p90
      %p93 = scmp.ne.s32.totalorder %s78, %s92
      %p94 = scmp.eq.s32.totalorder %s26, 0
      %p95 = por %p93, %p94
      %s97 = sadd.s32 %s96, 1
      %p100 = scmp.eq.s32.totalorder %s20, 2
      %p101 = scmp.ne.s32.totalorder %s96, %s98
      %p102 = scmp.eq.s32.totalorder %s20, 0
      %p103 = por %p101, %p102
      %p104 = scmp.ne.s32.totalorder %s96, %s98
      %p105 = scmp.eq.s32.totalorder %s25, 2
      %p106 = por %p104, %p105
      %p107 = scmp.ne.s32.totalorder %s98, %s99
      %p108 = scmp.eq.s32.totalorder %s25, 0
      %p109 = por %p107, %p108
      %p110 = scmp.ne.s32.totalorder %s98, %s99
      %p111 = scmp.eq.s32.totalorder %s26, 2
      %p112 = por %p110, %p111
      %p114 = scmp.ne.s32.totalorder %s99, %s113
      %p115 = scmp.eq.s32.totalorder %s26, 0
      %p116 = por %p114, %p115
      %s118 = sadd.s32 %s117, 1
      %p121 = scmp.eq.s32.totalorder %s20, 2
      %p122 = scmp.ne.s32.totalorder %s117, %s119
      %p123 = scmp.eq.s32.totalorder %s20, 0
      %p124 = por %p122, %p123
      %p125 = scmp.ne.s32.totalorder %s117, %s119
      %p126 = scmp.eq.s32.totalorder %s25, 2
      %p127 = por %p125, %p126
      %p128 = scmp.ne.s32.totalorder %s119, %s120
      %p129 = scmp.eq.s32.totalorder %s25, 0
      %p130 = por %p128, %p129
      %p131 = scmp.ne.s32.totalorder %s119, %s120
      %p132 = scmp.eq.s32.totalorder %s26, 2
      %p133 = por %p131, %p132
      %p135 = scmp.ne.s32.totalorder %s120, %s134
      %p136 = scmp.eq.s32.totalorder %s26, 0
      %p137 = por %p135, %p136
      %s139 = sadd.s32 %s138, 1
      %p142 = scmp.eq.s32.totalorder %s20, 2
      %p143 = scmp.ne.s32.totalorder %s138, %s140
      %p144 = scmp.eq.s32.totalorder %s20, 0
      %p145 = por %p143, %p144
      %p146 = scmp.ne.s32.totalorder %s138, %s140
      %p147 = scmp.eq.s32.totalorder %s25, 2
      %p148 = por %p146, %p147
      %p149 = scmp.ne.s32.totalorder %s140, %s141
      %p150 = scmp.eq.s32.totalorder %s25, 0
      %p151 = por %p149, %p150
      %p152 = scmp.ne.s32.totalorder %s140, %s141
      %p153 = scmp.eq.s32.totalorder %s26, 2
      %p154 = por %p152, %p153
      %p156 = scmp.ne.s32.totalorder %s141, %s155
      %p157 = scmp.eq.s32.totalorder %s26, 0
      %p158 = por %p156, %p157
      %s160 = sadd.s32 %s159, 1
      %p163 = scmp.eq.s32.totalorder %s20, 2
      %p164 = scmp.ne.s32.totalorder %s159, %s161
      %p165 = scmp.eq.s32.totalorder %s20, 0
      %p166 = por %p164, %p165
      %p167 = scmp.ne.s32.totalorder %s159, %s161
      %p168 = scmp.eq.s32.totalorder %s25, 2
      %p169 = por %p167, %p168
      %p170 = scmp.ne.s32.totalorder %s161, %s162
      %p171 = scmp.eq.s32.totalorder %s25, 0
      %p172 = por %p170, %p171
      %p173 = scmp.ne.s32.totalorder %s161, %s162
      %p174 = scmp.eq.s32.totalorder %s26, 2
      %p175 = por %p173, %p174
      %p177 = scmp.ne.s32.totalorder %s162, %s176
      %p178 = scmp.eq.s32.totalorder %s26, 0
      %p179 = por %p177, %p178
      %s181 = sadd.s32 %s180, 1
      %p184 = scmp.eq.s32.totalorder %s20, 2
      %p185 = scmp.ne.s32.totalorder %s180, %s182
      %p186 = scmp.eq.s32.totalorder %s20, 0
      %p187 = por %p185, %p186
      %p188 = scmp.ne.s32.totalorder %s180, %s182
      %p189 = scmp.eq.s32.totalorder %s25, 2
      %p190 = por %p188, %p189
      %p191 = scmp.ne.s32.totalorder %s182, %s183
      %p192 = scmp.eq.s32.totalorder %s25, 0
      %p193 = por %p191, %p192
      %p194 = scmp.ne.s32.totalorder %s182, %s183
      %p195 = scmp.eq.s32.totalorder %s26, 2
      %p196 = por %p194, %p195
      %p198 = scmp.ne.s32.totalorder %s183, %s197
      %p199 = scmp.eq.s32.totalorder %s26, 0
      %p200 = por %p198, %p199
      %s202 = sadd.s32 %s201, 1
      %p205 = scmp.eq.s32.totalorder %s20, 2
      %p206 = scmp.ne.s32.totalorder %s201, %s203
      %p207 = scmp.eq.s32.totalorder %s20, 0
      %p208 = por %p206, %p207
      %p209 = scmp.ne.s32.totalorder %s201, %s203
      %p210 = scmp.eq.s32.totalorder %s25, 2
      %p211 = por %p209, %p210
      %p212 = scmp.ne.s32.totalorder %s203, %s204
      %p213 = scmp.eq.s32.totalorder %s25, 0
      %p214 = por %p212, %p213
      %p215 = scmp.ne.s32.totalorder %s203, %s204
      %p216 = scmp.eq.s32.totalorder %s26, 2
      %p217 = por %p215, %p216
      %p219 = scmp.ne.s32.totalorder %s204, %s218
      %p220 = scmp.eq.s32.totalorder %s26, 0
      %p221 = por %p219, %p220
      %s222 = ssub.s32 %s20, %s27
      %p223 = scmp.eq.s32.totalorder %s222, 0
      %s225 = sadd.s32 %s224, 1
      %s226 = scalar_select %p223, %s224, %s225
      %p229 = pneg %p223
      %p230 = scmp.eq.s32.totalorder %s20, 2
      %p231 = por %p229, %p230
      %p232 = scmp.ne.s32.totalorder %s224, %s227
      %p233 = scmp.eq.s32.totalorder %s20, 0
      %p234 = por %p232, %p233
      %p235 = scmp.ne.s32.totalorder %s224, %s227
      %p236 = scmp.eq.s32.totalorder %s25, 2
      %p237 = por %p235, %p236
      %p238 = scmp.ne.s32.totalorder %s227, %s228
      %p239 = scmp.eq.s32.totalorder %s25, 0
      %p240 = por %p238, %p239
      %p241 = scmp.ne.s32.totalorder %s227, %s228
      %p242 = scmp.eq.s32.totalorder %s26, 2
      %p243 = por %p241, %p242
      %p245 = scmp.ne.s32.totalorder %s228, %s244
      %p246 = scmp.eq.s32.totalorder %s26, 0
      %p247 = por %p245, %p246
      %p248 = scmp.le.s32.totalorder 1, %s20
      %p249 = scmp.lt.s32.totalorder %s20, 4
      %p250 = pnand %p248, %p249
      %p251 = pneg %p250
      // Predicated region
      $region9: #{tpu_custom_call.1} parent=5 // pred_check
        _
      $region10: #{tpu_custom_call.1} parent=5 // pred_check_branch
        %253 = sbr.rel (%p250) target = $region12
      $region11: #{tpu_custom_call.1} parent=5 // pred_region
        %s254 = ssub.s32 %s20, 1
        // Predicated region
        $region13: #{tpu_custom_call.1} parent=11 // pred_check
          %p255 = pneg %p67
        $region14: #{tpu_custom_call.1} parent=11 // pred_check_branch
          %257 = sbr.rel (%p255) target = $region16
        $region15: #{tpu_custom_call.1} parent=11 // pred_region
          _
        $region16: #{tpu_custom_call.1} parent=11 // pred_fallthru
          _
        // Predicated region
        $region17: #{tpu_custom_call.1} parent=11 // pred_check
          %p258 = pneg %p88
        $region18: #{tpu_custom_call.1} parent=11 // pred_check_branch
          %260 = sbr.rel (%p258) target = $region20
        $region19: #{tpu_custom_call.1} parent=11 // pred_region
          _
        $region20: #{tpu_custom_call.1} parent=11 // pred_fallthru
          _
        // Predicated region
        $region21: #{tpu_custom_call.1} parent=11 // pred_check
          %p261 = pneg %p109
        $region22: #{tpu_custom_call.1} parent=11 // pred_check_branch
          %263 = sbr.rel (%p261) target = $region24
        $region23: #{tpu_custom_call.1} parent=11 // pred_region
          _
        $region24: #{tpu_custom_call.1} parent=11 // pred_fallthru
          _
        // Predicated region
        $region25: #{tpu_custom_call.1} parent=11 // pred_check
          %p264 = pneg %p130
        $region26: #{tpu_custom_call.1} parent=11 // pred_check_branch
          %266 = sbr.rel (%p264) target = $region28
        $region27: #{tpu_custom_call.1} parent=11 // pred_region
          _
        $region28: #{tpu_custom_call.1} parent=11 // pred_fallthru
          _
        // Predicated region
        $region29: #{tpu_custom_call.1} parent=11 // pred_check
          %p267 = pneg %p151
        $region30: #{tpu_custom_call.1} parent=11 // pred_check_branch
          %269 = sbr.rel (%p267) target = $region32
        $region31: #{tpu_custom_call.1} parent=11 // pred_region
          _
        $region32: #{tpu_custom_call.1} parent=11 // pred_fallthru
          _
        // Predicated region
        $region33: #{tpu_custom_call.1} parent=11 // pred_check
          %p270 = pneg %p172
        $region34: #{tpu_custom_call.1} parent=11 // pred_check_branch
          %272 = sbr.rel (%p270) target = $region36
        $region35: #{tpu_custom_call.1} parent=11 // pred_region
          _
        $region36: #{tpu_custom_call.1} parent=11 // pred_fallthru
          _
        // Predicated region
        $region37: #{tpu_custom_call.1} parent=11 // pred_check
          %p273 = pneg %p193
        $region38: #{tpu_custom_call.1} parent=11 // pred_check_branch
          %275 = sbr.rel (%p273) target = $region40
        $region39: #{tpu_custom_call.1} parent=11 // pred_region
          _
        $region40: #{tpu_custom_call.1} parent=11 // pred_fallthru
          _
        // Predicated region
        $region41: #{tpu_custom_call.1} parent=11 // pred_check
          %p276 = pneg %p214
        $region42: #{tpu_custom_call.1} parent=11 // pred_check_branch
          %278 = sbr.rel (%p276) target = $region44
        $region43: #{tpu_custom_call.1} parent=11 // pred_region
          _
        $region44: #{tpu_custom_call.1} parent=11 // pred_fallthru
          _
      $region12: #{tpu_custom_call.1} parent=5 // pred_fallthru
        _
      %p279 = scmp.lt.s32.totalorder %s20, 3
      // Predicated region
      $region45: #{tpu_custom_call.1} parent=5 // pred_check
        %p280 = pneg %p279
      $region46: #{tpu_custom_call.1} parent=5 // pred_check_branch
        %282 = sbr.rel (%p280) target = $region48
      $region47: #{tpu_custom_call.1} parent=5 // pred_region
        // Predicated region
        $region49: #{tpu_custom_call.1} parent=47 // pred_check
          %p283 = pneg %p40
        $region50: #{tpu_custom_call.1} parent=47 // pred_check_branch
          %285 = sbr.rel (%p283) target = $region52
        $region51: #{tpu_custom_call.1} parent=47 // pred_region
          %s286 = smul.u32 16, %s20
          %p287 = scmp.lt.s32.totalorder %s286, 47
          %s288 = scalar_select %p287, %s286, 47
          %s289 = smul.addr %s288, 8
          %s290 = scalar_lea.vmem %s0, %s289
          %s291 = smul.u32 16, %s20
        $region52: #{tpu_custom_call.1} parent=47 // pred_fallthru
          _
      $region48: #{tpu_custom_call.1} parent=5 // pred_fallthru
        _
      %p292 = scmp.le.s32.totalorder 1, %s20
      %p293 = scmp.lt.s32.totalorder %s20, 4
      %p294 = pnand %p292, %p293
      %p295 = pneg %p294
      // Predicated region
      $region53: #{tpu_custom_call.1} parent=5 // pred_check
        _
      $region54: #{tpu_custom_call.1} parent=5 // pred_check_branch
        %297 = sbr.rel (%p294) target = $region56
      $region55: #{tpu_custom_call.1} parent=5 // pred_region
        %s298 = ssub.s32 %s20, 1
        %s299 = smul.u32 16, %s25
        %p300 = scmp.lt.s32.totalorder %s299, 47
        %s301 = scalar_select %p300, %s299, 47
        %s302 = smul.addr %s301, 8
        %s303 = scalar_lea.vmem %s0, %s302
        %p304 = pneg %p46
        %p305 = pneg %p43
        %p306 = pneg %p67
        %p307 = pneg %p64
        %p308 = pneg %p88
        %p309 = pneg %p85
        %p310 = pneg %p109
        %p311 = pneg %p106
        %p312 = pneg %p130
        %p313 = pneg %p127
        %p314 = pneg %p151
        %p315 = pneg %p148
        %p316 = pneg %p172
        %p317 = pneg %p169
        %p318 = pneg %p193
        %p319 = pneg %p190
        %p320 = pneg %p214
        %p321 = pneg %p211
        %p322 = pneg %p240
        %p323 = pneg %p237
        %s324 = sand.u32 %s227, 1
        %s325 = scalar_lea.sflag [#allocation4], %s324
        %s326 = sand.u32 %s227, 1
        %s327 = smul.addr %s326, 16
        %s328 = scalar_lea.vmem [#allocation3], %s327
        %s329 = smul.u32 16, %s25
        %p330 = scmp.lt.s32.totalorder %s329, 47
        %s331 = scalar_select %p330, %s329, 47
        %s332 = smul.addr %s331, 8
        %s333 = scalar_lea.vmem %s0, %s332
        %s334 = smul.u32 16, %s25
        %s335 = smul.u32 16, %s25
        %v336 = vld [vmem:[%s1] sm:$0xff]
        %v337 = vld [vmem:[%s1 + $0x8] sm:$0xff]
        %v338 = vld [vmem:[%s1 + $0x10] sm:$0xff]
        %v339 = vld [vmem:[%s1 + $0x18] sm:$0xff]
        %v340 = vld [vmem:[%s1 + $0x20] sm:$0xff]
        %v341 = vld [vmem:[%s1 + $0x28] sm:$0xff]
        %v342 = vld [vmem:[%s1 + $0x30] sm:$0xff]
        %v343 = vld [vmem:[%s1 + $0x38] sm:$0xff]
        %v344 = vld [vmem:[%s333] sm:$0xff]
        %v345 = vld [vmem:[%s333 + $0x8] sm:$0xff]
        %v346 = vld [vmem:[%s333 + $0x10] sm:$0xff]
        %v347 = vld [vmem:[%s333 + $0x18] sm:$0xff]
        %v348 = vld [vmem:[%s333 + $0x20] sm:$0xff]
        %v349 = vld [vmem:[%s333 + $0x28] sm:$0xff]
        %v350 = vld [vmem:[%s333 + $0x30] sm:$0xff]
        %v351 = vld [vmem:[%s333 + $0x38] sm:$0xff]
        %v352 = vld [vmem:[%s333 + $0x40] sm:$0xff]
        %v353 = vld [vmem:[%s333 + $0x48] sm:$0xff]
        %v354 = vld [vmem:[%s333 + $0x50] sm:$0xff]
        %v355 = vld [vmem:[%s333 + $0x58] sm:$0xff]
        %v356 = vld [vmem:[%s333 + $0x60] sm:$0xff]
        %v357 = vld [vmem:[%s333 + $0x68] sm:$0xff]
        %v358 = vld [vmem:[%s333 + $0x70] sm:$0xff]
        %v359 = vld [vmem:[%s333 + $0x78] sm:$0xff]
        %v360 = vld [vmem:[%s2] sm:$0xff]
        %v361 = vld [vmem:[%s2 + $0x8] sm:$0xff]
        %v362 = vld [vmem:[%s2 + $0x10] sm:$0xff]
        %v363 = vld [vmem:[%s2 + $0x18] sm:$0xff]
        %v364 = vld [vmem:[%s2 + $0x20] sm:$0xff]
        %v365 = vld [vmem:[%s2 + $0x28] sm:$0xff]
        %v366 = vld [vmem:[%s2 + $0x30] sm:$0xff]
        %v367 = vld [vmem:[%s2 + $0x38] sm:$0xff]
        %369 = vset.pattern.permute.xlu0 0
        %370 = vperm.xlu0 %369, %v360
        %v371 = vpop.permute.xlu0 %370
        %374 = vset.pattern.permute.xlu0 0
        %375 = vperm.xlu0 %374, %v361
        %v376 = vpop.permute.xlu0 %375
        %379 = vset.pattern.permute.xlu0 0
        %380 = vperm.xlu0 %379, %v362
        %v381 = vpop.permute.xlu0 %380
        %384 = vset.pattern.permute.xlu0 0
        %385 = vperm.xlu0 %384, %v363
        %v386 = vpop.permute.xlu0 %385
        %389 = vset.pattern.permute.xlu0 0
        %390 = vperm.xlu0 %389, %v364
        %v391 = vpop.permute.xlu0 %390
        %394 = vset.pattern.permute.xlu0 0
        %395 = vperm.xlu0 %394, %v365
        %v396 = vpop.permute.xlu0 %395
        %399 = vset.pattern.permute.xlu0 0
        %400 = vperm.xlu0 %399, %v366
        %v401 = vpop.permute.xlu0 %400
        %404 = vset.pattern.permute.xlu0 0
        %405 = vperm.xlu0 %404, %v367
        %v406 = vpop.permute.xlu0 %405
        %vm408 = vcmask 64512
        %v410 = vsel %vm408, %v336, 0
        %v413 = vsel %vm408, %v337, 0
        %v416 = vsel %vm408, %v338, 0
        %v419 = vsel %vm408, %v339, 0
        %v422 = vsel %vm408, %v340, 0
        %v425 = vsel %vm408, %v341, 0
        %v428 = vsel %vm408, %v342, 0
        %v431 = vsel %vm408, %v343, 0
        %433 = vmatprep.subr.mxu0 0.0
        %434 = vmatpush1.msra.mxu0 0.0
        %435 = vmatprep.subr.mxu0 0.0
        %436 = vmatpush1.msra.mxu0 0.0
        %437 = vmatprep.subr.mxu0 0.0
        %438 = vmatpush1.msra.mxu0 0.0
        %439 = vmatprep.subr.mxu0 0.0
        %440 = vmatpush1.msra.mxu0 0.0
        %441 = vmatprep.subr.mxu0 0.0
        %442 = vmatpush1.msra.mxu0 0.0
        %443 = vmatprep.subr.mxu0 0.0
        %444 = vmatpush1.msra.mxu0 0.0
        %445 = vmatprep.subr.mxu0 0.0
        %446 = vmatpush1.msra.mxu0 0.0
        %447 = vmatprep.subr.mxu0 0.0
        %448 = vmatpush1.msra.mxu0 0.0
        %449 = vmatprep.subr.mxu0 0.0
        %450 = vmatpush1.msra.mxu0 0.0
        %451 = vmatprep.subr.mxu0 0.0
        %452 = vmatpush1.msra.mxu0 0.0
        %453 = vmatprep.subr.mxu0 0.0
        %454 = vmatpush1.msra.mxu0 0.0
        %455 = vmatprep.subr.mxu0 0.0
        %456 = vmatpush1.msra.mxu0 0.0
        %457 = vmatprep.subr.mxu0 0.0
        %458 = vmatpush1.msra.mxu0 0.0
        %459 = vmatprep.subr.mxu0 0.0
        %460 = vmatpush1.msra.mxu0 0.0
        %461 = vmatprep.subr.mxu0 0.0
        %462 = vmatpush1.msra.mxu0 0.0
        %463 = vmatprep.subr.mxu0 %v345
        %464 = vmatpush1.msra.mxu0 %v344
        %465 = vmatprep.subr.mxu0 0.0
        %466 = vmatpush2.msra.mxu0 0.0
        %467 = vmatprep.subr.mxu0 0.0
        %468 = vmatpush2.msra.mxu0 0.0
        %469 = vmatprep.subr.mxu0 0.0
        %470 = vmatpush2.msra.mxu0 0.0
        %471 = vmatprep.subr.mxu0 0.0
        %472 = vmatpush2.msra.mxu0 0.0
        %473 = vmatprep.subr.mxu0 0.0
        %474 = vmatpush2.msra.mxu0 0.0
        %475 = vmatprep.subr.mxu0 0.0
        %476 = vmatpush2.msra.mxu0 0.0
        %477 = vmatprep.subr.mxu0 0.0
        %478 = vmatpush2.msra.mxu0 0.0
        %479 = vmatprep.subr.mxu0 0.0
        %480 = vmatpush2.msra.mxu0 0.0
        %481 = vmatprep.subr.mxu0 0.0
        %482 = vmatpush2.msra.mxu0 0.0
        %483 = vmatprep.subr.mxu0 0.0
        %484 = vmatpush2.msra.mxu0 0.0
        %485 = vmatprep.subr.mxu0 0.0
        %486 = vmatpush2.msra.mxu0 0.0
        %487 = vmatprep.subr.mxu0 0.0
        %488 = vmatpush2.msra.mxu0 0.0
        %489 = vmatprep.subr.mxu0 0.0
        %490 = vmatpush2.msra.mxu0 0.0
        %491 = vmatprep.subr.mxu0 0.0
        %492 = vmatpush2.msra.mxu0 0.0
        %493 = vmatprep.subr.mxu0 0.0
        %494 = vmatpush2.msra.mxu0 0.0
        %495 = vmatprep.subr.mxu0 0.0
        %496 = vmatpush2.msra.mxu0 0.0
        %497 = vmatprep.mubr.f32.mxu0 0.0
        %498 = vmatmul.mubr.f32.gmra.mxu0 %v410
        %v499 = vpop.f32.mrf.mxu0
        %v500 = vadd.f32 %v371, %v499
        %v501 = vpop.f32.mrf.mxu0
        %v502 = vadd.f32 %v371, %v501
        %503 = vmatprep.mubr.f32.mxu0 0.0
        %504 = vmatmul.mubr.f32.gmra.mxu0 %v413
        %v505 = vpop.f32.mrf.mxu0
        %v506 = vadd.f32 %v376, %v505
        %v507 = vpop.f32.mrf.mxu0
        %v508 = vadd.f32 %v376, %v507
        %509 = vmatprep.mubr.f32.mxu0 0.0
        %510 = vmatmul.mubr.f32.gmra.mxu0 %v416
        %v511 = vpop.f32.mrf.mxu0
        %v512 = vadd.f32 %v381, %v511
        %v513 = vpop.f32.mrf.mxu0
        %v514 = vadd.f32 %v381, %v513
        %515 = vmatprep.mubr.f32.mxu0 0.0
        %516 = vmatmul.mubr.f32.gmra.mxu0 %v419
        %v517 = vpop.f32.mrf.mxu0
        %v518 = vadd.f32 %v386, %v517
        %v519 = vpop.f32.mrf.mxu0
        %v520 = vadd.f32 %v386, %v519
        %521 = vmatprep.mubr.f32.mxu0 0.0
        %522 = vmatmul.mubr.f32.gmra.mxu0 %v422
        %v523 = vpop.f32.mrf.mxu0
        %v524 = vadd.f32 %v391, %v523
        %v525 = vpop.f32.mrf.mxu0
        %v526 = vadd.f32 %v391, %v525
        %527 = vmatprep.mubr.f32.mxu0 0.0
        %528 = vmatmul.mubr.f32.gmra.mxu0 %v425
        %v529 = vpop.f32.mrf.mxu0
        %v530 = vadd.f32 %v396, %v529
        %v531 = vpop.f32.mrf.mxu0
        %v532 = vadd.f32 %v396, %v531
        %533 = vmatprep.mubr.f32.mxu0 0.0
        %534 = vmatmul.mubr.f32.gmra.mxu0 %v428
        %v535 = vpop.f32.mrf.mxu0
        %v536 = vadd.f32 %v401, %v535
        %v537 = vpop.f32.mrf.mxu0
        %v538 = vadd.f32 %v401, %v537
        %539 = vmatprep.mubr.f32.mxu0 0.0
        %540 = vmatmul.mubr.f32.gmra.mxu0 %v431
        %v541 = vpop.f32.mrf.mxu0
        %v542 = vadd.f32 %v406, %v541
        %v543 = vpop.f32.mrf.mxu0
        %v544 = vadd.f32 %v406, %v543
        %545 = vdwg.mxu0
        %546 = vmatprep.subr.mxu0 0.0
        %547 = vmatpush1.msra.mxu0 0.0
        %548 = vmatprep.subr.mxu0 0.0
        %549 = vmatpush1.msra.mxu0 0.0
        %550 = vmatprep.subr.mxu0 0.0
        %551 = vmatpush1.msra.mxu0 0.0
        %552 = vmatprep.subr.mxu0 0.0
        %553 = vmatpush1.msra.mxu0 0.0
        %554 = vmatprep.subr.mxu0 0.0
        %555 = vmatpush1.msra.mxu0 0.0
        %556 = vmatprep.subr.mxu0 0.0
        %557 = vmatpush1.msra.mxu0 0.0
        %558 = vmatprep.subr.mxu0 0.0
        %559 = vmatpush1.msra.mxu0 0.0
        %560 = vmatprep.subr.mxu0 0.0
        %561 = vmatpush1.msra.mxu0 0.0
        %562 = vmatprep.subr.mxu0 0.0
        %563 = vmatpush1.msra.mxu0 0.0
        %564 = vmatprep.subr.mxu0 0.0
        %565 = vmatpush1.msra.mxu0 0.0
        %566 = vmatprep.subr.mxu0 0.0
        %567 = vmatpush1.msra.mxu0 0.0
        %568 = vmatprep.subr.mxu0 0.0
        %569 = vmatpush1.msra.mxu0 0.0
        %570 = vmatprep.subr.mxu0 0.0
        %571 = vmatpush1.msra.mxu0 0.0
        %572 = vmatprep.subr.mxu0 0.0
        %573 = vmatpush1.msra.mxu0 0.0
        %574 = vmatprep.subr.mxu0 0.0
        %575 = vmatpush1.msra.mxu0 0.0
        %576 = vmatprep.subr.mxu0 %v347
        %577 = vmatpush1.msra.mxu0 %v346
        %578 = vmatprep.subr.mxu0 0.0
        %579 = vmatpush2.msra.mxu0 0.0
        %580 = vmatprep.subr.mxu0 0.0
        %581 = vmatpush2.msra.mxu0 0.0
        %582 = vmatprep.subr.mxu0 0.0
        %583 = vmatpush2.msra.mxu0 0.0
        %584 = vmatprep.subr.mxu0 0.0
        %585 = vmatpush2.msra.mxu0 0.0
        %586 = vmatprep.subr.mxu0 0.0
        %587 = vmatpush2.msra.mxu0 0.0
        %588 = vmatprep.subr.mxu0 0.0
        %589 = vmatpush2.msra.mxu0 0.0
        %590 = vmatprep.subr.mxu0 0.0
        %591 = vmatpush2.msra.mxu0 0.0
        %592 = vmatprep.subr.mxu0 0.0
        %593 = vmatpush2.msra.mxu0 0.0
        %594 = vmatprep.subr.mxu0 0.0
        %595 = vmatpush2.msra.mxu0 0.0
        %596 = vmatprep.subr.mxu0 0.0
        %597 = vmatpush2.msra.mxu0 0.0
        %598 = vmatprep.subr.mxu0 0.0
        %599 = vmatpush2.msra.mxu0 0.0
        %600 = vmatprep.subr.mxu0 0.0
        %601 = vmatpush2.msra.mxu0 0.0
        %602 = vmatprep.subr.mxu0 0.0
        %603 = vmatpush2.msra.mxu0 0.0
        %604 = vmatprep.subr.mxu0 0.0
        %605 = vmatpush2.msra.mxu0 0.0
        %606 = vmatprep.subr.mxu0 0.0
        %607 = vmatpush2.msra.mxu0 0.0
        %608 = vmatprep.subr.mxu0 0.0
        %609 = vmatpush2.msra.mxu0 0.0
        %610 = vmatprep.mubr.f32.mxu0 0.0
        %611 = vmatmul.mubr.f32.gmra.mxu0 %v410
        %v612 = vpop.f32.mrf.mxu0
        %v613 = vadd.f32 %v371, %v612
        %v614 = vpop.f32.mrf.mxu0
        %v615 = vadd.f32 %v371, %v614
        %616 = vmatprep.mubr.f32.mxu0 0.0
        %617 = vmatmul.mubr.f32.gmra.mxu0 %v413
        %v618 = vpop.f32.mrf.mxu0
        %v619 = vadd.f32 %v376, %v618
        %v620 = vpop.f32.mrf.mxu0
        %v621 = vadd.f32 %v376, %v620
        %622 = vmatprep.mubr.f32.mxu0 0.0
        %623 = vmatmul.mubr.f32.gmra.mxu0 %v416
        %v624 = vpop.f32.mrf.mxu0
        %v625 = vadd.f32 %v381, %v624
        %v626 = vpop.f32.mrf.mxu0
        %v627 = vadd.f32 %v381, %v626
        %628 = vmatprep.mubr.f32.mxu0 0.0
        %629 = vmatmul.mubr.f32.gmra.mxu0 %v419
        %v630 = vpop.f32.mrf.mxu0
        %v631 = vadd.f32 %v386, %v630
        %v632 = vpop.f32.mrf.mxu0
        %v633 = vadd.f32 %v386, %v632
        %634 = vmatprep.mubr.f32.mxu0 0.0
        %635 = vmatmul.mubr.f32.gmra.mxu0 %v422
        %v636 = vpop.f32.mrf.mxu0
        %v637 = vadd.f32 %v391, %v636
        %v638 = vpop.f32.mrf.mxu0
        %v639 = vadd.f32 %v391, %v638
        %640 = vmatprep.mubr.f32.mxu0 0.0
        %641 = vmatmul.mubr.f32.gmra.mxu0 %v425
        %v642 = vpop.f32.mrf.mxu0
        %v643 = vadd.f32 %v396, %v642
        %v644 = vpop.f32.mrf.mxu0
        %v645 = vadd.f32 %v396, %v644
        %646 = vmatprep.mubr.f32.mxu0 0.0
        %647 = vmatmul.mubr.f32.gmra.mxu0 %v428
        %v648 = vpop.f32.mrf.mxu0
        %v649 = vadd.f32 %v401, %v648
        %v650 = vpop.f32.mrf.mxu0
        %v651 = vadd.f32 %v401, %v650
        %652 = vmatprep.mubr.f32.mxu0 0.0
        %653 = vmatmul.mubr.f32.gmra.mxu0 %v431
        %v654 = vpop.f32.mrf.mxu0
        %v655 = vadd.f32 %v406, %v654
        %v656 = vpop.f32.mrf.mxu0
        %v657 = vadd.f32 %v406, %v656
        %658 = vdwg.mxu0
        %659 = vmatprep.subr.mxu0 0.0
        %660 = vmatpush1.msra.mxu0 0.0
        %661 = vmatprep.subr.mxu0 0.0
        %662 = vmatpush1.msra.mxu0 0.0
        %663 = vmatprep.subr.mxu0 0.0
        %664 = vmatpush1.msra.mxu0 0.0
        %665 = vmatprep.subr.mxu0 0.0
        %666 = vmatpush1.msra.mxu0 0.0
        %667 = vmatprep.subr.mxu0 0.0
        %668 = vmatpush1.msra.mxu0 0.0
        %669 = vmatprep.subr.mxu0 0.0
        %670 = vmatpush1.msra.mxu0 0.0
        %671 = vmatprep.subr.mxu0 0.0
        %672 = vmatpush1.msra.mxu0 0.0
        %673 = vmatprep.subr.mxu0 0.0
        %674 = vmatpush1.msra.mxu0 0.0
        %675 = vmatprep.subr.mxu0 0.0
        %676 = vmatpush1.msra.mxu0 0.0
        %677 = vmatprep.subr.mxu0 0.0
        %678 = vmatpush1.msra.mxu0 0.0
        %679 = vmatprep.subr.mxu0 0.0
        %680 = vmatpush1.msra.mxu0 0.0
        %681 = vmatprep.subr.mxu0 0.0
        %682 = vmatpush1.msra.mxu0 0.0
        %683 = vmatprep.subr.mxu0 0.0
        %684 = vmatpush1.msra.mxu0 0.0
        %685 = vmatprep.subr.mxu0 0.0
        %686 = vmatpush1.msra.mxu0 0.0
        %687 = vmatprep.subr.mxu0 0.0
        %688 = vmatpush1.msra.mxu0 0.0
        %689 = vmatprep.subr.mxu0 %v349
        %690 = vmatpush1.msra.mxu0 %v348
        %691 = vmatprep.subr.mxu0 0.0
        %692 = vmatpush2.msra.mxu0 0.0
        %693 = vmatprep.subr.mxu0 0.0
        %694 = vmatpush2.msra.mxu0 0.0
        %695 = vmatprep.subr.mxu0 0.0
        %696 = vmatpush2.msra.mxu0 0.0
        %697 = vmatprep.subr.mxu0 0.0
        %698 = vmatpush2.msra.mxu0 0.0
        %699 = vmatprep.subr.mxu0 0.0
        %700 = vmatpush2.msra.mxu0 0.0
        %701 = vmatprep.subr.mxu0 0.0
        %702 = vmatpush2.msra.mxu0 0.0
        %703 = vmatprep.subr.mxu0 0.0
        %704 = vmatpush2.msra.mxu0 0.0
        %705 = vmatprep.subr.mxu0 0.0
        %706 = vmatpush2.msra.mxu0 0.0
        %707 = vmatprep.subr.mxu0 0.0
        %708 = vmatpush2.msra.mxu0 0.0
        %709 = vmatprep.subr.mxu0 0.0
        %710 = vmatpush2.msra.mxu0 0.0
        %711 = vmatprep.subr.mxu0 0.0
        %712 = vmatpush2.msra.mxu0 0.0
        %713 = vmatprep.subr.mxu0 0.0
        %714 = vmatpush2.msra.mxu0 0.0
        %715 = vmatprep.subr.mxu0 0.0
        %716 = vmatpush2.msra.mxu0 0.0
        %717 = vmatprep.subr.mxu0 0.0
        %718 = vmatpush2.msra.mxu0 0.0
        %719 = vmatprep.subr.mxu0 0.0
        %720 = vmatpush2.msra.mxu0 0.0
        %721 = vmatprep.subr.mxu0 0.0
        %722 = vmatpush2.msra.mxu0 0.0
        %723 = vmatprep.mubr.f32.mxu0 0.0
        %724 = vmatmul.mubr.f32.gmra.mxu0 %v410
        %v725 = vpop.f32.mrf.mxu0
        %v726 = vadd.f32 %v371, %v725
        %v727 = vpop.f32.mrf.mxu0
        %v728 = vadd.f32 %v371, %v727
        %729 = vmatprep.mubr.f32.mxu0 0.0
        %730 = vmatmul.mubr.f32.gmra.mxu0 %v413
        %v731 = vpop.f32.mrf.mxu0
        %v732 = vadd.f32 %v376, %v731
        %v733 = vpop.f32.mrf.mxu0
        %v734 = vadd.f32 %v376, %v733
        %735 = vmatprep.mubr.f32.mxu0 0.0
        %736 = vmatmul.mubr.f32.gmra.mxu0 %v416
        %v737 = vpop.f32.mrf.mxu0
        %v738 = vadd.f32 %v381, %v737
        %v739 = vpop.f32.mrf.mxu0
        %v740 = vadd.f32 %v381, %v739
        %741 = vmatprep.mubr.f32.mxu0 0.0
        %742 = vmatmul.mubr.f32.gmra.mxu0 %v419
        %v743 = vpop.f32.mrf.mxu0
        %v744 = vadd.f32 %v386, %v743
        %v745 = vpop.f32.mrf.mxu0
        %v746 = vadd.f32 %v386, %v745
        %747 = vmatprep.mubr.f32.mxu0 0.0
        %748 = vmatmul.mubr.f32.gmra.mxu0 %v422
        %v749 = vpop.f32.mrf.mxu0
        %v750 = vadd.f32 %v391, %v749
        %v751 = vpop.f32.mrf.mxu0
        %v752 = vadd.f32 %v391, %v751
        %753 = vmatprep.mubr.f32.mxu0 0.0
        %754 = vmatmul.mubr.f32.gmra.mxu0 %v425
        %v755 = vpop.f32.mrf.mxu0
        %v756 = vadd.f32 %v396, %v755
        %v757 = vpop.f32.mrf.mxu0
        %v758 = vadd.f32 %v396, %v757
        %759 = vmatprep.mubr.f32.mxu0 0.0
        %760 = vmatmul.mubr.f32.gmra.mxu0 %v428
        %v761 = vpop.f32.mrf.mxu0
        %v762 = vadd.f32 %v401, %v761
        %v763 = vpop.f32.mrf.mxu0
        %v764 = vadd.f32 %v401, %v763
        %765 = vmatprep.mubr.f32.mxu0 0.0
        %766 = vmatmul.mubr.f32.gmra.mxu0 %v431
        %v767 = vpop.f32.mrf.mxu0
        %v768 = vadd.f32 %v406, %v767
        %v769 = vpop.f32.mrf.mxu0
        %v770 = vadd.f32 %v406, %v769
        %771 = vdwg.mxu0
        %772 = vmatprep.subr.mxu0 0.0
        %773 = vmatpush1.msra.mxu0 0.0
        %774 = vmatprep.subr.mxu0 0.0
        %775 = vmatpush1.msra.mxu0 0.0
        %776 = vmatprep.subr.mxu0 0.0
        %777 = vmatpush1.msra.mxu0 0.0
        %778 = vmatprep.subr.mxu0 0.0
        %779 = vmatpush1.msra.mxu0 0.0
        %780 = vmatprep.subr.mxu0 0.0
        %781 = vmatpush1.msra.mxu0 0.0
        %782 = vmatprep.subr.mxu0 0.0
        %783 = vmatpush1.msra.mxu0 0.0
        %784 = vmatprep.subr.mxu0 0.0
        %785 = vmatpush1.msra.mxu0 0.0
        %786 = vmatprep.subr.mxu0 0.0
        %787 = vmatpush1.msra.mxu0 0.0
        %788 = vmatprep.subr.mxu0 0.0
        %789 = vmatpush1.msra.mxu0 0.0
        %790 = vmatprep.subr.mxu0 0.0
        %791 = vmatpush1.msra.mxu0 0.0
        %792 = vmatprep.subr.mxu0 0.0
        %793 = vmatpush1.msra.mxu0 0.0
        %794 = vmatprep.subr.mxu0 0.0
        %795 = vmatpush1.msra.mxu0 0.0
        %796 = vmatprep.subr.mxu0 0.0
        %797 = vmatpush1.msra.mxu0 0.0
        %798 = vmatprep.subr.mxu0 0.0
        %799 = vmatpush1.msra.mxu0 0.0
        %800 = vmatprep.subr.mxu0 0.0
        %801 = vmatpush1.msra.mxu0 0.0
        %802 = vmatprep.subr.mxu0 %v351
        %803 = vmatpush1.msra.mxu0 %v350
        %804 = vmatprep.subr.mxu0 0.0
        %805 = vmatpush2.msra.mxu0 0.0
        %806 = vmatprep.subr.mxu0 0.0
        %807 = vmatpush2.msra.mxu0 0.0
        %808 = vmatprep.subr.mxu0 0.0
        %809 = vmatpush2.msra.mxu0 0.0
        %810 = vmatprep.subr.mxu0 0.0
        %811 = vmatpush2.msra.mxu0 0.0
        %812 = vmatprep.subr.mxu0 0.0
        %813 = vmatpush2.msra.mxu0 0.0
        %814 = vmatprep.subr.mxu0 0.0
        %815 = vmatpush2.msra.mxu0 0.0
        %816 = vmatprep.subr.mxu0 0.0
        %817 = vmatpush2.msra.mxu0 0.0
        %818 = vmatprep.subr.mxu0 0.0
        %819 = vmatpush2.msra.mxu0 0.0
        %820 = vmatprep.subr.mxu0 0.0
        %821 = vmatpush2.msra.mxu0 0.0
        %822 = vmatprep.subr.mxu0 0.0
        %823 = vmatpush2.msra.mxu0 0.0
        %824 = vmatprep.subr.mxu0 0.0
        %825 = vmatpush2.msra.mxu0 0.0
        %826 = vmatprep.subr.mxu0 0.0
        %827 = vmatpush2.msra.mxu0 0.0
        %828 = vmatprep.subr.mxu0 0.0
        %829 = vmatpush2.msra.mxu0 0.0
        %830 = vmatprep.subr.mxu0 0.0
        %831 = vmatpush2.msra.mxu0 0.0
        %832 = vmatprep.subr.mxu0 0.0
        %833 = vmatpush2.msra.mxu0 0.0
        %834 = vmatprep.subr.mxu0 0.0
        %835 = vmatpush2.msra.mxu0 0.0
        %836 = vmatprep.mubr.f32.mxu0 0.0
        %837 = vmatmul.mubr.f32.gmra.mxu0 %v410
        %v838 = vpop.f32.mrf.mxu0
        %v839 = vadd.f32 %v371, %v838
        %v840 = vpop.f32.mrf.mxu0
        %v841 = vadd.f32 %v371, %v840
        %842 = vmatprep.mubr.f32.mxu0 0.0
        %843 = vmatmul.mubr.f32.gmra.mxu0 %v413
        %v844 = vpop.f32.mrf.mxu0
        %v845 = vadd.f32 %v376, %v844
        %v846 = vpop.f32.mrf.mxu0
        %v847 = vadd.f32 %v376, %v846
        %848 = vmatprep.mubr.f32.mxu0 0.0
        %849 = vmatmul.mubr.f32.gmra.mxu0 %v416
        %v850 = vpop.f32.mrf.mxu0
        %v851 = vadd.f32 %v381, %v850
        %v852 = vpop.f32.mrf.mxu0
        %v853 = vadd.f32 %v381, %v852
        %854 = vmatprep.mubr.f32.mxu0 0.0
        %855 = vmatmul.mubr.f32.gmra.mxu0 %v419
        %v856 = vpop.f32.mrf.mxu0
        %v857 = vadd.f32 %v386, %v856
        %v858 = vpop.f32.mrf.mxu0
        %v859 = vadd.f32 %v386, %v858
        %860 = vmatprep.mubr.f32.mxu0 0.0
        %861 = vmatmul.mubr.f32.gmra.mxu0 %v422
        %v862 = vpop.f32.mrf.mxu0
        %v863 = vadd.f32 %v391, %v862
        %v864 = vpop.f32.mrf.mxu0
        %v865 = vadd.f32 %v391, %v864
        %866 = vmatprep.mubr.f32.mxu0 0.0
        %867 = vmatmul.mubr.f32.gmra.mxu0 %v425
        %v868 = vpop.f32.mrf.mxu0
        %v869 = vadd.f32 %v396, %v868
        %v870 = vpop.f32.mrf.mxu0
        %v871 = vadd.f32 %v396, %v870
        %872 = vmatprep.mubr.f32.mxu0 0.0
        %873 = vmatmul.mubr.f32.gmra.mxu0 %v428
        %v874 = vpop.f32.mrf.mxu0
        %v875 = vadd.f32 %v401, %v874
        %v876 = vpop.f32.mrf.mxu0
        %v877 = vadd.f32 %v401, %v876
        %878 = vmatprep.mubr.f32.mxu0 0.0
        %879 = vmatmul.mubr.f32.gmra.mxu0 %v431
        %v880 = vpop.f32.mrf.mxu0
        %v881 = vadd.f32 %v406, %v880
        %v882 = vpop.f32.mrf.mxu0
        %v883 = vadd.f32 %v406, %v882
        %884 = vdwg.mxu0
        %885 = vmatprep.subr.mxu0 0.0
        %886 = vmatpush1.msra.mxu0 0.0
        %887 = vmatprep.subr.mxu0 0.0
        %888 = vmatpush1.msra.mxu0 0.0
        %889 = vmatprep.subr.mxu0 0.0
        %890 = vmatpush1.msra.mxu0 0.0
        %891 = vmatprep.subr.mxu0 0.0
        %892 = vmatpush1.msra.mxu0 0.0
        %893 = vmatprep.subr.mxu0 0.0
        %894 = vmatpush1.msra.mxu0 0.0
        %895 = vmatprep.subr.mxu0 0.0
        %896 = vmatpush1.msra.mxu0 0.0
        %897 = vmatprep.subr.mxu0 0.0
        %898 = vmatpush1.msra.mxu0 0.0
        %899 = vmatprep.subr.mxu0 0.0
        %900 = vmatpush1.msra.mxu0 0.0
        %901 = vmatprep.subr.mxu0 0.0
        %902 = vmatpush1.msra.mxu0 0.0
        %903 = vmatprep.subr.mxu0 0.0
        %904 = vmatpush1.msra.mxu0 0.0
        %905 = vmatprep.subr.mxu0 0.0
        %906 = vmatpush1.msra.mxu0 0.0
        %907 = vmatprep.subr.mxu0 0.0
        %908 = vmatpush1.msra.mxu0 0.0
        %909 = vmatprep.subr.mxu0 0.0
        %910 = vmatpush1.msra.mxu0 0.0
        %911 = vmatprep.subr.mxu0 0.0
        %912 = vmatpush1.msra.mxu0 0.0
        %913 = vmatprep.subr.mxu0 0.0
        %914 = vmatpush1.msra.mxu0 0.0
        %915 = vmatprep.subr.mxu0 %v353
        %916 = vmatpush1.msra.mxu0 %v352
        %917 = vmatprep.subr.mxu0 0.0
        %918 = vmatpush2.msra.mxu0 0.0
        %919 = vmatprep.subr.mxu0 0.0
        %920 = vmatpush2.msra.mxu0 0.0
        %921 = vmatprep.subr.mxu0 0.0
        %922 = vmatpush2.msra.mxu0 0.0
        %923 = vmatprep.subr.mxu0 0.0
        %924 = vmatpush2.msra.mxu0 0.0
        %925 = vmatprep.subr.mxu0 0.0
        %926 = vmatpush2.msra.mxu0 0.0
        %927 = vmatprep.subr.mxu0 0.0
        %928 = vmatpush2.msra.mxu0 0.0
        %929 = vmatprep.subr.mxu0 0.0
        %930 = vmatpush2.msra.mxu0 0.0
        %931 = vmatprep.subr.mxu0 0.0
        %932 = vmatpush2.msra.mxu0 0.0
        %933 = vmatprep.subr.mxu0 0.0
        %934 = vmatpush2.msra.mxu0 0.0
        %935 = vmatprep.subr.mxu0 0.0
        %936 = vmatpush2.msra.mxu0 0.0
        %937 = vmatprep.subr.mxu0 0.0
        %938 = vmatpush2.msra.mxu0 0.0
        %939 = vmatprep.subr.mxu0 0.0
        %940 = vmatpush2.msra.mxu0 0.0
        %941 = vmatprep.subr.mxu0 0.0
        %942 = vmatpush2.msra.mxu0 0.0
        %943 = vmatprep.subr.mxu0 0.0
        %944 = vmatpush2.msra.mxu0 0.0
        %945 = vmatprep.subr.mxu0 0.0
        %946 = vmatpush2.msra.mxu0 0.0
        %947 = vmatprep.subr.mxu0 0.0
        %948 = vmatpush2.msra.mxu0 0.0
        %949 = vmatprep.mubr.f32.mxu0 0.0
        %950 = vmatmul.mubr.f32.gmra.mxu0 %v410
        %v951 = vpop.f32.mrf.mxu0
        %v952 = vadd.f32 %v371, %v951
        %v953 = vpop.f32.mrf.mxu0
        %v954 = vadd.f32 %v371, %v953
        %955 = vmatprep.mubr.f32.mxu0 0.0
        %956 = vmatmul.mubr.f32.gmra.mxu0 %v413
        %v957 = vpop.f32.mrf.mxu0
        %v958 = vadd.f32 %v376, %v957
        %v959 = vpop.f32.mrf.mxu0
        %v960 = vadd.f32 %v376, %v959
        %961 = vmatprep.mubr.f32.mxu0 0.0
        %962 = vmatmul.mubr.f32.gmra.mxu0 %v416
        %v963 = vpop.f32.mrf.mxu0
        %v964 = vadd.f32 %v381, %v963
        %v965 = vpop.f32.mrf.mxu0
        %v966 = vadd.f32 %v381, %v965
        %967 = vmatprep.mubr.f32.mxu0 0.0
        %968 = vmatmul.mubr.f32.gmra.mxu0 %v419
        %v969 = vpop.f32.mrf.mxu0
        %v970 = vadd.f32 %v386, %v969
        %v971 = vpop.f32.mrf.mxu0
        %v972 = vadd.f32 %v386, %v971
        %973 = vmatprep.mubr.f32.mxu0 0.0
        %974 = vmatmul.mubr.f32.gmra.mxu0 %v422
        %v975 = vpop.f32.mrf.mxu0
        %v976 = vadd.f32 %v391, %v975
        %v977 = vpop.f32.mrf.mxu0
        %v978 = vadd.f32 %v391, %v977
        %979 = vmatprep.mubr.f32.mxu0 0.0
        %980 = vmatmul.mubr.f32.gmra.mxu0 %v425
        %v981 = vpop.f32.mrf.mxu0
        %v982 = vadd.f32 %v396, %v981
        %v983 = vpop.f32.mrf.mxu0
        %v984 = vadd.f32 %v396, %v983
        %985 = vmatprep.mubr.f32.mxu0 0.0
        %986 = vmatmul.mubr.f32.gmra.mxu0 %v428
        %v987 = vpop.f32.mrf.mxu0
        %v988 = vadd.f32 %v401, %v987
        %v989 = vpop.f32.mrf.mxu0
        %v990 = vadd.f32 %v401, %v989
        %991 = vmatprep.mubr.f32.mxu0 0.0
        %992 = vmatmul.mubr.f32.gmra.mxu0 %v431
        %v993 = vpop.f32.mrf.mxu0
        %v994 = vadd.f32 %v406, %v993
        %v995 = vpop.f32.mrf.mxu0
        %v996 = vadd.f32 %v406, %v995
        %997 = vdwg.mxu0
        %998 = vmatprep.subr.mxu0 0.0
        %999 = vmatpush1.msra.mxu0 0.0
        %1000 = vmatprep.subr.mxu0 0.0
        %1001 = vmatpush1.msra.mxu0 0.0
        %1002 = vmatprep.subr.mxu0 0.0
        %1003 = vmatpush1.msra.mxu0 0.0
        %1004 = vmatprep.subr.mxu0 0.0
        %1005 = vmatpush1.msra.mxu0 0.0
        %1006 = vmatprep.subr.mxu0 0.0
        %1007 = vmatpush1.msra.mxu0 0.0
        %1008 = vmatprep.subr.mxu0 0.0
        %1009 = vmatpush1.msra.mxu0 0.0
        %1010 = vmatprep.subr.mxu0 0.0
        %1011 = vmatpush1.msra.mxu0 0.0
        %1012 = vmatprep.subr.mxu0 0.0
        %1013 = vmatpush1.msra.mxu0 0.0
        %1014 = vmatprep.subr.mxu0 0.0
        %1015 = vmatpush1.msra.mxu0 0.0
        %1016 = vmatprep.subr.mxu0 0.0
        %1017 = vmatpush1.msra.mxu0 0.0
        %1018 = vmatprep.subr.mxu0 0.0
        %1019 = vmatpush1.msra.mxu0 0.0
        %1020 = vmatprep.subr.mxu0 0.0
        %1021 = vmatpush1.msra.mxu0 0.0
        %1022 = vmatprep.subr.mxu0 0.0
        %1023 = vmatpush1.msra.mxu0 0.0
        %1024 = vmatprep.subr.mxu0 0.0
        %1025 = vmatpush1.msra.mxu0 0.0
        %1026 = vmatprep.subr.mxu0 0.0
        %1027 = vmatpush1.msra.mxu0 0.0
        %1028 = vmatprep.subr.mxu0 %v355
        %1029 = vmatpush1.msra.mxu0 %v354
        %1030 = vmatprep.subr.mxu0 0.0
        %1031 = vmatpush2.msra.mxu0 0.0
        %1032 = vmatprep.subr.mxu0 0.0
        %1033 = vmatpush2.msra.mxu0 0.0
        %1034 = vmatprep.subr.mxu0 0.0
        %1035 = vmatpush2.msra.mxu0 0.0
        %1036 = vmatprep.subr.mxu0 0.0
        %1037 = vmatpush2.msra.mxu0 0.0
        %1038 = vmatprep.subr.mxu0 0.0
        %1039 = vmatpush2.msra.mxu0 0.0
        %1040 = vmatprep.subr.mxu0 0.0
        %1041 = vmatpush2.msra.mxu0 0.0
        %1042 = vmatprep.subr.mxu0 0.0
        %1043 = vmatpush2.msra.mxu0 0.0
        %1044 = vmatprep.subr.mxu0 0.0
        %1045 = vmatpush2.msra.mxu0 0.0
        %1046 = vmatprep.subr.mxu0 0.0
        %1047 = vmatpush2.msra.mxu0 0.0
        %1048 = vmatprep.subr.mxu0 0.0
        %1049 = vmatpush2.msra.mxu0 0.0
        %1050 = vmatprep.subr.mxu0 0.0
        %1051 = vmatpush2.msra.mxu0 0.0
        %1052 = vmatprep.subr.mxu0 0.0
        %1053 = vmatpush2.msra.mxu0 0.0
        %1054 = vmatprep.subr.mxu0 0.0
        %1055 = vmatpush2.msra.mxu0 0.0
        %1056 = vmatprep.subr.mxu0 0.0
        %1057 = vmatpush2.msra.mxu0 0.0
        %1058 = vmatprep.subr.mxu0 0.0
        %1059 = vmatpush2.msra.mxu0 0.0
        %1060 = vmatprep.subr.mxu0 0.0
        %1061 = vmatpush2.msra.mxu0 0.0
        %1062 = vmatprep.mubr.f32.mxu0 0.0
        %1063 = vmatmul.mubr.f32.gmra.mxu0 %v410
        %v1064 = vpop.f32.mrf.mxu0
        %v1065 = vadd.f32 %v371, %v1064
        %v1066 = vpop.f32.mrf.mxu0
        %v1067 = vadd.f32 %v371, %v1066
        %1068 = vmatprep.mubr.f32.mxu0 0.0
        %1069 = vmatmul.mubr.f32.gmra.mxu0 %v413
        %v1070 = vpop.f32.mrf.mxu0
        %v1071 = vadd.f32 %v376, %v1070
        %v1072 = vpop.f32.mrf.mxu0
        %v1073 = vadd.f32 %v376, %v1072
        %1074 = vmatprep.mubr.f32.mxu0 0.0
        %1075 = vmatmul.mubr.f32.gmra.mxu0 %v416
        %v1076 = vpop.f32.mrf.mxu0
        %v1077 = vadd.f32 %v381, %v1076
        %v1078 = vpop.f32.mrf.mxu0
        %v1079 = vadd.f32 %v381, %v1078
        %1080 = vmatprep.mubr.f32.mxu0 0.0
        %1081 = vmatmul.mubr.f32.gmra.mxu0 %v419
        %v1082 = vpop.f32.mrf.mxu0
        %v1083 = vadd.f32 %v386, %v1082
        %v1084 = vpop.f32.mrf.mxu0
        %v1085 = vadd.f32 %v386, %v1084
        %1086 = vmatprep.mubr.f32.mxu0 0.0
        %1087 = vmatmul.mubr.f32.gmra.mxu0 %v422
        %v1088 = vpop.f32.mrf.mxu0
        %v1089 = vadd.f32 %v391, %v1088
        %v1090 = vpop.f32.mrf.mxu0
        %v1091 = vadd.f32 %v391, %v1090
        %1092 = vmatprep.mubr.f32.mxu0 0.0
        %1093 = vmatmul.mubr.f32.gmra.mxu0 %v425
        %v1094 = vpop.f32.mrf.mxu0
        %v1095 = vadd.f32 %v396, %v1094
        %v1096 = vpop.f32.mrf.mxu0
        %v1097 = vadd.f32 %v396, %v1096
        %1098 = vmatprep.mubr.f32.mxu0 0.0
        %1099 = vmatmul.mubr.f32.gmra.mxu0 %v428
        %v1100 = vpop.f32.mrf.mxu0
        %v1101 = vadd.f32 %v401, %v1100
        %v1102 = vpop.f32.mrf.mxu0
        %v1103 = vadd.f32 %v401, %v1102
        %1104 = vmatprep.mubr.f32.mxu0 0.0
        %1105 = vmatmul.mubr.f32.gmra.mxu0 %v431
        %v1106 = vpop.f32.mrf.mxu0
        %v1107 = vadd.f32 %v406, %v1106
        %v1108 = vpop.f32.mrf.mxu0
        %v1109 = vadd.f32 %v406, %v1108
        %1110 = vdwg.mxu0
        %1111 = vmatprep.subr.mxu0 0.0
        %1112 = vmatpush1.msra.mxu0 0.0
        %1113 = vmatprep.subr.mxu0 0.0
        %1114 = vmatpush1.msra.mxu0 0.0
        %1115 = vmatprep.subr.mxu0 0.0
        %1116 = vmatpush1.msra.mxu0 0.0
        %1117 = vmatprep.subr.mxu0 0.0
        %1118 = vmatpush1.msra.mxu0 0.0
        %1119 = vmatprep.subr.mxu0 0.0
        %1120 = vmatpush1.msra.mxu0 0.0
        %1121 = vmatprep.subr.mxu0 0.0
        %1122 = vmatpush1.msra.mxu0 0.0
        %1123 = vmatprep.subr.mxu0 0.0
        %1124 = vmatpush1.msra.mxu0 0.0
        %1125 = vmatprep.subr.mxu0 0.0
        %1126 = vmatpush1.msra.mxu0 0.0
        %1127 = vmatprep.subr.mxu0 0.0
        %1128 = vmatpush1.msra.mxu0 0.0
        %1129 = vmatprep.subr.mxu0 0.0
        %1130 = vmatpush1.msra.mxu0 0.0
        %1131 = vmatprep.subr.mxu0 0.0
        %1132 = vmatpush1.msra.mxu0 0.0
        %1133 = vmatprep.subr.mxu0 0.0
        %1134 = vmatpush1.msra.mxu0 0.0
        %1135 = vmatprep.subr.mxu0 0.0
        %1136 = vmatpush1.msra.mxu0 0.0
        %1137 = vmatprep.subr.mxu0 0.0
        %1138 = vmatpush1.msra.mxu0 0.0
        %1139 = vmatprep.subr.mxu0 0.0
        %1140 = vmatpush1.msra.mxu0 0.0
        %1141 = vmatprep.subr.mxu0 %v357
        %1142 = vmatpush1.msra.mxu0 %v356
        %1143 = vmatprep.subr.mxu0 0.0
        %1144 = vmatpush2.msra.mxu0 0.0
        %1145 = vmatprep.subr.mxu0 0.0
        %1146 = vmatpush2.msra.mxu0 0.0
        %1147 = vmatprep.subr.mxu0 0.0
        %1148 = vmatpush2.msra.mxu0 0.0
        %1149 = vmatprep.subr.mxu0 0.0
        %1150 = vmatpush2.msra.mxu0 0.0
        %1151 = vmatprep.subr.mxu0 0.0
        %1152 = vmatpush2.msra.mxu0 0.0
        %1153 = vmatprep.subr.mxu0 0.0
        %1154 = vmatpush2.msra.mxu0 0.0
        %1155 = vmatprep.subr.mxu0 0.0
        %1156 = vmatpush2.msra.mxu0 0.0
        %1157 = vmatprep.subr.mxu0 0.0
        %1158 = vmatpush2.msra.mxu0 0.0
        %1159 = vmatprep.subr.mxu0 0.0
        %1160 = vmatpush2.msra.mxu0 0.0
        %1161 = vmatprep.subr.mxu0 0.0
        %1162 = vmatpush2.msra.mxu0 0.0
        %1163 = vmatprep.subr.mxu0 0.0
        %1164 = vmatpush2.msra.mxu0 0.0
        %1165 = vmatprep.subr.mxu0 0.0
        %1166 = vmatpush2.msra.mxu0 0.0
        %1167 = vmatprep.subr.mxu0 0.0
        %1168 = vmatpush2.msra.mxu0 0.0
        %1169 = vmatprep.subr.mxu0 0.0
        %1170 = vmatpush2.msra.mxu0 0.0
        %1171 = vmatprep.subr.mxu0 0.0
        %1172 = vmatpush2.msra.mxu0 0.0
        %1173 = vmatprep.subr.mxu0 0.0
        %1174 = vmatpush2.msra.mxu0 0.0
        %1175 = vmatprep.mubr.f32.mxu0 0.0
        %1176 = vmatmul.mubr.f32.gmra.mxu0 %v410
        %v1177 = vpop.f32.mrf.mxu0
        %v1178 = vadd.f32 %v371, %v1177
        %v1179 = vpop.f32.mrf.mxu0
        %v1180 = vadd.f32 %v371, %v1179
        %1181 = vmatprep.mubr.f32.mxu0 0.0
        %1182 = vmatmul.mubr.f32.gmra.mxu0 %v413
        %v1183 = vpop.f32.mrf.mxu0
        %v1184 = vadd.f32 %v376, %v1183
        %v1185 = vpop.f32.mrf.mxu0
        %v1186 = vadd.f32 %v376, %v1185
        %1187 = vmatprep.mubr.f32.mxu0 0.0
        %1188 = vmatmul.mubr.f32.gmra.mxu0 %v416
        %v1189 = vpop.f32.mrf.mxu0
        %v1190 = vadd.f32 %v381, %v1189
        %v1191 = vpop.f32.mrf.mxu0
        %v1192 = vadd.f32 %v381, %v1191
        %1193 = vmatprep.mubr.f32.mxu0 0.0
        %1194 = vmatmul.mubr.f32.gmra.mxu0 %v419
        %v1195 = vpop.f32.mrf.mxu0
        %v1196 = vadd.f32 %v386, %v1195
        %v1197 = vpop.f32.mrf.mxu0
        %v1198 = vadd.f32 %v386, %v1197
        %1199 = vmatprep.mubr.f32.mxu0 0.0
        %1200 = vmatmul.mubr.f32.gmra.mxu0 %v422
        %v1201 = vpop.f32.mrf.mxu0
        %v1202 = vadd.f32 %v391, %v1201
        %v1203 = vpop.f32.mrf.mxu0
        %v1204 = vadd.f32 %v391, %v1203
        %1205 = vmatprep.mubr.f32.mxu0 0.0
        %1206 = vmatmul.mubr.f32.gmra.mxu0 %v425
        %v1207 = vpop.f32.mrf.mxu0
        %v1208 = vadd.f32 %v396, %v1207
        %v1209 = vpop.f32.mrf.mxu0
        %v1210 = vadd.f32 %v396, %v1209
        %1211 = vmatprep.mubr.f32.mxu0 0.0
        %1212 = vmatmul.mubr.f32.gmra.mxu0 %v428
        %v1213 = vpop.f32.mrf.mxu0
        %v1214 = vadd.f32 %v401, %v1213
        %v1215 = vpop.f32.mrf.mxu0
        %v1216 = vadd.f32 %v401, %v1215
        %1217 = vmatprep.mubr.f32.mxu0 0.0
        %1218 = vmatmul.mubr.f32.gmra.mxu0 %v431
        %v1219 = vpop.f32.mrf.mxu0
        %v1220 = vadd.f32 %v406, %v1219
        %v1221 = vpop.f32.mrf.mxu0
        %v1222 = vadd.f32 %v406, %v1221
        %1223 = vdwg.mxu0
        %1224 = vmatprep.subr.mxu0 0.0
        %1225 = vmatpush1.msra.mxu0 0.0
        %1226 = vmatprep.subr.mxu0 0.0
        %1227 = vmatpush1.msra.mxu0 0.0
        %1228 = vmatprep.subr.mxu0 0.0
        %1229 = vmatpush1.msra.mxu0 0.0
        %1230 = vmatprep.subr.mxu0 0.0
        %1231 = vmatpush1.msra.mxu0 0.0
        %1232 = vmatprep.subr.mxu0 0.0
        %1233 = vmatpush1.msra.mxu0 0.0
        %1234 = vmatprep.subr.mxu0 0.0
        %1235 = vmatpush1.msra.mxu0 0.0
        %1236 = vmatprep.subr.mxu0 0.0
        %1237 = vmatpush1.msra.mxu0 0.0
        %1238 = vmatprep.subr.mxu0 0.0
        %1239 = vmatpush1.msra.mxu0 0.0
        %1240 = vmatprep.subr.mxu0 0.0
        %1241 = vmatpush1.msra.mxu0 0.0
        %1242 = vmatprep.subr.mxu0 0.0
        %1243 = vmatpush1.msra.mxu0 0.0
        %1244 = vmatprep.subr.mxu0 0.0
        %1245 = vmatpush1.msra.mxu0 0.0
        %1246 = vmatprep.subr.mxu0 0.0
        %1247 = vmatpush1.msra.mxu0 0.0
        %1248 = vmatprep.subr.mxu0 0.0
        %1249 = vmatpush1.msra.mxu0 0.0
        %1250 = vmatprep.subr.mxu0 0.0
        %1251 = vmatpush1.msra.mxu0 0.0
        %1252 = vmatprep.subr.mxu0 0.0
        %1253 = vmatpush1.msra.mxu0 0.0
        %1254 = vmatprep.subr.mxu0 %v359
        %1255 = vmatpush1.msra.mxu0 %v358
        %1256 = vmatprep.subr.mxu0 0.0
        %1257 = vmatpush2.msra.mxu0 0.0
        %1258 = vmatprep.subr.mxu0 0.0
        %1259 = vmatpush2.msra.mxu0 0.0
        %1260 = vmatprep.subr.mxu0 0.0
        %1261 = vmatpush2.msra.mxu0 0.0
        %1262 = vmatprep.subr.mxu0 0.0
        %1263 = vmatpush2.msra.mxu0 0.0
        %1264 = vmatprep.subr.mxu0 0.0
        %1265 = vmatpush2.msra.mxu0 0.0
        %1266 = vmatprep.subr.mxu0 0.0
        %1267 = vmatpush2.msra.mxu0 0.0
        %1268 = vmatprep.subr.mxu0 0.0
        %1269 = vmatpush2.msra.mxu0 0.0
        %1270 = vmatprep.subr.mxu0 0.0
        %1271 = vmatpush2.msra.mxu0 0.0
        %1272 = vmatprep.subr.mxu0 0.0
        %1273 = vmatpush2.msra.mxu0 0.0
        %1274 = vmatprep.subr.mxu0 0.0
        %1275 = vmatpush2.msra.mxu0 0.0
        %1276 = vmatprep.subr.mxu0 0.0
        %1277 = vmatpush2.msra.mxu0 0.0
        %1278 = vmatprep.subr.mxu0 0.0
        %1279 = vmatpush2.msra.mxu0 0.0
        %1280 = vmatprep.subr.mxu0 0.0
        %1281 = vmatpush2.msra.mxu0 0.0
        %1282 = vmatprep.subr.mxu0 0.0
        %1283 = vmatpush2.msra.mxu0 0.0
        %1284 = vmatprep.subr.mxu0 0.0
        %1285 = vmatpush2.msra.mxu0 0.0
        %1286 = vmatprep.subr.mxu0 0.0
        %1287 = vmatpush2.msra.mxu0 0.0
        %1288 = vmatprep.mubr.f32.mxu0 0.0
        %1289 = vmatmul.mubr.f32.gmra.mxu0 %v410
        %v1290 = vpop.f32.mrf.mxu0
        %v1291 = vadd.f32 %v371, %v1290
        %v1292 = vpop.f32.mrf.mxu0
        %v1293 = vadd.f32 %v371, %v1292
        %1294 = vmatprep.mubr.f32.mxu0 0.0
        %1295 = vmatmul.mubr.f32.gmra.mxu0 %v413
        %v1296 = vpop.f32.mrf.mxu0
        %v1297 = vadd.f32 %v376, %v1296
        %v1298 = vpop.f32.mrf.mxu0
        %v1299 = vadd.f32 %v376, %v1298
        %1300 = vmatprep.mubr.f32.mxu0 0.0
        %1301 = vmatmul.mubr.f32.gmra.mxu0 %v416
        %v1302 = vpop.f32.mrf.mxu0
        %v1303 = vadd.f32 %v381, %v1302
        %v1304 = vpop.f32.mrf.mxu0
        %v1305 = vadd.f32 %v381, %v1304
        %1306 = vmatprep.mubr.f32.mxu0 0.0
        %1307 = vmatmul.mubr.f32.gmra.mxu0 %v419
        %v1308 = vpop.f32.mrf.mxu0
        %v1309 = vadd.f32 %v386, %v1308
        %v1310 = vpop.f32.mrf.mxu0
        %v1311 = vadd.f32 %v386, %v1310
        %1312 = vmatprep.mubr.f32.mxu0 0.0
        %1313 = vmatmul.mubr.f32.gmra.mxu0 %v422
        %v1314 = vpop.f32.mrf.mxu0
        %v1315 = vadd.f32 %v391, %v1314
        %v1316 = vpop.f32.mrf.mxu0
        %v1317 = vadd.f32 %v391, %v1316
        %1318 = vmatprep.mubr.f32.mxu0 0.0
        %1319 = vmatmul.mubr.f32.gmra.mxu0 %v425
        %v1320 = vpop.f32.mrf.mxu0
        %v1321 = vadd.f32 %v396, %v1320
        %v1322 = vpop.f32.mrf.mxu0
        %v1323 = vadd.f32 %v396, %v1322
        %1324 = vmatprep.mubr.f32.mxu0 0.0
        %1325 = vmatmul.mubr.f32.gmra.mxu0 %v428
        %v1326 = vpop.f32.mrf.mxu0
        %v1327 = vadd.f32 %v401, %v1326
        %v1328 = vpop.f32.mrf.mxu0
        %v1329 = vadd.f32 %v401, %v1328
        %1330 = vmatprep.mubr.f32.mxu0 0.0
        %1331 = vmatmul.mubr.f32.gmra.mxu0 %v431
        %v1332 = vpop.f32.mrf.mxu0
        %v1333 = vadd.f32 %v406, %v1332
        %v1334 = vpop.f32.mrf.mxu0
        %v1335 = vadd.f32 %v406, %v1334
        %1336 = vdwg.mxu0
        %v1337 = vmax.f32 %v500, 0.0
        %v1338 = vmax.f32 %v502, 0.0
        %v1339 = vmax.f32 %v613, 0.0
        %v1340 = vmax.f32 %v615, 0.0
        %v1341 = vmax.f32 %v726, 0.0
        %v1342 = vmax.f32 %v728, 0.0
        %v1343 = vmax.f32 %v839, 0.0
        %v1344 = vmax.f32 %v841, 0.0
        %v1345 = vmax.f32 %v952, 0.0
        %v1346 = vmax.f32 %v954, 0.0
        %v1347 = vmax.f32 %v1065, 0.0
        %v1348 = vmax.f32 %v1067, 0.0
        %v1349 = vmax.f32 %v1178, 0.0
        %v1350 = vmax.f32 %v1180, 0.0
        %v1351 = vmax.f32 %v1291, 0.0
        %v1352 = vmax.f32 %v1293, 0.0
        %v1353 = vmax.f32 %v506, 0.0
        %v1354 = vmax.f32 %v508, 0.0
        %v1355 = vmax.f32 %v619, 0.0
        %v1356 = vmax.f32 %v621, 0.0
        %v1357 = vmax.f32 %v732, 0.0
        %v1358 = vmax.f32 %v734, 0.0
        %v1359 = vmax.f32 %v845, 0.0
        %v1360 = vmax.f32 %v847, 0.0
        %v1361 = vmax.f32 %v958, 0.0
        %v1362 = vmax.f32 %v960, 0.0
        %v1363 = vmax.f32 %v1071, 0.0
        %v1364 = vmax.f32 %v1073, 0.0
        %v1365 = vmax.f32 %v1184, 0.0
        %v1366 = vmax.f32 %v1186, 0.0
        %v1367 = vmax.f32 %v1297, 0.0
        %v1368 = vmax.f32 %v1299, 0.0
        %v1369 = vmax.f32 %v512, 0.0
        %v1370 = vmax.f32 %v514, 0.0
        %v1371 = vmax.f32 %v625, 0.0
        %v1372 = vmax.f32 %v627, 0.0
        %v1373 = vmax.f32 %v738, 0.0
        %v1374 = vmax.f32 %v740, 0.0
        %v1375 = vmax.f32 %v851, 0.0
        %v1376 = vmax.f32 %v853, 0.0
        %v1377 = vmax.f32 %v964, 0.0
        %v1378 = vmax.f32 %v966, 0.0
        %v1379 = vmax.f32 %v1077, 0.0
        %v1380 = vmax.f32 %v1079, 0.0
        %v1381 = vmax.f32 %v1190, 0.0
        %v1382 = vmax.f32 %v1192, 0.0
        %v1383 = vmax.f32 %v1303, 0.0
        %v1384 = vmax.f32 %v1305, 0.0
        %v1385 = vmax.f32 %v518, 0.0
        %v1386 = vmax.f32 %v520, 0.0
        %v1387 = vmax.f32 %v631, 0.0
        %v1388 = vmax.f32 %v633, 0.0
        %v1389 = vmax.f32 %v744, 0.0
        %v1390 = vmax.f32 %v746, 0.0
        %v1391 = vmax.f32 %v857, 0.0
        %v1392 = vmax.f32 %v859, 0.0
        %v1393 = vmax.f32 %v970, 0.0
        %v1394 = vmax.f32 %v972, 0.0
        %v1395 = vmax.f32 %v1083, 0.0
        %v1396 = vmax.f32 %v1085, 0.0
        %v1397 = vmax.f32 %v1196, 0.0
        %v1398 = vmax.f32 %v1198, 0.0
        %v1399 = vmax.f32 %v1309, 0.0
        %v1400 = vmax.f32 %v1311, 0.0
        %v1401 = vmax.f32 %v524, 0.0
        %v1402 = vmax.f32 %v526, 0.0
        %v1403 = vmax.f32 %v637, 0.0
        %v1404 = vmax.f32 %v639, 0.0
        %v1405 = vmax.f32 %v750, 0.0
        %v1406 = vmax.f32 %v752, 0.0
        %v1407 = vmax.f32 %v863, 0.0
        %v1408 = vmax.f32 %v865, 0.0
        %v1409 = vmax.f32 %v976, 0.0
        %v1410 = vmax.f32 %v978, 0.0
        %v1411 = vmax.f32 %v1089, 0.0
        %v1412 = vmax.f32 %v1091, 0.0
        %v1413 = vmax.f32 %v1202, 0.0
        %v1414 = vmax.f32 %v1204, 0.0
        %v1415 = vmax.f32 %v1315, 0.0
        %v1416 = vmax.f32 %v1317, 0.0
        %v1417 = vmax.f32 %v530, 0.0
        %v1418 = vmax.f32 %v532, 0.0
        %v1419 = vmax.f32 %v643, 0.0
        %v1420 = vmax.f32 %v645, 0.0
        %v1421 = vmax.f32 %v756, 0.0
        %v1422 = vmax.f32 %v758, 0.0
        %v1423 = vmax.f32 %v869, 0.0
        %v1424 = vmax.f32 %v871, 0.0
        %v1425 = vmax.f32 %v982, 0.0
        %v1426 = vmax.f32 %v984, 0.0
        %v1427 = vmax.f32 %v1095, 0.0
        %v1428 = vmax.f32 %v1097, 0.0
        %v1429 = vmax.f32 %v1208, 0.0
        %v1430 = vmax.f32 %v1210, 0.0
        %v1431 = vmax.f32 %v1321, 0.0
        %v1432 = vmax.f32 %v1323, 0.0
        %v1433 = vmax.f32 %v536, 0.0
        %v1434 = vmax.f32 %v538, 0.0
        %v1435 = vmax.f32 %v649, 0.0
        %v1436 = vmax.f32 %v651, 0.0
        %v1437 = vmax.f32 %v762, 0.0
        %v1438 = vmax.f32 %v764, 0.0
        %v1439 = vmax.f32 %v875, 0.0
        %v1440 = vmax.f32 %v877, 0.0
        %v1441 = vmax.f32 %v988, 0.0
        %v1442 = vmax.f32 %v990, 0.0
        %v1443 = vmax.f32 %v1101, 0.0
        %v1444 = vmax.f32 %v1103, 0.0
        %v1445 = vmax.f32 %v1214, 0.0
        %v1446 = vmax.f32 %v1216, 0.0
        %v1447 = vmax.f32 %v1327, 0.0
        %v1448 = vmax.f32 %v1329, 0.0
        %v1449 = vmax.f32 %v542, 0.0
        %v1450 = vmax.f32 %v544, 0.0
        %v1451 = vmax.f32 %v655, 0.0
        %v1452 = vmax.f32 %v657, 0.0
        %v1453 = vmax.f32 %v768, 0.0
        %v1454 = vmax.f32 %v770, 0.0
        %v1455 = vmax.f32 %v881, 0.0
        %v1456 = vmax.f32 %v883, 0.0
        %v1457 = vmax.f32 %v994, 0.0
        %v1458 = vmax.f32 %v996, 0.0
        %v1459 = vmax.f32 %v1107, 0.0
        %v1460 = vmax.f32 %v1109, 0.0
        %v1461 = vmax.f32 %v1220, 0.0
        %v1462 = vmax.f32 %v1222, 0.0
        %v1463 = vmax.f32 %v1333, 0.0
        %v1464 = vmax.f32 %v1335, 0.0
        %v1465 = vld [vmem:[%s3] sm:$0xff]
        %v1466 = vld [vmem:[%s3 + $0x8] sm:$0xff]
        %v1467 = vld [vmem:[%s3 + $0x10] sm:$0xff]
        %v1468 = vld [vmem:[%s3 + $0x18] sm:$0xff]
        %v1469 = vld [vmem:[%s3 + $0x20] sm:$0xff]
        %v1470 = vld [vmem:[%s3 + $0x28] sm:$0xff]
        %v1471 = vld [vmem:[%s3 + $0x30] sm:$0xff]
        %v1472 = vld [vmem:[%s3 + $0x38] sm:$0xff]
        %v1473 = vld [vmem:[%s3 + $0x40] sm:$0xff]
        %v1474 = vld [vmem:[%s3 + $0x48] sm:$0xff]
        %v1475 = vld [vmem:[%s3 + $0x50] sm:$0xff]
        %v1476 = vld [vmem:[%s3 + $0x58] sm:$0xff]
        %v1477 = vld [vmem:[%s3 + $0x60] sm:$0xff]
        %v1478 = vld [vmem:[%s3 + $0x68] sm:$0xff]
        %v1479 = vld [vmem:[%s3 + $0x70] sm:$0xff]
        %v1480 = vld [vmem:[%s3 + $0x78] sm:$0xff]
        %v1481 = vld [vmem:[%s4] sm:$0xff]
        %v1482 = vld [vmem:[%s4 + $0x8] sm:$0xff]
        %v1483 = vld [vmem:[%s4 + $0x10] sm:$0xff]
        %v1484 = vld [vmem:[%s4 + $0x18] sm:$0xff]
        %v1485 = vld [vmem:[%s4 + $0x20] sm:$0xff]
        %v1486 = vld [vmem:[%s4 + $0x28] sm:$0xff]
        %v1487 = vld [vmem:[%s4 + $0x30] sm:$0xff]
        %v1488 = vld [vmem:[%s4 + $0x38] sm:$0xff]
        %v1489 = vld [vmem:[%s4 + $0x40] sm:$0xff]
        %v1490 = vld [vmem:[%s4 + $0x48] sm:$0xff]
        %v1491 = vld [vmem:[%s4 + $0x50] sm:$0xff]
        %v1492 = vld [vmem:[%s4 + $0x58] sm:$0xff]
        %v1493 = vld [vmem:[%s4 + $0x60] sm:$0xff]
        %v1494 = vld [vmem:[%s4 + $0x68] sm:$0xff]
        %v1495 = vld [vmem:[%s4 + $0x70] sm:$0xff]
        %v1496 = vld [vmem:[%s4 + $0x78] sm:$0xff]
        %1498 = vset.pattern.permute.xlu0 0
        %1499 = vperm.xlu0 %1498, %v1481
        %v1500 = vpop.permute.xlu0 %1499
        %1503 = vset.pattern.permute.xlu0 0
        %1504 = vperm.xlu0 %1503, %v1482
        %v1505 = vpop.permute.xlu0 %1504
        %1508 = vset.pattern.permute.xlu0 0
        %1509 = vperm.xlu0 %1508, %v1483
        %v1510 = vpop.permute.xlu0 %1509
        %1513 = vset.pattern.permute.xlu0 0
        %1514 = vperm.xlu0 %1513, %v1484
        %v1515 = vpop.permute.xlu0 %1514
        %1518 = vset.pattern.permute.xlu0 0
        %1519 = vperm.xlu0 %1518, %v1485
        %v1520 = vpop.permute.xlu0 %1519
        %1523 = vset.pattern.permute.xlu0 0
        %1524 = vperm.xlu0 %1523, %v1486
        %v1525 = vpop.permute.xlu0 %1524
        %1528 = vset.pattern.permute.xlu0 0
        %1529 = vperm.xlu0 %1528, %v1487
        %v1530 = vpop.permute.xlu0 %1529
        %1533 = vset.pattern.permute.xlu0 0
        %1534 = vperm.xlu0 %1533, %v1488
        %v1535 = vpop.permute.xlu0 %1534
        %1538 = vset.pattern.permute.xlu0 0
        %1539 = vperm.xlu0 %1538, %v1489
        %v1540 = vpop.permute.xlu0 %1539
        %1543 = vset.pattern.permute.xlu0 0
        %1544 = vperm.xlu0 %1543, %v1490
        %v1545 = vpop.permute.xlu0 %1544
        %1548 = vset.pattern.permute.xlu0 0
        %1549 = vperm.xlu0 %1548, %v1491
        %v1550 = vpop.permute.xlu0 %1549
        %1553 = vset.pattern.permute.xlu0 0
        %1554 = vperm.xlu0 %1553, %v1492
        %v1555 = vpop.permute.xlu0 %1554
        %1558 = vset.pattern.permute.xlu0 0
        %1559 = vperm.xlu0 %1558, %v1493
        %v1560 = vpop.permute.xlu0 %1559
        %1563 = vset.pattern.permute.xlu0 0
        %1564 = vperm.xlu0 %1563, %v1494
        %v1565 = vpop.permute.xlu0 %1564
        %1568 = vset.pattern.permute.xlu0 0
        %1569 = vperm.xlu0 %1568, %v1495
        %v1570 = vpop.permute.xlu0 %1569
        %1573 = vset.pattern.permute.xlu0 0
        %1574 = vperm.xlu0 %1573, %v1496
        %v1575 = vpop.permute.xlu0 %1574
        %vm1577 = vcmask 523264
        %v1579 = vsel %vm1577, %v1465, 0
        %v1582 = vsel %vm1577, %v1466, 0
        %v1585 = vsel %vm1577, %v1467, 0
        %v1588 = vsel %vm1577, %v1468, 0
        %v1591 = vsel %vm1577, %v1469, 0
        %v1594 = vsel %vm1577, %v1470, 0
        %v1597 = vsel %vm1577, %v1471, 0
        %v1600 = vsel %vm1577, %v1472, 0
        %v1603 = vsel %vm1577, %v1473, 0
        %v1606 = vsel %vm1577, %v1474, 0
        %v1609 = vsel %vm1577, %v1475, 0
        %v1612 = vsel %vm1577, %v1476, 0
        %v1615 = vsel %vm1577, %v1477, 0
        %v1618 = vsel %vm1577, %v1478, 0
        %v1621 = vsel %vm1577, %v1479, 0
        %v1624 = vsel %vm1577, %v1480, 0
        %1626 = vmatprep.subr.mxu0 0.0
        %1627 = vmatpush1.msra.mxu0 0.0
        %1628 = vmatprep.subr.mxu0 0.0
        %1629 = vmatpush1.msra.mxu0 0.0
        %1630 = vmatprep.subr.mxu0 0.0
        %1631 = vmatpush1.msra.mxu0 0.0
        %1632 = vmatprep.subr.mxu0 0.0
        %1633 = vmatpush1.msra.mxu0 0.0
        %1634 = vmatprep.subr.mxu0 0.0
        %1635 = vmatpush1.msra.mxu0 0.0
        %1636 = vmatprep.subr.mxu0 0.0
        %1637 = vmatpush1.msra.mxu0 0.0
        %1638 = vmatprep.subr.mxu0 0.0
        %1639 = vmatpush1.msra.mxu0 0.0
        %1640 = vmatprep.subr.mxu0 0.0
        %1641 = vmatpush1.msra.mxu0 0.0
        %1642 = vmatprep.subr.mxu0 %v1450
        %1643 = vmatpush1.msra.mxu0 %v1449
        %1644 = vmatprep.subr.mxu0 %v1434
        %1645 = vmatpush1.msra.mxu0 %v1433
        %1646 = vmatprep.subr.mxu0 %v1418
        %1647 = vmatpush1.msra.mxu0 %v1417
        %1648 = vmatprep.subr.mxu0 %v1402
        %1649 = vmatpush1.msra.mxu0 %v1401
        %1650 = vmatprep.subr.mxu0 %v1386
        %1651 = vmatpush1.msra.mxu0 %v1385
        %1652 = vmatprep.subr.mxu0 %v1370
        %1653 = vmatpush1.msra.mxu0 %v1369
        %1654 = vmatprep.subr.mxu0 %v1354
        %1655 = vmatpush1.msra.mxu0 %v1353
        %1656 = vmatprep.subr.mxu0 %v1338
        %1657 = vmatpush1.msra.mxu0 %v1337
        %1658 = vmatprep.subr.mxu0 0.0
        %1659 = vmatpush2.msra.mxu0 0.0
        %1660 = vmatprep.subr.mxu0 0.0
        %1661 = vmatpush2.msra.mxu0 0.0
        %1662 = vmatprep.subr.mxu0 0.0
        %1663 = vmatpush2.msra.mxu0 0.0
        %1664 = vmatprep.subr.mxu0 0.0
        %1665 = vmatpush2.msra.mxu0 0.0
        %1666 = vmatprep.subr.mxu0 0.0
        %1667 = vmatpush2.msra.mxu0 0.0
        %1668 = vmatprep.subr.mxu0 0.0
        %1669 = vmatpush2.msra.mxu0 0.0
        %1670 = vmatprep.subr.mxu0 0.0
        %1671 = vmatpush2.msra.mxu0 0.0
        %1672 = vmatprep.subr.mxu0 0.0
        %1673 = vmatpush2.msra.mxu0 0.0
        %1674 = vmatprep.subr.mxu0 0.0
        %1675 = vmatpush2.msra.mxu0 0.0
        %1676 = vmatprep.subr.mxu0 0.0
        %1677 = vmatpush2.msra.mxu0 0.0
        %1678 = vmatprep.subr.mxu0 0.0
        %1679 = vmatpush2.msra.mxu0 0.0
        %1680 = vmatprep.subr.mxu0 0.0
        %1681 = vmatpush2.msra.mxu0 0.0
        %1682 = vmatprep.subr.mxu0 0.0
        %1683 = vmatpush2.msra.mxu0 0.0
        %1684 = vmatprep.subr.mxu0 0.0
        %1685 = vmatpush2.msra.mxu0 0.0
        %1686 = vmatprep.subr.mxu0 0.0
        %1687 = vmatpush2.msra.mxu0 0.0
        %1688 = vmatprep.subr.mxu0 0.0
        %1689 = vmatpush2.msra.mxu0 0.0
        %1690 = vmatprep.mubr.f32.mxu0 0.0
        %1691 = vmatmul.mubr.f32.gmra.mxu0 %v1579
        %v1692 = vpop.f32.mrf.mxu0
        %v1693 = vadd.f32 %v1500, %v1692
        %v1694 = vpop.f32.mrf.mxu0
        %v1695 = vadd.f32 %v1500, %v1694
        %1696 = vmatprep.mubr.f32.mxu0 0.0
        %1697 = vmatmul.mubr.f32.gmra.mxu0 %v1582
        %v1698 = vpop.f32.mrf.mxu0
        %v1699 = vadd.f32 %v1505, %v1698
        %v1700 = vpop.f32.mrf.mxu0
        %v1701 = vadd.f32 %v1505, %v1700
        %1702 = vmatprep.mubr.f32.mxu0 0.0
        %1703 = vmatmul.mubr.f32.gmra.mxu0 %v1585
        %v1704 = vpop.f32.mrf.mxu0
        %v1705 = vadd.f32 %v1510, %v1704
        %v1706 = vpop.f32.mrf.mxu0
        %v1707 = vadd.f32 %v1510, %v1706
        %1708 = vmatprep.mubr.f32.mxu0 0.0
        %1709 = vmatmul.mubr.f32.gmra.mxu0 %v1588
        %v1710 = vpop.f32.mrf.mxu0
        %v1711 = vadd.f32 %v1515, %v1710
        %v1712 = vpop.f32.mrf.mxu0
        %v1713 = vadd.f32 %v1515, %v1712
        %1714 = vmatprep.mubr.f32.mxu0 0.0
        %1715 = vmatmul.mubr.f32.gmra.mxu0 %v1591
        %v1716 = vpop.f32.mrf.mxu0
        %v1717 = vadd.f32 %v1520, %v1716
        %v1718 = vpop.f32.mrf.mxu0
        %v1719 = vadd.f32 %v1520, %v1718
        %1720 = vmatprep.mubr.f32.mxu0 0.0
        %1721 = vmatmul.mubr.f32.gmra.mxu0 %v1594
        %v1722 = vpop.f32.mrf.mxu0
        %v1723 = vadd.f32 %v1525, %v1722
        %v1724 = vpop.f32.mrf.mxu0
        %v1725 = vadd.f32 %v1525, %v1724
        %1726 = vmatprep.mubr.f32.mxu0 0.0
        %1727 = vmatmul.mubr.f32.gmra.mxu0 %v1597
        %v1728 = vpop.f32.mrf.mxu0
        %v1729 = vadd.f32 %v1530, %v1728
        %v1730 = vpop.f32.mrf.mxu0
        %v1731 = vadd.f32 %v1530, %v1730
        %1732 = vmatprep.mubr.f32.mxu0 0.0
        %1733 = vmatmul.mubr.f32.gmra.mxu0 %v1600
        %v1734 = vpop.f32.mrf.mxu0
        %v1735 = vadd.f32 %v1535, %v1734
        %v1736 = vpop.f32.mrf.mxu0
        %v1737 = vadd.f32 %v1535, %v1736
        %1738 = vmatprep.mubr.f32.mxu0 0.0
        %1739 = vmatmul.mubr.f32.gmra.mxu0 %v1603
        %v1740 = vpop.f32.mrf.mxu0
        %v1741 = vadd.f32 %v1540, %v1740
        %v1742 = vpop.f32.mrf.mxu0
        %v1743 = vadd.f32 %v1540, %v1742
        %1744 = vmatprep.mubr.f32.mxu0 0.0
        %1745 = vmatmul.mubr.f32.gmra.mxu0 %v1606
        %v1746 = vpop.f32.mrf.mxu0
        %v1747 = vadd.f32 %v1545, %v1746
        %v1748 = vpop.f32.mrf.mxu0
        %v1749 = vadd.f32 %v1545, %v1748
        %1750 = vmatprep.mubr.f32.mxu0 0.0
        %1751 = vmatmul.mubr.f32.gmra.mxu0 %v1609
        %v1752 = vpop.f32.mrf.mxu0
        %v1753 = vadd.f32 %v1550, %v1752
        %v1754 = vpop.f32.mrf.mxu0
        %v1755 = vadd.f32 %v1550, %v1754
        %1756 = vmatprep.mubr.f32.mxu0 0.0
        %1757 = vmatmul.mubr.f32.gmra.mxu0 %v1612
        %v1758 = vpop.f32.mrf.mxu0
        %v1759 = vadd.f32 %v1555, %v1758
        %v1760 = vpop.f32.mrf.mxu0
        %v1761 = vadd.f32 %v1555, %v1760
        %1762 = vmatprep.mubr.f32.mxu0 0.0
        %1763 = vmatmul.mubr.f32.gmra.mxu0 %v1615
        %v1764 = vpop.f32.mrf.mxu0
        %v1765 = vadd.f32 %v1560, %v1764
        %v1766 = vpop.f32.mrf.mxu0
        %v1767 = vadd.f32 %v1560, %v1766
        %1768 = vmatprep.mubr.f32.mxu0 0.0
        %1769 = vmatmul.mubr.f32.gmra.mxu0 %v1618
        %v1770 = vpop.f32.mrf.mxu0
        %v1771 = vadd.f32 %v1565, %v1770
        %v1772 = vpop.f32.mrf.mxu0
        %v1773 = vadd.f32 %v1565, %v1772
        %1774 = vmatprep.mubr.f32.mxu0 0.0
        %1775 = vmatmul.mubr.f32.gmra.mxu0 %v1621
        %v1776 = vpop.f32.mrf.mxu0
        %v1777 = vadd.f32 %v1570, %v1776
        %v1778 = vpop.f32.mrf.mxu0
        %v1779 = vadd.f32 %v1570, %v1778
        %1780 = vmatprep.mubr.f32.mxu0 0.0
        %1781 = vmatmul.mubr.f32.gmra.mxu0 %v1624
        %v1782 = vpop.f32.mrf.mxu0
        %v1783 = vadd.f32 %v1575, %v1782
        %v1784 = vpop.f32.mrf.mxu0
        %v1785 = vadd.f32 %v1575, %v1784
        %1786 = vdwg.mxu0
        %1787 = vmatprep.subr.mxu0 0.0
        %1788 = vmatpush1.msra.mxu0 0.0
        %1789 = vmatprep.subr.mxu0 0.0
        %1790 = vmatpush1.msra.mxu0 0.0
        %1791 = vmatprep.subr.mxu0 0.0
        %1792 = vmatpush1.msra.mxu0 0.0
        %1793 = vmatprep.subr.mxu0 0.0
        %1794 = vmatpush1.msra.mxu0 0.0
        %1795 = vmatprep.subr.mxu0 0.0
        %1796 = vmatpush1.msra.mxu0 0.0
        %1797 = vmatprep.subr.mxu0 0.0
        %1798 = vmatpush1.msra.mxu0 0.0
        %1799 = vmatprep.subr.mxu0 0.0
        %1800 = vmatpush1.msra.mxu0 0.0
        %1801 = vmatprep.subr.mxu0 0.0
        %1802 = vmatpush1.msra.mxu0 0.0
        %1803 = vmatprep.subr.mxu0 %v1452
        %1804 = vmatpush1.msra.mxu0 %v1451
        %1805 = vmatprep.subr.mxu0 %v1436
        %1806 = vmatpush1.msra.mxu0 %v1435
        %1807 = vmatprep.subr.mxu0 %v1420
        %1808 = vmatpush1.msra.mxu0 %v1419
        %1809 = vmatprep.subr.mxu0 %v1404
        %1810 = vmatpush1.msra.mxu0 %v1403
        %1811 = vmatprep.subr.mxu0 %v1388
        %1812 = vmatpush1.msra.mxu0 %v1387
        %1813 = vmatprep.subr.mxu0 %v1372
        %1814 = vmatpush1.msra.mxu0 %v1371
        %1815 = vmatprep.subr.mxu0 %v1356
        %1816 = vmatpush1.msra.mxu0 %v1355
        %1817 = vmatprep.subr.mxu0 %v1340
        %1818 = vmatpush1.msra.mxu0 %v1339
        %1819 = vmatprep.subr.mxu0 0.0
        %1820 = vmatpush2.msra.mxu0 0.0
        %1821 = vmatprep.subr.mxu0 0.0
        %1822 = vmatpush2.msra.mxu0 0.0
        %1823 = vmatprep.subr.mxu0 0.0
        %1824 = vmatpush2.msra.mxu0 0.0
        %1825 = vmatprep.subr.mxu0 0.0
        %1826 = vmatpush2.msra.mxu0 0.0
        %1827 = vmatprep.subr.mxu0 0.0
        %1828 = vmatpush2.msra.mxu0 0.0
        %1829 = vmatprep.subr.mxu0 0.0
        %1830 = vmatpush2.msra.mxu0 0.0
        %1831 = vmatprep.subr.mxu0 0.0
        %1832 = vmatpush2.msra.mxu0 0.0
        %1833 = vmatprep.subr.mxu0 0.0
        %1834 = vmatpush2.msra.mxu0 0.0
        %1835 = vmatprep.subr.mxu0 0.0
        %1836 = vmatpush2.msra.mxu0 0.0
        %1837 = vmatprep.subr.mxu0 0.0
        %1838 = vmatpush2.msra.mxu0 0.0
        %1839 = vmatprep.subr.mxu0 0.0
        %1840 = vmatpush2.msra.mxu0 0.0
        %1841 = vmatprep.subr.mxu0 0.0
        %1842 = vmatpush2.msra.mxu0 0.0
        %1843 = vmatprep.subr.mxu0 0.0
        %1844 = vmatpush2.msra.mxu0 0.0
        %1845 = vmatprep.subr.mxu0 0.0
        %1846 = vmatpush2.msra.mxu0 0.0
        %1847 = vmatprep.subr.mxu0 0.0
        %1848 = vmatpush2.msra.mxu0 0.0
        %1849 = vmatprep.subr.mxu0 0.0
        %1850 = vmatpush2.msra.mxu0 0.0
        %1851 = vmatprep.mubr.f32.mxu0 0.0
        %1852 = vmatmul.mubr.f32.gmra.mxu0 %v1579
        %v1853 = vpop.f32.mrf.mxu0
        %v1854 = vadd.f32 %v1500, %v1853
        %v1855 = vpop.f32.mrf.mxu0
        %v1856 = vadd.f32 %v1500, %v1855
        %1857 = vmatprep.mubr.f32.mxu0 0.0
        %1858 = vmatmul.mubr.f32.gmra.mxu0 %v1582
        %v1859 = vpop.f32.mrf.mxu0
        %v1860 = vadd.f32 %v1505, %v1859
        %v1861 = vpop.f32.mrf.mxu0
        %v1862 = vadd.f32 %v1505, %v1861
        %1863 = vmatprep.mubr.f32.mxu0 0.0
        %1864 = vmatmul.mubr.f32.gmra.mxu0 %v1585
        %v1865 = vpop.f32.mrf.mxu0
        %v1866 = vadd.f32 %v1510, %v1865
        %v1867 = vpop.f32.mrf.mxu0
        %v1868 = vadd.f32 %v1510, %v1867
        %1869 = vmatprep.mubr.f32.mxu0 0.0
        %1870 = vmatmul.mubr.f32.gmra.mxu0 %v1588
        %v1871 = vpop.f32.mrf.mxu0
        %v1872 = vadd.f32 %v1515, %v1871
        %v1873 = vpop.f32.mrf.mxu0
        %v1874 = vadd.f32 %v1515, %v1873
        %1875 = vmatprep.mubr.f32.mxu0 0.0
        %1876 = vmatmul.mubr.f32.gmra.mxu0 %v1591
        %v1877 = vpop.f32.mrf.mxu0
        %v1878 = vadd.f32 %v1520, %v1877
        %v1879 = vpop.f32.mrf.mxu0
        %v1880 = vadd.f32 %v1520, %v1879
        %1881 = vmatprep.mubr.f32.mxu0 0.0
        %1882 = vmatmul.mubr.f32.gmra.mxu0 %v1594
        %v1883 = vpop.f32.mrf.mxu0
        %v1884 = vadd.f32 %v1525, %v1883
        %v1885 = vpop.f32.mrf.mxu0
        %v1886 = vadd.f32 %v1525, %v1885
        %1887 = vmatprep.mubr.f32.mxu0 0.0
        %1888 = vmatmul.mubr.f32.gmra.mxu0 %v1597
        %v1889 = vpop.f32.mrf.mxu0
        %v1890 = vadd.f32 %v1530, %v1889
        %v1891 = vpop.f32.mrf.mxu0
        %v1892 = vadd.f32 %v1530, %v1891
        %1893 = vmatprep.mubr.f32.mxu0 0.0
        %1894 = vmatmul.mubr.f32.gmra.mxu0 %v1600
        %v1895 = vpop.f32.mrf.mxu0
        %v1896 = vadd.f32 %v1535, %v1895
        %v1897 = vpop.f32.mrf.mxu0
        %v1898 = vadd.f32 %v1535, %v1897
        %1899 = vmatprep.mubr.f32.mxu0 0.0
        %1900 = vmatmul.mubr.f32.gmra.mxu0 %v1603
        %v1901 = vpop.f32.mrf.mxu0
        %v1902 = vadd.f32 %v1540, %v1901
        %v1903 = vpop.f32.mrf.mxu0
        %v1904 = vadd.f32 %v1540, %v1903
        %1905 = vmatprep.mubr.f32.mxu0 0.0
        %1906 = vmatmul.mubr.f32.gmra.mxu0 %v1606
        %v1907 = vpop.f32.mrf.mxu0
        %v1908 = vadd.f32 %v1545, %v1907
        %v1909 = vpop.f32.mrf.mxu0
        %v1910 = vadd.f32 %v1545, %v1909
        %1911 = vmatprep.mubr.f32.mxu0 0.0
        %1912 = vmatmul.mubr.f32.gmra.mxu0 %v1609
        %v1913 = vpop.f32.mrf.mxu0
        %v1914 = vadd.f32 %v1550, %v1913
        %v1915 = vpop.f32.mrf.mxu0
        %v1916 = vadd.f32 %v1550, %v1915
        %1917 = vmatprep.mubr.f32.mxu0 0.0
        %1918 = vmatmul.mubr.f32.gmra.mxu0 %v1612
        %v1919 = vpop.f32.mrf.mxu0
        %v1920 = vadd.f32 %v1555, %v1919
        %v1921 = vpop.f32.mrf.mxu0
        %v1922 = vadd.f32 %v1555, %v1921
        %1923 = vmatprep.mubr.f32.mxu0 0.0
        %1924 = vmatmul.mubr.f32.gmra.mxu0 %v1615
        %v1925 = vpop.f32.mrf.mxu0
        %v1926 = vadd.f32 %v1560, %v1925
        %v1927 = vpop.f32.mrf.mxu0
        %v1928 = vadd.f32 %v1560, %v1927
        %1929 = vmatprep.mubr.f32.mxu0 0.0
        %1930 = vmatmul.mubr.f32.gmra.mxu0 %v1618
        %v1931 = vpop.f32.mrf.mxu0
        %v1932 = vadd.f32 %v1565, %v1931
        %v1933 = vpop.f32.mrf.mxu0
        %v1934 = vadd.f32 %v1565, %v1933
        %1935 = vmatprep.mubr.f32.mxu0 0.0
        %1936 = vmatmul.mubr.f32.gmra.mxu0 %v1621
        %v1937 = vpop.f32.mrf.mxu0
        %v1938 = vadd.f32 %v1570, %v1937
        %v1939 = vpop.f32.mrf.mxu0
        %v1940 = vadd.f32 %v1570, %v1939
        %1941 = vmatprep.mubr.f32.mxu0 0.0
        %1942 = vmatmul.mubr.f32.gmra.mxu0 %v1624
        %v1943 = vpop.f32.mrf.mxu0
        %v1944 = vadd.f32 %v1575, %v1943
        %v1945 = vpop.f32.mrf.mxu0
        %v1946 = vadd.f32 %v1575, %v1945
        %1947 = vdwg.mxu0
        %1948 = vmatprep.subr.mxu0 0.0
        %1949 = vmatpush1.msra.mxu0 0.0
        %1950 = vmatprep.subr.mxu0 0.0
        %1951 = vmatpush1.msra.mxu0 0.0
        %1952 = vmatprep.subr.mxu0 0.0
        %1953 = vmatpush1.msra.mxu0 0.0
        %1954 = vmatprep.subr.mxu0 0.0
        %1955 = vmatpush1.msra.mxu0 0.0
        %1956 = vmatprep.subr.mxu0 0.0
        %1957 = vmatpush1.msra.mxu0 0.0
        %1958 = vmatprep.subr.mxu0 0.0
        %1959 = vmatpush1.msra.mxu0 0.0
        %1960 = vmatprep.subr.mxu0 0.0
        %1961 = vmatpush1.msra.mxu0 0.0
        %1962 = vmatprep.subr.mxu0 0.0
        %1963 = vmatpush1.msra.mxu0 0.0
        %1964 = vmatprep.subr.mxu0 %v1454
        %1965 = vmatpush1.msra.mxu0 %v1453
        %1966 = vmatprep.subr.mxu0 %v1438
        %1967 = vmatpush1.msra.mxu0 %v1437
        %1968 = vmatprep.subr.mxu0 %v1422
        %1969 = vmatpush1.msra.mxu0 %v1421
        %1970 = vmatprep.subr.mxu0 %v1406
        %1971 = vmatpush1.msra.mxu0 %v1405
        %1972 = vmatprep.subr.mxu0 %v1390
        %1973 = vmatpush1.msra.mxu0 %v1389
        %1974 = vmatprep.subr.mxu0 %v1374
        %1975 = vmatpush1.msra.mxu0 %v1373
        %1976 = vmatprep.subr.mxu0 %v1358
        %1977 = vmatpush1.msra.mxu0 %v1357
        %1978 = vmatprep.subr.mxu0 %v1342
        %1979 = vmatpush1.msra.mxu0 %v1341
        %1980 = vmatprep.subr.mxu0 0.0
        %1981 = vmatpush2.msra.mxu0 0.0
        %1982 = vmatprep.subr.mxu0 0.0
        %1983 = vmatpush2.msra.mxu0 0.0
        %1984 = vmatprep.subr.mxu0 0.0
        %1985 = vmatpush2.msra.mxu0 0.0
        %1986 = vmatprep.subr.mxu0 0.0
        %1987 = vmatpush2.msra.mxu0 0.0
        %1988 = vmatprep.subr.mxu0 0.0
        %1989 = vmatpush2.msra.mxu0 0.0
        %1990 = vmatprep.subr.mxu0 0.0
        %1991 = vmatpush2.msra.mxu0 0.0
        %1992 = vmatprep.subr.mxu0 0.0
        %1993 = vmatpush2.msra.mxu0 0.0
        %1994 = vmatprep.subr.mxu0 0.0
        %1995 = vmatpush2.msra.mxu0 0.0
        %1996 = vmatprep.subr.mxu0 0.0
        %1997 = vmatpush2.msra.mxu0 0.0
        %1998 = vmatprep.subr.mxu0 0.0
        %1999 = vmatpush2.msra.mxu0 0.0
        %2000 = vmatprep.subr.mxu0 0.0
        %2001 = vmatpush2.msra.mxu0 0.0
        %2002 = vmatprep.subr.mxu0 0.0
        %2003 = vmatpush2.msra.mxu0 0.0
        %2004 = vmatprep.subr.mxu0 0.0
        %2005 = vmatpush2.msra.mxu0 0.0
        %2006 = vmatprep.subr.mxu0 0.0
        %2007 = vmatpush2.msra.mxu0 0.0
        %2008 = vmatprep.subr.mxu0 0.0
        %2009 = vmatpush2.msra.mxu0 0.0
        %2010 = vmatprep.subr.mxu0 0.0
        %2011 = vmatpush2.msra.mxu0 0.0
        %2012 = vmatprep.mubr.f32.mxu0 0.0
        %2013 = vmatmul.mubr.f32.gmra.mxu0 %v1579
        %v2014 = vpop.f32.mrf.mxu0
        %v2015 = vadd.f32 %v1500, %v2014
        %v2016 = vpop.f32.mrf.mxu0
        %v2017 = vadd.f32 %v1500, %v2016
        %2018 = vmatprep.mubr.f32.mxu0 0.0
        %2019 = vmatmul.mubr.f32.gmra.mxu0 %v1582
        %v2020 = vpop.f32.mrf.mxu0
        %v2021 = vadd.f32 %v1505, %v2020
        %v2022 = vpop.f32.mrf.mxu0
        %v2023 = vadd.f32 %v1505, %v2022
        %2024 = vmatprep.mubr.f32.mxu0 0.0
        %2025 = vmatmul.mubr.f32.gmra.mxu0 %v1585
        %v2026 = vpop.f32.mrf.mxu0
        %v2027 = vadd.f32 %v1510, %v2026
        %v2028 = vpop.f32.mrf.mxu0
        %v2029 = vadd.f32 %v1510, %v2028
        %2030 = vmatprep.mubr.f32.mxu0 0.0
        %2031 = vmatmul.mubr.f32.gmra.mxu0 %v1588
        %v2032 = vpop.f32.mrf.mxu0
        %v2033 = vadd.f32 %v1515, %v2032
        %v2034 = vpop.f32.mrf.mxu0
        %v2035 = vadd.f32 %v1515, %v2034
        %2036 = vmatprep.mubr.f32.mxu0 0.0
        %2037 = vmatmul.mubr.f32.gmra.mxu0 %v1591
        %v2038 = vpop.f32.mrf.mxu0
        %v2039 = vadd.f32 %v1520, %v2038
        %v2040 = vpop.f32.mrf.mxu0
        %v2041 = vadd.f32 %v1520, %v2040
        %2042 = vmatprep.mubr.f32.mxu0 0.0
        %2043 = vmatmul.mubr.f32.gmra.mxu0 %v1594
        %v2044 = vpop.f32.mrf.mxu0
        %v2045 = vadd.f32 %v1525, %v2044
        %v2046 = vpop.f32.mrf.mxu0
        %v2047 = vadd.f32 %v1525, %v2046
        %2048 = vmatprep.mubr.f32.mxu0 0.0
        %2049 = vmatmul.mubr.f32.gmra.mxu0 %v1597
        %v2050 = vpop.f32.mrf.mxu0
        %v2051 = vadd.f32 %v1530, %v2050
        %v2052 = vpop.f32.mrf.mxu0
        %v2053 = vadd.f32 %v1530, %v2052
        %2054 = vmatprep.mubr.f32.mxu0 0.0
        %2055 = vmatmul.mubr.f32.gmra.mxu0 %v1600
        %v2056 = vpop.f32.mrf.mxu0
        %v2057 = vadd.f32 %v1535, %v2056
        %v2058 = vpop.f32.mrf.mxu0
        %v2059 = vadd.f32 %v1535, %v2058
        %2060 = vmatprep.mubr.f32.mxu0 0.0
        %2061 = vmatmul.mubr.f32.gmra.mxu0 %v1603
        %v2062 = vpop.f32.mrf.mxu0
        %v2063 = vadd.f32 %v1540, %v2062
        %v2064 = vpop.f32.mrf.mxu0
        %v2065 = vadd.f32 %v1540, %v2064
        %2066 = vmatprep.mubr.f32.mxu0 0.0
        %2067 = vmatmul.mubr.f32.gmra.mxu0 %v1606
        %v2068 = vpop.f32.mrf.mxu0
        %v2069 = vadd.f32 %v1545, %v2068
        %v2070 = vpop.f32.mrf.mxu0
        %v2071 = vadd.f32 %v1545, %v2070
        %2072 = vmatprep.mubr.f32.mxu0 0.0
        %2073 = vmatmul.mubr.f32.gmra.mxu0 %v1609
        %v2074 = vpop.f32.mrf.mxu0
        %v2075 = vadd.f32 %v1550, %v2074
        %v2076 = vpop.f32.mrf.mxu0
        %v2077 = vadd.f32 %v1550, %v2076
        %2078 = vmatprep.mubr.f32.mxu0 0.0
        %2079 = vmatmul.mubr.f32.gmra.mxu0 %v1612
        %v2080 = vpop.f32.mrf.mxu0
        %v2081 = vadd.f32 %v1555, %v2080
        %v2082 = vpop.f32.mrf.mxu0
        %v2083 = vadd.f32 %v1555, %v2082
        %2084 = vmatprep.mubr.f32.mxu0 0.0
        %2085 = vmatmul.mubr.f32.gmra.mxu0 %v1615
        %v2086 = vpop.f32.mrf.mxu0
        %v2087 = vadd.f32 %v1560, %v2086
        %v2088 = vpop.f32.mrf.mxu0
        %v2089 = vadd.f32 %v1560, %v2088
        %2090 = vmatprep.mubr.f32.mxu0 0.0
        %2091 = vmatmul.mubr.f32.gmra.mxu0 %v1618
        %v2092 = vpop.f32.mrf.mxu0
        %v2093 = vadd.f32 %v1565, %v2092
        %v2094 = vpop.f32.mrf.mxu0
        %v2095 = vadd.f32 %v1565, %v2094
        %2096 = vmatprep.mubr.f32.mxu0 0.0
        %2097 = vmatmul.mubr.f32.gmra.mxu0 %v1621
        %v2098 = vpop.f32.mrf.mxu0
        %v2099 = vadd.f32 %v1570, %v2098
        %v2100 = vpop.f32.mrf.mxu0
        %v2101 = vadd.f32 %v1570, %v2100
        %2102 = vmatprep.mubr.f32.mxu0 0.0
        %2103 = vmatmul.mubr.f32.gmra.mxu0 %v1624
        %v2104 = vpop.f32.mrf.mxu0
        %v2105 = vadd.f32 %v1575, %v2104
        %v2106 = vpop.f32.mrf.mxu0
        %v2107 = vadd.f32 %v1575, %v2106
        %2108 = vdwg.mxu0
        %2109 = vmatprep.subr.mxu0 0.0
        %2110 = vmatpush1.msra.mxu0 0.0
        %2111 = vmatprep.subr.mxu0 0.0
        %2112 = vmatpush1.msra.mxu0 0.0
        %2113 = vmatprep.subr.mxu0 0.0
        %2114 = vmatpush1.msra.mxu0 0.0
        %2115 = vmatprep.subr.mxu0 0.0
        %2116 = vmatpush1.msra.mxu0 0.0
        %2117 = vmatprep.subr.mxu0 0.0
        %2118 = vmatpush1.msra.mxu0 0.0
        %2119 = vmatprep.subr.mxu0 0.0
        %2120 = vmatpush1.msra.mxu0 0.0
        %2121 = vmatprep.subr.mxu0 0.0
        %2122 = vmatpush1.msra.mxu0 0.0
        %2123 = vmatprep.subr.mxu0 0.0
        %2124 = vmatpush1.msra.mxu0 0.0
        %2125 = vmatprep.subr.mxu0 %v1456
        %2126 = vmatpush1.msra.mxu0 %v1455
        %2127 = vmatprep.subr.mxu0 %v1440
        %2128 = vmatpush1.msra.mxu0 %v1439
        %2129 = vmatprep.subr.mxu0 %v1424
        %2130 = vmatpush1.msra.mxu0 %v1423
        %2131 = vmatprep.subr.mxu0 %v1408
        %2132 = vmatpush1.msra.mxu0 %v1407
        %2133 = vmatprep.subr.mxu0 %v1392
        %2134 = vmatpush1.msra.mxu0 %v1391
        %2135 = vmatprep.subr.mxu0 %v1376
        %2136 = vmatpush1.msra.mxu0 %v1375
        %2137 = vmatprep.subr.mxu0 %v1360
        %2138 = vmatpush1.msra.mxu0 %v1359
        %2139 = vmatprep.subr.mxu0 %v1344
        %2140 = vmatpush1.msra.mxu0 %v1343
        %2141 = vmatprep.subr.mxu0 0.0
        %2142 = vmatpush2.msra.mxu0 0.0
        %2143 = vmatprep.subr.mxu0 0.0
        %2144 = vmatpush2.msra.mxu0 0.0
        %2145 = vmatprep.subr.mxu0 0.0
        %2146 = vmatpush2.msra.mxu0 0.0
        %2147 = vmatprep.subr.mxu0 0.0
        %2148 = vmatpush2.msra.mxu0 0.0
        %2149 = vmatprep.subr.mxu0 0.0
        %2150 = vmatpush2.msra.mxu0 0.0
        %2151 = vmatprep.subr.mxu0 0.0
        %2152 = vmatpush2.msra.mxu0 0.0
        %2153 = vmatprep.subr.mxu0 0.0
        %2154 = vmatpush2.msra.mxu0 0.0
        %2155 = vmatprep.subr.mxu0 0.0
        %2156 = vmatpush2.msra.mxu0 0.0
        %2157 = vmatprep.subr.mxu0 0.0
        %2158 = vmatpush2.msra.mxu0 0.0
        %2159 = vmatprep.subr.mxu0 0.0
        %2160 = vmatpush2.msra.mxu0 0.0
        %2161 = vmatprep.subr.mxu0 0.0
        %2162 = vmatpush2.msra.mxu0 0.0
        %2163 = vmatprep.subr.mxu0 0.0
        %2164 = vmatpush2.msra.mxu0 0.0
        %2165 = vmatprep.subr.mxu0 0.0
        %2166 = vmatpush2.msra.mxu0 0.0
        %2167 = vmatprep.subr.mxu0 0.0
        %2168 = vmatpush2.msra.mxu0 0.0
        %2169 = vmatprep.subr.mxu0 0.0
        %2170 = vmatpush2.msra.mxu0 0.0
        %2171 = vmatprep.subr.mxu0 0.0
        %2172 = vmatpush2.msra.mxu0 0.0
        %2173 = vmatprep.mubr.f32.mxu0 0.0
        %2174 = vmatmul.mubr.f32.gmra.mxu0 %v1579
        %v2175 = vpop.f32.mrf.mxu0
        %v2176 = vadd.f32 %v1500, %v2175
        %v2177 = vpop.f32.mrf.mxu0
        %v2178 = vadd.f32 %v1500, %v2177
        %2179 = vmatprep.mubr.f32.mxu0 0.0
        %2180 = vmatmul.mubr.f32.gmra.mxu0 %v1582
        %v2181 = vpop.f32.mrf.mxu0
        %v2182 = vadd.f32 %v1505, %v2181
        %v2183 = vpop.f32.mrf.mxu0
        %v2184 = vadd.f32 %v1505, %v2183
        %2185 = vmatprep.mubr.f32.mxu0 0.0
        %2186 = vmatmul.mubr.f32.gmra.mxu0 %v1585
        %v2187 = vpop.f32.mrf.mxu0
        %v2188 = vadd.f32 %v1510, %v2187
        %v2189 = vpop.f32.mrf.mxu0
        %v2190 = vadd.f32 %v1510, %v2189
        %2191 = vmatprep.mubr.f32.mxu0 0.0
        %2192 = vmatmul.mubr.f32.gmra.mxu0 %v1588
        %v2193 = vpop.f32.mrf.mxu0
        %v2194 = vadd.f32 %v1515, %v2193
        %v2195 = vpop.f32.mrf.mxu0
        %v2196 = vadd.f32 %v1515, %v2195
        %2197 = vmatprep.mubr.f32.mxu0 0.0
        %2198 = vmatmul.mubr.f32.gmra.mxu0 %v1591
        %v2199 = vpop.f32.mrf.mxu0
        %v2200 = vadd.f32 %v1520, %v2199
        %v2201 = vpop.f32.mrf.mxu0
        %v2202 = vadd.f32 %v1520, %v2201
        %2203 = vmatprep.mubr.f32.mxu0 0.0
        %2204 = vmatmul.mubr.f32.gmra.mxu0 %v1594
        %v2205 = vpop.f32.mrf.mxu0
        %v2206 = vadd.f32 %v1525, %v2205
        %v2207 = vpop.f32.mrf.mxu0
        %v2208 = vadd.f32 %v1525, %v2207
        %2209 = vmatprep.mubr.f32.mxu0 0.0
        %2210 = vmatmul.mubr.f32.gmra.mxu0 %v1597
        %v2211 = vpop.f32.mrf.mxu0
        %v2212 = vadd.f32 %v1530, %v2211
        %v2213 = vpop.f32.mrf.mxu0
        %v2214 = vadd.f32 %v1530, %v2213
        %2215 = vmatprep.mubr.f32.mxu0 0.0
        %2216 = vmatmul.mubr.f32.gmra.mxu0 %v1600
        %v2217 = vpop.f32.mrf.mxu0
        %v2218 = vadd.f32 %v1535, %v2217
        %v2219 = vpop.f32.mrf.mxu0
        %v2220 = vadd.f32 %v1535, %v2219
        %2221 = vmatprep.mubr.f32.mxu0 0.0
        %2222 = vmatmul.mubr.f32.gmra.mxu0 %v1603
        %v2223 = vpop.f32.mrf.mxu0
        %v2224 = vadd.f32 %v1540, %v2223
        %v2225 = vpop.f32.mrf.mxu0
        %v2226 = vadd.f32 %v1540, %v2225
        %2227 = vmatprep.mubr.f32.mxu0 0.0
        %2228 = vmatmul.mubr.f32.gmra.mxu0 %v1606
        %v2229 = vpop.f32.mrf.mxu0
        %v2230 = vadd.f32 %v1545, %v2229
        %v2231 = vpop.f32.mrf.mxu0
        %v2232 = vadd.f32 %v1545, %v2231
        %2233 = vmatprep.mubr.f32.mxu0 0.0
        %2234 = vmatmul.mubr.f32.gmra.mxu0 %v1609
        %v2235 = vpop.f32.mrf.mxu0
        %v2236 = vadd.f32 %v1550, %v2235
        %v2237 = vpop.f32.mrf.mxu0
        %v2238 = vadd.f32 %v1550, %v2237
        %2239 = vmatprep.mubr.f32.mxu0 0.0
        %2240 = vmatmul.mubr.f32.gmra.mxu0 %v1612
        %v2241 = vpop.f32.mrf.mxu0
        %v2242 = vadd.f32 %v1555, %v2241
        %v2243 = vpop.f32.mrf.mxu0
        %v2244 = vadd.f32 %v1555, %v2243
        %2245 = vmatprep.mubr.f32.mxu0 0.0
        %2246 = vmatmul.mubr.f32.gmra.mxu0 %v1615
        %v2247 = vpop.f32.mrf.mxu0
        %v2248 = vadd.f32 %v1560, %v2247
        %v2249 = vpop.f32.mrf.mxu0
        %v2250 = vadd.f32 %v1560, %v2249
        %2251 = vmatprep.mubr.f32.mxu0 0.0
        %2252 = vmatmul.mubr.f32.gmra.mxu0 %v1618
        %v2253 = vpop.f32.mrf.mxu0
        %v2254 = vadd.f32 %v1565, %v2253
        %v2255 = vpop.f32.mrf.mxu0
        %v2256 = vadd.f32 %v1565, %v2255
        %2257 = vmatprep.mubr.f32.mxu0 0.0
        %2258 = vmatmul.mubr.f32.gmra.mxu0 %v1621
        %v2259 = vpop.f32.mrf.mxu0
        %v2260 = vadd.f32 %v1570, %v2259
        %v2261 = vpop.f32.mrf.mxu0
        %v2262 = vadd.f32 %v1570, %v2261
        %2263 = vmatprep.mubr.f32.mxu0 0.0
        %2264 = vmatmul.mubr.f32.gmra.mxu0 %v1624
        %v2265 = vpop.f32.mrf.mxu0
        %v2266 = vadd.f32 %v1575, %v2265
        %v2267 = vpop.f32.mrf.mxu0
        %v2268 = vadd.f32 %v1575, %v2267
        %2269 = vdwg.mxu0
        %2270 = vmatprep.subr.mxu0 0.0
        %2271 = vmatpush1.msra.mxu0 0.0
        %2272 = vmatprep.subr.mxu0 0.0
        %2273 = vmatpush1.msra.mxu0 0.0
        %2274 = vmatprep.subr.mxu0 0.0
        %2275 = vmatpush1.msra.mxu0 0.0
        %2276 = vmatprep.subr.mxu0 0.0
        %2277 = vmatpush1.msra.mxu0 0.0
        %2278 = vmatprep.subr.mxu0 0.0
        %2279 = vmatpush1.msra.mxu0 0.0
        %2280 = vmatprep.subr.mxu0 0.0
        %2281 = vmatpush1.msra.mxu0 0.0
        %2282 = vmatprep.subr.mxu0 0.0
        %2283 = vmatpush1.msra.mxu0 0.0
        %2284 = vmatprep.subr.mxu0 0.0
        %2285 = vmatpush1.msra.mxu0 0.0
        %2286 = vmatprep.subr.mxu0 %v1458
        %2287 = vmatpush1.msra.mxu0 %v1457
        %2288 = vmatprep.subr.mxu0 %v1442
        %2289 = vmatpush1.msra.mxu0 %v1441
        %2290 = vmatprep.subr.mxu0 %v1426
        %2291 = vmatpush1.msra.mxu0 %v1425
        %2292 = vmatprep.subr.mxu0 %v1410
        %2293 = vmatpush1.msra.mxu0 %v1409
        %2294 = vmatprep.subr.mxu0 %v1394
        %2295 = vmatpush1.msra.mxu0 %v1393
        %2296 = vmatprep.subr.mxu0 %v1378
        %2297 = vmatpush1.msra.mxu0 %v1377
        %2298 = vmatprep.subr.mxu0 %v1362
        %2299 = vmatpush1.msra.mxu0 %v1361
        %2300 = vmatprep.subr.mxu0 %v1346
        %2301 = vmatpush1.msra.mxu0 %v1345
        %2302 = vmatprep.subr.mxu0 0.0
        %2303 = vmatpush2.msra.mxu0 0.0
        %2304 = vmatprep.subr.mxu0 0.0
        %2305 = vmatpush2.msra.mxu0 0.0
        %2306 = vmatprep.subr.mxu0 0.0
        %2307 = vmatpush2.msra.mxu0 0.0
        %2308 = vmatprep.subr.mxu0 0.0
        %2309 = vmatpush2.msra.mxu0 0.0
        %2310 = vmatprep.subr.mxu0 0.0
        %2311 = vmatpush2.msra.mxu0 0.0
        %2312 = vmatprep.subr.mxu0 0.0
        %2313 = vmatpush2.msra.mxu0 0.0
        %2314 = vmatprep.subr.mxu0 0.0
        %2315 = vmatpush2.msra.mxu0 0.0
        %2316 = vmatprep.subr.mxu0 0.0
        %2317 = vmatpush2.msra.mxu0 0.0
        %2318 = vmatprep.subr.mxu0 0.0
        %2319 = vmatpush2.msra.mxu0 0.0
        %2320 = vmatprep.subr.mxu0 0.0
        %2321 = vmatpush2.msra.mxu0 0.0
        %2322 = vmatprep.subr.mxu0 0.0
        %2323 = vmatpush2.msra.mxu0 0.0
        %2324 = vmatprep.subr.mxu0 0.0
        %2325 = vmatpush2.msra.mxu0 0.0
        %2326 = vmatprep.subr.mxu0 0.0
        %2327 = vmatpush2.msra.mxu0 0.0
        %2328 = vmatprep.subr.mxu0 0.0
        %2329 = vmatpush2.msra.mxu0 0.0
        %2330 = vmatprep.subr.mxu0 0.0
        %2331 = vmatpush2.msra.mxu0 0.0
        %2332 = vmatprep.subr.mxu0 0.0
        %2333 = vmatpush2.msra.mxu0 0.0
        %2334 = vmatprep.mubr.f32.mxu0 0.0
        %2335 = vmatmul.mubr.f32.gmra.mxu0 %v1579
        %v2336 = vpop.f32.mrf.mxu0
        %v2337 = vadd.f32 %v1500, %v2336
        %v2338 = vpop.f32.mrf.mxu0
        %v2339 = vadd.f32 %v1500, %v2338
        %2340 = vmatprep.mubr.f32.mxu0 0.0
        %2341 = vmatmul.mubr.f32.gmra.mxu0 %v1582
        %v2342 = vpop.f32.mrf.mxu0
        %v2343 = vadd.f32 %v1505, %v2342
        %v2344 = vpop.f32.mrf.mxu0
        %v2345 = vadd.f32 %v1505, %v2344
        %2346 = vmatprep.mubr.f32.mxu0 0.0
        %2347 = vmatmul.mubr.f32.gmra.mxu0 %v1585
        %v2348 = vpop.f32.mrf.mxu0
        %v2349 = vadd.f32 %v1510, %v2348
        %v2350 = vpop.f32.mrf.mxu0
        %v2351 = vadd.f32 %v1510, %v2350
        %2352 = vmatprep.mubr.f32.mxu0 0.0
        %2353 = vmatmul.mubr.f32.gmra.mxu0 %v1588
        %v2354 = vpop.f32.mrf.mxu0
        %v2355 = vadd.f32 %v1515, %v2354
        %v2356 = vpop.f32.mrf.mxu0
        %v2357 = vadd.f32 %v1515, %v2356
        %2358 = vmatprep.mubr.f32.mxu0 0.0
        %2359 = vmatmul.mubr.f32.gmra.mxu0 %v1591
        %v2360 = vpop.f32.mrf.mxu0
        %v2361 = vadd.f32 %v1520, %v2360
        %v2362 = vpop.f32.mrf.mxu0
        %v2363 = vadd.f32 %v1520, %v2362
        %2364 = vmatprep.mubr.f32.mxu0 0.0
        %2365 = vmatmul.mubr.f32.gmra.mxu0 %v1594
        %v2366 = vpop.f32.mrf.mxu0
        %v2367 = vadd.f32 %v1525, %v2366
        %v2368 = vpop.f32.mrf.mxu0
        %v2369 = vadd.f32 %v1525, %v2368
        %2370 = vmatprep.mubr.f32.mxu0 0.0
        %2371 = vmatmul.mubr.f32.gmra.mxu0 %v1597
        %v2372 = vpop.f32.mrf.mxu0
        %v2373 = vadd.f32 %v1530, %v2372
        %v2374 = vpop.f32.mrf.mxu0
        %v2375 = vadd.f32 %v1530, %v2374
        %2376 = vmatprep.mubr.f32.mxu0 0.0
        %2377 = vmatmul.mubr.f32.gmra.mxu0 %v1600
        %v2378 = vpop.f32.mrf.mxu0
        %v2379 = vadd.f32 %v1535, %v2378
        %v2380 = vpop.f32.mrf.mxu0
        %v2381 = vadd.f32 %v1535, %v2380
        %2382 = vmatprep.mubr.f32.mxu0 0.0
        %2383 = vmatmul.mubr.f32.gmra.mxu0 %v1603
        %v2384 = vpop.f32.mrf.mxu0
        %v2385 = vadd.f32 %v1540, %v2384
        %v2386 = vpop.f32.mrf.mxu0
        %v2387 = vadd.f32 %v1540, %v2386
        %2388 = vmatprep.mubr.f32.mxu0 0.0
        %2389 = vmatmul.mubr.f32.gmra.mxu0 %v1606
        %v2390 = vpop.f32.mrf.mxu0
        %v2391 = vadd.f32 %v1545, %v2390
        %v2392 = vpop.f32.mrf.mxu0
        %v2393 = vadd.f32 %v1545, %v2392
        %2394 = vmatprep.mubr.f32.mxu0 0.0
        %2395 = vmatmul.mubr.f32.gmra.mxu0 %v1609
        %v2396 = vpop.f32.mrf.mxu0
        %v2397 = vadd.f32 %v1550, %v2396
        %v2398 = vpop.f32.mrf.mxu0
        %v2399 = vadd.f32 %v1550, %v2398
        %2400 = vmatprep.mubr.f32.mxu0 0.0
        %2401 = vmatmul.mubr.f32.gmra.mxu0 %v1612
        %v2402 = vpop.f32.mrf.mxu0
        %v2403 = vadd.f32 %v1555, %v2402
        %v2404 = vpop.f32.mrf.mxu0
        %v2405 = vadd.f32 %v1555, %v2404
        %2406 = vmatprep.mubr.f32.mxu0 0.0
        %2407 = vmatmul.mubr.f32.gmra.mxu0 %v1615
        %v2408 = vpop.f32.mrf.mxu0
        %v2409 = vadd.f32 %v1560, %v2408
        %v2410 = vpop.f32.mrf.mxu0
        %v2411 = vadd.f32 %v1560, %v2410
        %2412 = vmatprep.mubr.f32.mxu0 0.0
        %2413 = vmatmul.mubr.f32.gmra.mxu0 %v1618
        %v2414 = vpop.f32.mrf.mxu0
        %v2415 = vadd.f32 %v1565, %v2414
        %v2416 = vpop.f32.mrf.mxu0
        %v2417 = vadd.f32 %v1565, %v2416
        %2418 = vmatprep.mubr.f32.mxu0 0.0
        %2419 = vmatmul.mubr.f32.gmra.mxu0 %v1621
        %v2420 = vpop.f32.mrf.mxu0
        %v2421 = vadd.f32 %v1570, %v2420
        %v2422 = vpop.f32.mrf.mxu0
        %v2423 = vadd.f32 %v1570, %v2422
        %2424 = vmatprep.mubr.f32.mxu0 0.0
        %2425 = vmatmul.mubr.f32.gmra.mxu0 %v1624
        %v2426 = vpop.f32.mrf.mxu0
        %v2427 = vadd.f32 %v1575, %v2426
        %v2428 = vpop.f32.mrf.mxu0
        %v2429 = vadd.f32 %v1575, %v2428
        %2430 = vdwg.mxu0
        %2431 = vmatprep.subr.mxu0 0.0
        %2432 = vmatpush1.msra.mxu0 0.0
        %2433 = vmatprep.subr.mxu0 0.0
        %2434 = vmatpush1.msra.mxu0 0.0
        %2435 = vmatprep.subr.mxu0 0.0
        %2436 = vmatpush1.msra.mxu0 0.0
        %2437 = vmatprep.subr.mxu0 0.0
        %2438 = vmatpush1.msra.mxu0 0.0
        %2439 = vmatprep.subr.mxu0 0.0
        %2440 = vmatpush1.msra.mxu0 0.0
        %2441 = vmatprep.subr.mxu0 0.0
        %2442 = vmatpush1.msra.mxu0 0.0
        %2443 = vmatprep.subr.mxu0 0.0
        %2444 = vmatpush1.msra.mxu0 0.0
        %2445 = vmatprep.subr.mxu0 0.0
        %2446 = vmatpush1.msra.mxu0 0.0
        %2447 = vmatprep.subr.mxu0 %v1460
        %2448 = vmatpush1.msra.mxu0 %v1459
        %2449 = vmatprep.subr.mxu0 %v1444
        %2450 = vmatpush1.msra.mxu0 %v1443
        %2451 = vmatprep.subr.mxu0 %v1428
        %2452 = vmatpush1.msra.mxu0 %v1427
        %2453 = vmatprep.subr.mxu0 %v1412
        %2454 = vmatpush1.msra.mxu0 %v1411
        %2455 = vmatprep.subr.mxu0 %v1396
        %2456 = vmatpush1.msra.mxu0 %v1395
        %2457 = vmatprep.subr.mxu0 %v1380
        %2458 = vmatpush1.msra.mxu0 %v1379
        %2459 = vmatprep.subr.mxu0 %v1364
        %2460 = vmatpush1.msra.mxu0 %v1363
        %2461 = vmatprep.subr.mxu0 %v1348
        %2462 = vmatpush1.msra.mxu0 %v1347
        %2463 = vmatprep.subr.mxu0 0.0
        %2464 = vmatpush2.msra.mxu0 0.0
        %2465 = vmatprep.subr.mxu0 0.0
        %2466 = vmatpush2.msra.mxu0 0.0
        %2467 = vmatprep.subr.mxu0 0.0
        %2468 = vmatpush2.msra.mxu0 0.0
        %2469 = vmatprep.subr.mxu0 0.0
        %2470 = vmatpush2.msra.mxu0 0.0
        %2471 = vmatprep.subr.mxu0 0.0
        %2472 = vmatpush2.msra.mxu0 0.0
        %2473 = vmatprep.subr.mxu0 0.0
        %2474 = vmatpush2.msra.mxu0 0.0
        %2475 = vmatprep.subr.mxu0 0.0
        %2476 = vmatpush2.msra.mxu0 0.0
        %2477 = vmatprep.subr.mxu0 0.0
        %2478 = vmatpush2.msra.mxu0 0.0
        %2479 = vmatprep.subr.mxu0 0.0
        %2480 = vmatpush2.msra.mxu0 0.0
        %2481 = vmatprep.subr.mxu0 0.0
        %2482 = vmatpush2.msra.mxu0 0.0
        %2483 = vmatprep.subr.mxu0 0.0
        %2484 = vmatpush2.msra.mxu0 0.0
        %2485 = vmatprep.subr.mxu0 0.0
        %2486 = vmatpush2.msra.mxu0 0.0
        %2487 = vmatprep.subr.mxu0 0.0
        %2488 = vmatpush2.msra.mxu0 0.0
        %2489 = vmatprep.subr.mxu0 0.0
        %2490 = vmatpush2.msra.mxu0 0.0
        %2491 = vmatprep.subr.mxu0 0.0
        %2492 = vmatpush2.msra.mxu0 0.0
        %2493 = vmatprep.subr.mxu0 0.0
        %2494 = vmatpush2.msra.mxu0 0.0
        %2495 = vmatprep.mubr.f32.mxu0 0.0
        %2496 = vmatmul.mubr.f32.gmra.mxu0 %v1579
        %v2497 = vpop.f32.mrf.mxu0
        %v2498 = vadd.f32 %v1500, %v2497
        %v2499 = vpop.f32.mrf.mxu0
        %v2500 = vadd.f32 %v1500, %v2499
        %2501 = vmatprep.mubr.f32.mxu0 0.0
        %2502 = vmatmul.mubr.f32.gmra.mxu0 %v1582
        %v2503 = vpop.f32.mrf.mxu0
        %v2504 = vadd.f32 %v1505, %v2503
        %v2505 = vpop.f32.mrf.mxu0
        %v2506 = vadd.f32 %v1505, %v2505
        %2507 = vmatprep.mubr.f32.mxu0 0.0
        %2508 = vmatmul.mubr.f32.gmra.mxu0 %v1585
        %v2509 = vpop.f32.mrf.mxu0
        %v2510 = vadd.f32 %v1510, %v2509
        %v2511 = vpop.f32.mrf.mxu0
        %v2512 = vadd.f32 %v1510, %v2511
        %2513 = vmatprep.mubr.f32.mxu0 0.0
        %2514 = vmatmul.mubr.f32.gmra.mxu0 %v1588
        %v2515 = vpop.f32.mrf.mxu0
        %v2516 = vadd.f32 %v1515, %v2515
        %v2517 = vpop.f32.mrf.mxu0
        %v2518 = vadd.f32 %v1515, %v2517
        %2519 = vmatprep.mubr.f32.mxu0 0.0
        %2520 = vmatmul.mubr.f32.gmra.mxu0 %v1591
        %v2521 = vpop.f32.mrf.mxu0
        %v2522 = vadd.f32 %v1520, %v2521
        %v2523 = vpop.f32.mrf.mxu0
        %v2524 = vadd.f32 %v1520, %v2523
        %2525 = vmatprep.mubr.f32.mxu0 0.0
        %2526 = vmatmul.mubr.f32.gmra.mxu0 %v1594
        %v2527 = vpop.f32.mrf.mxu0
        %v2528 = vadd.f32 %v1525, %v2527
        %v2529 = vpop.f32.mrf.mxu0
        %v2530 = vadd.f32 %v1525, %v2529
        %2531 = vmatprep.mubr.f32.mxu0 0.0
        %2532 = vmatmul.mubr.f32.gmra.mxu0 %v1597
        %v2533 = vpop.f32.mrf.mxu0
        %v2534 = vadd.f32 %v1530, %v2533
        %v2535 = vpop.f32.mrf.mxu0
        %v2536 = vadd.f32 %v1530, %v2535
        %2537 = vmatprep.mubr.f32.mxu0 0.0
        %2538 = vmatmul.mubr.f32.gmra.mxu0 %v1600
        %v2539 = vpop.f32.mrf.mxu0
        %v2540 = vadd.f32 %v1535, %v2539
        %v2541 = vpop.f32.mrf.mxu0
        %v2542 = vadd.f32 %v1535, %v2541
        %2543 = vmatprep.mubr.f32.mxu0 0.0
        %2544 = vmatmul.mubr.f32.gmra.mxu0 %v1603
        %v2545 = vpop.f32.mrf.mxu0
        %v2546 = vadd.f32 %v1540, %v2545
        %v2547 = vpop.f32.mrf.mxu0
        %v2548 = vadd.f32 %v1540, %v2547
        %2549 = vmatprep.mubr.f32.mxu0 0.0
        %2550 = vmatmul.mubr.f32.gmra.mxu0 %v1606
        %v2551 = vpop.f32.mrf.mxu0
        %v2552 = vadd.f32 %v1545, %v2551
        %v2553 = vpop.f32.mrf.mxu0
        %v2554 = vadd.f32 %v1545, %v2553
        %2555 = vmatprep.mubr.f32.mxu0 0.0
        %2556 = vmatmul.mubr.f32.gmra.mxu0 %v1609
        %v2557 = vpop.f32.mrf.mxu0
        %v2558 = vadd.f32 %v1550, %v2557
        %v2559 = vpop.f32.mrf.mxu0
        %v2560 = vadd.f32 %v1550, %v2559
        %2561 = vmatprep.mubr.f32.mxu0 0.0
        %2562 = vmatmul.mubr.f32.gmra.mxu0 %v1612
        %v2563 = vpop.f32.mrf.mxu0
        %v2564 = vadd.f32 %v1555, %v2563
        %v2565 = vpop.f32.mrf.mxu0
        %v2566 = vadd.f32 %v1555, %v2565
        %2567 = vmatprep.mubr.f32.mxu0 0.0
        %2568 = vmatmul.mubr.f32.gmra.mxu0 %v1615
        %v2569 = vpop.f32.mrf.mxu0
        %v2570 = vadd.f32 %v1560, %v2569
        %v2571 = vpop.f32.mrf.mxu0
        %v2572 = vadd.f32 %v1560, %v2571
        %2573 = vmatprep.mubr.f32.mxu0 0.0
        %2574 = vmatmul.mubr.f32.gmra.mxu0 %v1618
        %v2575 = vpop.f32.mrf.mxu0
        %v2576 = vadd.f32 %v1565, %v2575
        %v2577 = vpop.f32.mrf.mxu0
        %v2578 = vadd.f32 %v1565, %v2577
        %2579 = vmatprep.mubr.f32.mxu0 0.0
        %2580 = vmatmul.mubr.f32.gmra.mxu0 %v1621
        %v2581 = vpop.f32.mrf.mxu0
        %v2582 = vadd.f32 %v1570, %v2581
        %v2583 = vpop.f32.mrf.mxu0
        %v2584 = vadd.f32 %v1570, %v2583
        %2585 = vmatprep.mubr.f32.mxu0 0.0
        %2586 = vmatmul.mubr.f32.gmra.mxu0 %v1624
        %v2587 = vpop.f32.mrf.mxu0
        %v2588 = vadd.f32 %v1575, %v2587
        %v2589 = vpop.f32.mrf.mxu0
        %v2590 = vadd.f32 %v1575, %v2589
        %2591 = vdwg.mxu0
        %2592 = vmatprep.subr.mxu0 0.0
        %2593 = vmatpush1.msra.mxu0 0.0
        %2594 = vmatprep.subr.mxu0 0.0
        %2595 = vmatpush1.msra.mxu0 0.0
        %2596 = vmatprep.subr.mxu0 0.0
        %2597 = vmatpush1.msra.mxu0 0.0
        %2598 = vmatprep.subr.mxu0 0.0
        %2599 = vmatpush1.msra.mxu0 0.0
        %2600 = vmatprep.subr.mxu0 0.0
        %2601 = vmatpush1.msra.mxu0 0.0
        %2602 = vmatprep.subr.mxu0 0.0
        %2603 = vmatpush1.msra.mxu0 0.0
        %2604 = vmatprep.subr.mxu0 0.0
        %2605 = vmatpush1.msra.mxu0 0.0
        %2606 = vmatprep.subr.mxu0 0.0
        %2607 = vmatpush1.msra.mxu0 0.0
        %2608 = vmatprep.subr.mxu0 %v1462
        %2609 = vmatpush1.msra.mxu0 %v1461
        %2610 = vmatprep.subr.mxu0 %v1446
        %2611 = vmatpush1.msra.mxu0 %v1445
        %2612 = vmatprep.subr.mxu0 %v1430
        %2613 = vmatpush1.msra.mxu0 %v1429
        %2614 = vmatprep.subr.mxu0 %v1414
        %2615 = vmatpush1.msra.mxu0 %v1413
        %2616 = vmatprep.subr.mxu0 %v1398
        %2617 = vmatpush1.msra.mxu0 %v1397
        %2618 = vmatprep.subr.mxu0 %v1382
        %2619 = vmatpush1.msra.mxu0 %v1381
        %2620 = vmatprep.subr.mxu0 %v1366
        %2621 = vmatpush1.msra.mxu0 %v1365
        %2622 = vmatprep.subr.mxu0 %v1350
        %2623 = vmatpush1.msra.mxu0 %v1349
        %2624 = vmatprep.subr.mxu0 0.0
        %2625 = vmatpush2.msra.mxu0 0.0
        %2626 = vmatprep.subr.mxu0 0.0
        %2627 = vmatpush2.msra.mxu0 0.0
        %2628 = vmatprep.subr.mxu0 0.0
        %2629 = vmatpush2.msra.mxu0 0.0
        %2630 = vmatprep.subr.mxu0 0.0
        %2631 = vmatpush2.msra.mxu0 0.0
        %2632 = vmatprep.subr.mxu0 0.0
        %2633 = vmatpush2.msra.mxu0 0.0
        %2634 = vmatprep.subr.mxu0 0.0
        %2635 = vmatpush2.msra.mxu0 0.0
        %2636 = vmatprep.subr.mxu0 0.0
        %2637 = vmatpush2.msra.mxu0 0.0
        %2638 = vmatprep.subr.mxu0 0.0
        %2639 = vmatpush2.msra.mxu0 0.0
        %2640 = vmatprep.subr.mxu0 0.0
        %2641 = vmatpush2.msra.mxu0 0.0
        %2642 = vmatprep.subr.mxu0 0.0
        %2643 = vmatpush2.msra.mxu0 0.0
        %2644 = vmatprep.subr.mxu0 0.0
        %2645 = vmatpush2.msra.mxu0 0.0
        %2646 = vmatprep.subr.mxu0 0.0
        %2647 = vmatpush2.msra.mxu0 0.0
        %2648 = vmatprep.subr.mxu0 0.0
        %2649 = vmatpush2.msra.mxu0 0.0
        %2650 = vmatprep.subr.mxu0 0.0
        %2651 = vmatpush2.msra.mxu0 0.0
        %2652 = vmatprep.subr.mxu0 0.0
        %2653 = vmatpush2.msra.mxu0 0.0
        %2654 = vmatprep.subr.mxu0 0.0
        %2655 = vmatpush2.msra.mxu0 0.0
        %2656 = vmatprep.mubr.f32.mxu0 0.0
        %2657 = vmatmul.mubr.f32.gmra.mxu0 %v1579
        %v2658 = vpop.f32.mrf.mxu0
        %v2659 = vadd.f32 %v1500, %v2658
        %v2660 = vpop.f32.mrf.mxu0
        %v2661 = vadd.f32 %v1500, %v2660
        %2662 = vmatprep.mubr.f32.mxu0 0.0
        %2663 = vmatmul.mubr.f32.gmra.mxu0 %v1582
        %v2664 = vpop.f32.mrf.mxu0
        %v2665 = vadd.f32 %v1505, %v2664
        %v2666 = vpop.f32.mrf.mxu0
        %v2667 = vadd.f32 %v1505, %v2666
        %2668 = vmatprep.mubr.f32.mxu0 0.0
        %2669 = vmatmul.mubr.f32.gmra.mxu0 %v1585
        %v2670 = vpop.f32.mrf.mxu0
        %v2671 = vadd.f32 %v1510, %v2670
        %v2672 = vpop.f32.mrf.mxu0
        %v2673 = vadd.f32 %v1510, %v2672
        %2674 = vmatprep.mubr.f32.mxu0 0.0
        %2675 = vmatmul.mubr.f32.gmra.mxu0 %v1588
        %v2676 = vpop.f32.mrf.mxu0
        %v2677 = vadd.f32 %v1515, %v2676
        %v2678 = vpop.f32.mrf.mxu0
        %v2679 = vadd.f32 %v1515, %v2678
        %2680 = vmatprep.mubr.f32.mxu0 0.0
        %2681 = vmatmul.mubr.f32.gmra.mxu0 %v1591
        %v2682 = vpop.f32.mrf.mxu0
        %v2683 = vadd.f32 %v1520, %v2682
        %v2684 = vpop.f32.mrf.mxu0
        %v2685 = vadd.f32 %v1520, %v2684
        %2686 = vmatprep.mubr.f32.mxu0 0.0
        %2687 = vmatmul.mubr.f32.gmra.mxu0 %v1594
        %v2688 = vpop.f32.mrf.mxu0
        %v2689 = vadd.f32 %v1525, %v2688
        %v2690 = vpop.f32.mrf.mxu0
        %v2691 = vadd.f32 %v1525, %v2690
        %2692 = vmatprep.mubr.f32.mxu0 0.0
        %2693 = vmatmul.mubr.f32.gmra.mxu0 %v1597
        %v2694 = vpop.f32.mrf.mxu0
        %v2695 = vadd.f32 %v1530, %v2694
        %v2696 = vpop.f32.mrf.mxu0
        %v2697 = vadd.f32 %v1530, %v2696
        %2698 = vmatprep.mubr.f32.mxu0 0.0
        %2699 = vmatmul.mubr.f32.gmra.mxu0 %v1600
        %v2700 = vpop.f32.mrf.mxu0
        %v2701 = vadd.f32 %v1535, %v2700
        %v2702 = vpop.f32.mrf.mxu0
        %v2703 = vadd.f32 %v1535, %v2702
        %2704 = vmatprep.mubr.f32.mxu0 0.0
        %2705 = vmatmul.mubr.f32.gmra.mxu0 %v1603
        %v2706 = vpop.f32.mrf.mxu0
        %v2707 = vadd.f32 %v1540, %v2706
        %v2708 = vpop.f32.mrf.mxu0
        %v2709 = vadd.f32 %v1540, %v2708
        %2710 = vmatprep.mubr.f32.mxu0 0.0
        %2711 = vmatmul.mubr.f32.gmra.mxu0 %v1606
        %v2712 = vpop.f32.mrf.mxu0
        %v2713 = vadd.f32 %v1545, %v2712
        %v2714 = vpop.f32.mrf.mxu0
        %v2715 = vadd.f32 %v1545, %v2714
        %2716 = vmatprep.mubr.f32.mxu0 0.0
        %2717 = vmatmul.mubr.f32.gmra.mxu0 %v1609
        %v2718 = vpop.f32.mrf.mxu0
        %v2719 = vadd.f32 %v1550, %v2718
        %v2720 = vpop.f32.mrf.mxu0
        %v2721 = vadd.f32 %v1550, %v2720
        %2722 = vmatprep.mubr.f32.mxu0 0.0
        %2723 = vmatmul.mubr.f32.gmra.mxu0 %v1612
        %v2724 = vpop.f32.mrf.mxu0
        %v2725 = vadd.f32 %v1555, %v2724
        %v2726 = vpop.f32.mrf.mxu0
        %v2727 = vadd.f32 %v1555, %v2726
        %2728 = vmatprep.mubr.f32.mxu0 0.0
        %2729 = vmatmul.mubr.f32.gmra.mxu0 %v1615
        %v2730 = vpop.f32.mrf.mxu0
        %v2731 = vadd.f32 %v1560, %v2730
        %v2732 = vpop.f32.mrf.mxu0
        %v2733 = vadd.f32 %v1560, %v2732
        %2734 = vmatprep.mubr.f32.mxu0 0.0
        %2735 = vmatmul.mubr.f32.gmra.mxu0 %v1618
        %v2736 = vpop.f32.mrf.mxu0
        %v2737 = vadd.f32 %v1565, %v2736
        %v2738 = vpop.f32.mrf.mxu0
        %v2739 = vadd.f32 %v1565, %v2738
        %2740 = vmatprep.mubr.f32.mxu0 0.0
        %2741 = vmatmul.mubr.f32.gmra.mxu0 %v1621
        %v2742 = vpop.f32.mrf.mxu0
        %v2743 = vadd.f32 %v1570, %v2742
        %v2744 = vpop.f32.mrf.mxu0
        %v2745 = vadd.f32 %v1570, %v2744
        %2746 = vmatprep.mubr.f32.mxu0 0.0
        %2747 = vmatmul.mubr.f32.gmra.mxu0 %v1624
        %v2748 = vpop.f32.mrf.mxu0
        %v2749 = vadd.f32 %v1575, %v2748
        %v2750 = vpop.f32.mrf.mxu0
        %v2751 = vadd.f32 %v1575, %v2750
        %2752 = vdwg.mxu0
        %2753 = vmatprep.subr.mxu0 0.0
        %2754 = vmatpush1.msra.mxu0 0.0
        %2755 = vmatprep.subr.mxu0 0.0
        %2756 = vmatpush1.msra.mxu0 0.0
        %2757 = vmatprep.subr.mxu0 0.0
        %2758 = vmatpush1.msra.mxu0 0.0
        %2759 = vmatprep.subr.mxu0 0.0
        %2760 = vmatpush1.msra.mxu0 0.0
        %2761 = vmatprep.subr.mxu0 0.0
        %2762 = vmatpush1.msra.mxu0 0.0
        %2763 = vmatprep.subr.mxu0 0.0
        %2764 = vmatpush1.msra.mxu0 0.0
        %2765 = vmatprep.subr.mxu0 0.0
        %2766 = vmatpush1.msra.mxu0 0.0
        %2767 = vmatprep.subr.mxu0 0.0
        %2768 = vmatpush1.msra.mxu0 0.0
        %2769 = vmatprep.subr.mxu0 %v1464
        %2770 = vmatpush1.msra.mxu0 %v1463
        %2771 = vmatprep.subr.mxu0 %v1448
        %2772 = vmatpush1.msra.mxu0 %v1447
        %2773 = vmatprep.subr.mxu0 %v1432
        %2774 = vmatpush1.msra.mxu0 %v1431
        %2775 = vmatprep.subr.mxu0 %v1416
        %2776 = vmatpush1.msra.mxu0 %v1415
        %2777 = vmatprep.subr.mxu0 %v1400
        %2778 = vmatpush1.msra.mxu0 %v1399
        %2779 = vmatprep.subr.mxu0 %v1384
        %2780 = vmatpush1.msra.mxu0 %v1383
        %2781 = vmatprep.subr.mxu0 %v1368
        %2782 = vmatpush1.msra.mxu0 %v1367
        %2783 = vmatprep.subr.mxu0 %v1352
        %2784 = vmatpush1.msra.mxu0 %v1351
        %2785 = vmatprep.subr.mxu0 0.0
        %2786 = vmatpush2.msra.mxu0 0.0
        %2787 = vmatprep.subr.mxu0 0.0
        %2788 = vmatpush2.msra.mxu0 0.0
        %2789 = vmatprep.subr.mxu0 0.0
        %2790 = vmatpush2.msra.mxu0 0.0
        %2791 = vmatprep.subr.mxu0 0.0
        %2792 = vmatpush2.msra.mxu0 0.0
        %2793 = vmatprep.subr.mxu0 0.0
        %2794 = vmatpush2.msra.mxu0 0.0
        %2795 = vmatprep.subr.mxu0 0.0
        %2796 = vmatpush2.msra.mxu0 0.0
        %2797 = vmatprep.subr.mxu0 0.0
        %2798 = vmatpush2.msra.mxu0 0.0
        %2799 = vmatprep.subr.mxu0 0.0
        %2800 = vmatpush2.msra.mxu0 0.0
        %2801 = vmatprep.subr.mxu0 0.0
        %2802 = vmatpush2.msra.mxu0 0.0
        %2803 = vmatprep.subr.mxu0 0.0
        %2804 = vmatpush2.msra.mxu0 0.0
        %2805 = vmatprep.subr.mxu0 0.0
        %2806 = vmatpush2.msra.mxu0 0.0
        %2807 = vmatprep.subr.mxu0 0.0
        %2808 = vmatpush2.msra.mxu0 0.0
        %2809 = vmatprep.subr.mxu0 0.0
        %2810 = vmatpush2.msra.mxu0 0.0
        %2811 = vmatprep.subr.mxu0 0.0
        %2812 = vmatpush2.msra.mxu0 0.0
        %2813 = vmatprep.subr.mxu0 0.0
        %2814 = vmatpush2.msra.mxu0 0.0
        %2815 = vmatprep.subr.mxu0 0.0
        %2816 = vmatpush2.msra.mxu0 0.0
        %2817 = vmatprep.mubr.f32.mxu0 0.0
        %2818 = vmatmul.mubr.f32.gmra.mxu0 %v1579
        %v2819 = vpop.f32.mrf.mxu0
        %v2820 = vadd.f32 %v1500, %v2819
        %v2821 = vpop.f32.mrf.mxu0
        %v2822 = vadd.f32 %v1500, %v2821
        %2823 = vmatprep.mubr.f32.mxu0 0.0
        %2824 = vmatmul.mubr.f32.gmra.mxu0 %v1582
        %v2825 = vpop.f32.mrf.mxu0
        %v2826 = vadd.f32 %v1505, %v2825
        %v2827 = vpop.f32.mrf.mxu0
        %v2828 = vadd.f32 %v1505, %v2827
        %2829 = vmatprep.mubr.f32.mxu0 0.0
        %2830 = vmatmul.mubr.f32.gmra.mxu0 %v1585
        %v2831 = vpop.f32.mrf.mxu0
        %v2832 = vadd.f32 %v1510, %v2831
        %v2833 = vpop.f32.mrf.mxu0
        %v2834 = vadd.f32 %v1510, %v2833
        %2835 = vmatprep.mubr.f32.mxu0 0.0
        %2836 = vmatmul.mubr.f32.gmra.mxu0 %v1588
        %v2837 = vpop.f32.mrf.mxu0
        %v2838 = vadd.f32 %v1515, %v2837
        %v2839 = vpop.f32.mrf.mxu0
        %v2840 = vadd.f32 %v1515, %v2839
        %2841 = vmatprep.mubr.f32.mxu0 0.0
        %2842 = vmatmul.mubr.f32.gmra.mxu0 %v1591
        %v2843 = vpop.f32.mrf.mxu0
        %v2844 = vadd.f32 %v1520, %v2843
        %v2845 = vpop.f32.mrf.mxu0
        %v2846 = vadd.f32 %v1520, %v2845
        %2847 = vmatprep.mubr.f32.mxu0 0.0
        %2848 = vmatmul.mubr.f32.gmra.mxu0 %v1594
        %v2849 = vpop.f32.mrf.mxu0
        %v2850 = vadd.f32 %v1525, %v2849
        %v2851 = vpop.f32.mrf.mxu0
        %v2852 = vadd.f32 %v1525, %v2851
        %2853 = vmatprep.mubr.f32.mxu0 0.0
        %2854 = vmatmul.mubr.f32.gmra.mxu0 %v1597
        %v2855 = vpop.f32.mrf.mxu0
        %v2856 = vadd.f32 %v1530, %v2855
        %v2857 = vpop.f32.mrf.mxu0
        %v2858 = vadd.f32 %v1530, %v2857
        %2859 = vmatprep.mubr.f32.mxu0 0.0
        %2860 = vmatmul.mubr.f32.gmra.mxu0 %v1600
        %v2861 = vpop.f32.mrf.mxu0
        %v2862 = vadd.f32 %v1535, %v2861
        %v2863 = vpop.f32.mrf.mxu0
        %v2864 = vadd.f32 %v1535, %v2863
        %2865 = vmatprep.mubr.f32.mxu0 0.0
        %2866 = vmatmul.mubr.f32.gmra.mxu0 %v1603
        %v2867 = vpop.f32.mrf.mxu0
        %v2868 = vadd.f32 %v1540, %v2867
        %v2869 = vpop.f32.mrf.mxu0
        %v2870 = vadd.f32 %v1540, %v2869
        %2871 = vmatprep.mubr.f32.mxu0 0.0
        %2872 = vmatmul.mubr.f32.gmra.mxu0 %v1606
        %v2873 = vpop.f32.mrf.mxu0
        %v2874 = vadd.f32 %v1545, %v2873
        %v2875 = vpop.f32.mrf.mxu0
        %v2876 = vadd.f32 %v1545, %v2875
        %2877 = vmatprep.mubr.f32.mxu0 0.0
        %2878 = vmatmul.mubr.f32.gmra.mxu0 %v1609
        %v2879 = vpop.f32.mrf.mxu0
        %v2880 = vadd.f32 %v1550, %v2879
        %v2881 = vpop.f32.mrf.mxu0
        %v2882 = vadd.f32 %v1550, %v2881
        %2883 = vmatprep.mubr.f32.mxu0 0.0
        %2884 = vmatmul.mubr.f32.gmra.mxu0 %v1612
        %v2885 = vpop.f32.mrf.mxu0
        %v2886 = vadd.f32 %v1555, %v2885
        %v2887 = vpop.f32.mrf.mxu0
        %v2888 = vadd.f32 %v1555, %v2887
        %2889 = vmatprep.mubr.f32.mxu0 0.0
        %2890 = vmatmul.mubr.f32.gmra.mxu0 %v1615
        %v2891 = vpop.f32.mrf.mxu0
        %v2892 = vadd.f32 %v1560, %v2891
        %v2893 = vpop.f32.mrf.mxu0
        %v2894 = vadd.f32 %v1560, %v2893
        %2895 = vmatprep.mubr.f32.mxu0 0.0
        %2896 = vmatmul.mubr.f32.gmra.mxu0 %v1618
        %v2897 = vpop.f32.mrf.mxu0
        %v2898 = vadd.f32 %v1565, %v2897
        %v2899 = vpop.f32.mrf.mxu0
        %v2900 = vadd.f32 %v1565, %v2899
        %2901 = vmatprep.mubr.f32.mxu0 0.0
        %2902 = vmatmul.mubr.f32.gmra.mxu0 %v1621
        %v2903 = vpop.f32.mrf.mxu0
        %v2904 = vadd.f32 %v1570, %v2903
        %v2905 = vpop.f32.mrf.mxu0
        %v2906 = vadd.f32 %v1570, %v2905
        %2907 = vmatprep.mubr.f32.mxu0 0.0
        %2908 = vmatmul.mubr.f32.gmra.mxu0 %v1624
        %v2909 = vpop.f32.mrf.mxu0
        %v2910 = vadd.f32 %v1575, %v2909
        %v2911 = vpop.f32.mrf.mxu0
        %v2912 = vadd.f32 %v1575, %v2911
        %2913 = vdwg.mxu0
        %v2914 = vmax.f32 %v1693, 0.0
        %v2915 = vmax.f32 %v1695, 0.0
        %v2916 = vmax.f32 %v1854, 0.0
        %v2917 = vmax.f32 %v1856, 0.0
        %v2918 = vmax.f32 %v2015, 0.0
        %v2919 = vmax.f32 %v2017, 0.0
        %v2920 = vmax.f32 %v2176, 0.0
        %v2921 = vmax.f32 %v2178, 0.0
        %v2922 = vmax.f32 %v2337, 0.0
        %v2923 = vmax.f32 %v2339, 0.0
        %v2924 = vmax.f32 %v2498, 0.0
        %v2925 = vmax.f32 %v2500, 0.0
        %v2926 = vmax.f32 %v2659, 0.0
        %v2927 = vmax.f32 %v2661, 0.0
        %v2928 = vmax.f32 %v2820, 0.0
        %v2929 = vmax.f32 %v2822, 0.0
        %v2930 = vmax.f32 %v1699, 0.0
        %v2931 = vmax.f32 %v1701, 0.0
        %v2932 = vmax.f32 %v1860, 0.0
        %v2933 = vmax.f32 %v1862, 0.0
        %v2934 = vmax.f32 %v2021, 0.0
        %v2935 = vmax.f32 %v2023, 0.0
        %v2936 = vmax.f32 %v2182, 0.0
        %v2937 = vmax.f32 %v2184, 0.0
        %v2938 = vmax.f32 %v2343, 0.0
        %v2939 = vmax.f32 %v2345, 0.0
        %v2940 = vmax.f32 %v2504, 0.0
        %v2941 = vmax.f32 %v2506, 0.0
        %v2942 = vmax.f32 %v2665, 0.0
        %v2943 = vmax.f32 %v2667, 0.0
        %v2944 = vmax.f32 %v2826, 0.0
        %v2945 = vmax.f32 %v2828, 0.0
        %v2946 = vmax.f32 %v1705, 0.0
        %v2947 = vmax.f32 %v1707, 0.0
        %v2948 = vmax.f32 %v1866, 0.0
        %v2949 = vmax.f32 %v1868, 0.0
        %v2950 = vmax.f32 %v2027, 0.0
        %v2951 = vmax.f32 %v2029, 0.0
        %v2952 = vmax.f32 %v2188, 0.0
        %v2953 = vmax.f32 %v2190, 0.0
        %v2954 = vmax.f32 %v2349, 0.0
        %v2955 = vmax.f32 %v2351, 0.0
        %v2956 = vmax.f32 %v2510, 0.0
        %v2957 = vmax.f32 %v2512, 0.0
        %v2958 = vmax.f32 %v2671, 0.0
        %v2959 = vmax.f32 %v2673, 0.0
        %v2960 = vmax.f32 %v2832, 0.0
        %v2961 = vmax.f32 %v2834, 0.0
        %v2962 = vmax.f32 %v1711, 0.0
        %v2963 = vmax.f32 %v1713, 0.0
        %v2964 = vmax.f32 %v1872, 0.0
        %v2965 = vmax.f32 %v1874, 0.0
        %v2966 = vmax.f32 %v2033, 0.0
        %v2967 = vmax.f32 %v2035, 0.0
        %v2968 = vmax.f32 %v2194, 0.0
        %v2969 = vmax.f32 %v2196, 0.0
        %v2970 = vmax.f32 %v2355, 0.0
        %v2971 = vmax.f32 %v2357, 0.0
        %v2972 = vmax.f32 %v2516, 0.0
        %v2973 = vmax.f32 %v2518, 0.0
        %v2974 = vmax.f32 %v2677, 0.0
        %v2975 = vmax.f32 %v2679, 0.0
        %v2976 = vmax.f32 %v2838, 0.0
        %v2977 = vmax.f32 %v2840, 0.0
        %v2978 = vmax.f32 %v1717, 0.0
        %v2979 = vmax.f32 %v1719, 0.0
        %v2980 = vmax.f32 %v1878, 0.0
        %v2981 = vmax.f32 %v1880, 0.0
        %v2982 = vmax.f32 %v2039, 0.0
        %v2983 = vmax.f32 %v2041, 0.0
        %v2984 = vmax.f32 %v2200, 0.0
        %v2985 = vmax.f32 %v2202, 0.0
        %v2986 = vmax.f32 %v2361, 0.0
        %v2987 = vmax.f32 %v2363, 0.0
        %v2988 = vmax.f32 %v2522, 0.0
        %v2989 = vmax.f32 %v2524, 0.0
        %v2990 = vmax.f32 %v2683, 0.0
        %v2991 = vmax.f32 %v2685, 0.0
        %v2992 = vmax.f32 %v2844, 0.0
        %v2993 = vmax.f32 %v2846, 0.0
        %v2994 = vmax.f32 %v1723, 0.0
        %v2995 = vmax.f32 %v1725, 0.0
        %v2996 = vmax.f32 %v1884, 0.0
        %v2997 = vmax.f32 %v1886, 0.0
        %v2998 = vmax.f32 %v2045, 0.0
        %v2999 = vmax.f32 %v2047, 0.0
        %v3000 = vmax.f32 %v2206, 0.0
        %v3001 = vmax.f32 %v2208, 0.0
        %v3002 = vmax.f32 %v2367, 0.0
        %v3003 = vmax.f32 %v2369, 0.0
        %v3004 = vmax.f32 %v2528, 0.0
        %v3005 = vmax.f32 %v2530, 0.0
        %v3006 = vmax.f32 %v2689, 0.0
        %v3007 = vmax.f32 %v2691, 0.0
        %v3008 = vmax.f32 %v2850, 0.0
        %v3009 = vmax.f32 %v2852, 0.0
        %v3010 = vmax.f32 %v1729, 0.0
        %v3011 = vmax.f32 %v1731, 0.0
        %v3012 = vmax.f32 %v1890, 0.0
        %v3013 = vmax.f32 %v1892, 0.0
        %v3014 = vmax.f32 %v2051, 0.0
        %v3015 = vmax.f32 %v2053, 0.0
        %v3016 = vmax.f32 %v2212, 0.0
        %v3017 = vmax.f32 %v2214, 0.0
        %v3018 = vmax.f32 %v2373, 0.0
        %v3019 = vmax.f32 %v2375, 0.0
        %v3020 = vmax.f32 %v2534, 0.0
        %v3021 = vmax.f32 %v2536, 0.0
        %v3022 = vmax.f32 %v2695, 0.0
        %v3023 = vmax.f32 %v2697, 0.0
        %v3024 = vmax.f32 %v2856, 0.0
        %v3025 = vmax.f32 %v2858, 0.0
        %v3026 = vmax.f32 %v1735, 0.0
        %v3027 = vmax.f32 %v1737, 0.0
        %v3028 = vmax.f32 %v1896, 0.0
        %v3029 = vmax.f32 %v1898, 0.0
        %v3030 = vmax.f32 %v2057, 0.0
        %v3031 = vmax.f32 %v2059, 0.0
        %v3032 = vmax.f32 %v2218, 0.0
        %v3033 = vmax.f32 %v2220, 0.0
        %v3034 = vmax.f32 %v2379, 0.0
        %v3035 = vmax.f32 %v2381, 0.0
        %v3036 = vmax.f32 %v2540, 0.0
        %v3037 = vmax.f32 %v2542, 0.0
        %v3038 = vmax.f32 %v2701, 0.0
        %v3039 = vmax.f32 %v2703, 0.0
        %v3040 = vmax.f32 %v2862, 0.0
        %v3041 = vmax.f32 %v2864, 0.0
        %v3042 = vmax.f32 %v1741, 0.0
        %v3043 = vmax.f32 %v1743, 0.0
        %v3044 = vmax.f32 %v1902, 0.0
        %v3045 = vmax.f32 %v1904, 0.0
        %v3046 = vmax.f32 %v2063, 0.0
        %v3047 = vmax.f32 %v2065, 0.0
        %v3048 = vmax.f32 %v2224, 0.0
        %v3049 = vmax.f32 %v2226, 0.0
        %v3050 = vmax.f32 %v2385, 0.0
        %v3051 = vmax.f32 %v2387, 0.0
        %v3052 = vmax.f32 %v2546, 0.0
        %v3053 = vmax.f32 %v2548, 0.0
        %v3054 = vmax.f32 %v2707, 0.0
        %v3055 = vmax.f32 %v2709, 0.0
        %v3056 = vmax.f32 %v2868, 0.0
        %v3057 = vmax.f32 %v2870, 0.0
        %v3058 = vmax.f32 %v1747, 0.0
        %v3059 = vmax.f32 %v1749, 0.0
        %v3060 = vmax.f32 %v1908, 0.0
        %v3061 = vmax.f32 %v1910, 0.0
        %v3062 = vmax.f32 %v2069, 0.0
        %v3063 = vmax.f32 %v2071, 0.0
        %v3064 = vmax.f32 %v2230, 0.0
        %v3065 = vmax.f32 %v2232, 0.0
        %v3066 = vmax.f32 %v2391, 0.0
        %v3067 = vmax.f32 %v2393, 0.0
        %v3068 = vmax.f32 %v2552, 0.0
        %v3069 = vmax.f32 %v2554, 0.0
        %v3070 = vmax.f32 %v2713, 0.0
        %v3071 = vmax.f32 %v2715, 0.0
        %v3072 = vmax.f32 %v2874, 0.0
        %v3073 = vmax.f32 %v2876, 0.0
        %v3074 = vmax.f32 %v1753, 0.0
        %v3075 = vmax.f32 %v1755, 0.0
        %v3076 = vmax.f32 %v1914, 0.0
        %v3077 = vmax.f32 %v1916, 0.0
        %v3078 = vmax.f32 %v2075, 0.0
        %v3079 = vmax.f32 %v2077, 0.0
        %v3080 = vmax.f32 %v2236, 0.0
        %v3081 = vmax.f32 %v2238, 0.0
        %v3082 = vmax.f32 %v2397, 0.0
        %v3083 = vmax.f32 %v2399, 0.0
        %v3084 = vmax.f32 %v2558, 0.0
        %v3085 = vmax.f32 %v2560, 0.0
        %v3086 = vmax.f32 %v2719, 0.0
        %v3087 = vmax.f32 %v2721, 0.0
        %v3088 = vmax.f32 %v2880, 0.0
        %v3089 = vmax.f32 %v2882, 0.0
        %v3090 = vmax.f32 %v1759, 0.0
        %v3091 = vmax.f32 %v1761, 0.0
        %v3092 = vmax.f32 %v1920, 0.0
        %v3093 = vmax.f32 %v1922, 0.0
        %v3094 = vmax.f32 %v2081, 0.0
        %v3095 = vmax.f32 %v2083, 0.0
        %v3096 = vmax.f32 %v2242, 0.0
        %v3097 = vmax.f32 %v2244, 0.0
        %v3098 = vmax.f32 %v2403, 0.0
        %v3099 = vmax.f32 %v2405, 0.0
        %v3100 = vmax.f32 %v2564, 0.0
        %v3101 = vmax.f32 %v2566, 0.0
        %v3102 = vmax.f32 %v2725, 0.0
        %v3103 = vmax.f32 %v2727, 0.0
        %v3104 = vmax.f32 %v2886, 0.0
        %v3105 = vmax.f32 %v2888, 0.0
        %v3106 = vmax.f32 %v1765, 0.0
        %v3107 = vmax.f32 %v1767, 0.0
        %v3108 = vmax.f32 %v1926, 0.0
        %v3109 = vmax.f32 %v1928, 0.0
        %v3110 = vmax.f32 %v2087, 0.0
        %v3111 = vmax.f32 %v2089, 0.0
        %v3112 = vmax.f32 %v2248, 0.0
        %v3113 = vmax.f32 %v2250, 0.0
        %v3114 = vmax.f32 %v2409, 0.0
        %v3115 = vmax.f32 %v2411, 0.0
        %v3116 = vmax.f32 %v2570, 0.0
        %v3117 = vmax.f32 %v2572, 0.0
        %v3118 = vmax.f32 %v2731, 0.0
        %v3119 = vmax.f32 %v2733, 0.0
        %v3120 = vmax.f32 %v2892, 0.0
        %v3121 = vmax.f32 %v2894, 0.0
        %v3122 = vmax.f32 %v1771, 0.0
        %v3123 = vmax.f32 %v1773, 0.0
        %v3124 = vmax.f32 %v1932, 0.0
        %v3125 = vmax.f32 %v1934, 0.0
        %v3126 = vmax.f32 %v2093, 0.0
        %v3127 = vmax.f32 %v2095, 0.0
        %v3128 = vmax.f32 %v2254, 0.0
        %v3129 = vmax.f32 %v2256, 0.0
        %v3130 = vmax.f32 %v2415, 0.0
        %v3131 = vmax.f32 %v2417, 0.0
        %v3132 = vmax.f32 %v2576, 0.0
        %v3133 = vmax.f32 %v2578, 0.0
        %v3134 = vmax.f32 %v2737, 0.0
        %v3135 = vmax.f32 %v2739, 0.0
        %v3136 = vmax.f32 %v2898, 0.0
        %v3137 = vmax.f32 %v2900, 0.0
        %v3138 = vmax.f32 %v1777, 0.0
        %v3139 = vmax.f32 %v1779, 0.0
        %v3140 = vmax.f32 %v1938, 0.0
        %v3141 = vmax.f32 %v1940, 0.0
        %v3142 = vmax.f32 %v2099, 0.0
        %v3143 = vmax.f32 %v2101, 0.0
        %v3144 = vmax.f32 %v2260, 0.0
        %v3145 = vmax.f32 %v2262, 0.0
        %v3146 = vmax.f32 %v2421, 0.0
        %v3147 = vmax.f32 %v2423, 0.0
        %v3148 = vmax.f32 %v2582, 0.0
        %v3149 = vmax.f32 %v2584, 0.0
        %v3150 = vmax.f32 %v2743, 0.0
        %v3151 = vmax.f32 %v2745, 0.0
        %v3152 = vmax.f32 %v2904, 0.0
        %v3153 = vmax.f32 %v2906, 0.0
        %v3154 = vmax.f32 %v1783, 0.0
        %v3155 = vmax.f32 %v1785, 0.0
        %v3156 = vmax.f32 %v1944, 0.0
        %v3157 = vmax.f32 %v1946, 0.0
        %v3158 = vmax.f32 %v2105, 0.0
        %v3159 = vmax.f32 %v2107, 0.0
        %v3160 = vmax.f32 %v2266, 0.0
        %v3161 = vmax.f32 %v2268, 0.0
        %v3162 = vmax.f32 %v2427, 0.0
        %v3163 = vmax.f32 %v2429, 0.0
        %v3164 = vmax.f32 %v2588, 0.0
        %v3165 = vmax.f32 %v2590, 0.0
        %v3166 = vmax.f32 %v2749, 0.0
        %v3167 = vmax.f32 %v2751, 0.0
        %v3168 = vmax.f32 %v2910, 0.0
        %v3169 = vmax.f32 %v2912, 0.0
        %v3170 = vld [vmem:[%s5] sm:$0xff]
        %v3171 = vld [vmem:[%s5 + $0x8] sm:$0xff]
        %v3172 = vld [vmem:[%s5 + $0x10] sm:$0xff]
        %v3173 = vld [vmem:[%s5 + $0x18] sm:$0xff]
        %v3174 = vld [vmem:[%s5 + $0x20] sm:$0xff]
        %v3175 = vld [vmem:[%s5 + $0x28] sm:$0xff]
        %v3176 = vld [vmem:[%s5 + $0x30] sm:$0xff]
        %v3177 = vld [vmem:[%s5 + $0x38] sm:$0xff]
        %v3178 = vld [vmem:[%s6] sm:$0xff]
        %v3179 = vld [vmem:[%s6 + $0x8] sm:$0xff]
        %v3180 = vld [vmem:[%s6 + $0x10] sm:$0xff]
        %v3181 = vld [vmem:[%s6 + $0x18] sm:$0xff]
        %v3182 = vld [vmem:[%s6 + $0x20] sm:$0xff]
        %v3183 = vld [vmem:[%s6 + $0x28] sm:$0xff]
        %v3184 = vld [vmem:[%s6 + $0x30] sm:$0xff]
        %v3185 = vld [vmem:[%s6 + $0x38] sm:$0xff]
        %3187 = vset.pattern.permute.xlu0 0
        %3188 = vperm.xlu0 %3187, %v3178
        %v3189 = vpop.permute.xlu0 %3188
        %3192 = vset.pattern.permute.xlu0 0
        %3193 = vperm.xlu0 %3192, %v3179
        %v3194 = vpop.permute.xlu0 %3193
        %3197 = vset.pattern.permute.xlu0 0
        %3198 = vperm.xlu0 %3197, %v3180
        %v3199 = vpop.permute.xlu0 %3198
        %3202 = vset.pattern.permute.xlu0 0
        %3203 = vperm.xlu0 %3202, %v3181
        %v3204 = vpop.permute.xlu0 %3203
        %3207 = vset.pattern.permute.xlu0 0
        %3208 = vperm.xlu0 %3207, %v3182
        %v3209 = vpop.permute.xlu0 %3208
        %3212 = vset.pattern.permute.xlu0 0
        %3213 = vperm.xlu0 %3212, %v3183
        %v3214 = vpop.permute.xlu0 %3213
        %3217 = vset.pattern.permute.xlu0 0
        %3218 = vperm.xlu0 %3217, %v3184
        %v3219 = vpop.permute.xlu0 %3218
        %3222 = vset.pattern.permute.xlu0 0
        %3223 = vperm.xlu0 %3222, %v3185
        %v3224 = vpop.permute.xlu0 %3223
        %3226 = vmatprep.subr.mxu0 %v3155
        %3227 = vmatpush1.msra.mxu0 %v3154
        %3228 = vmatprep.subr.mxu0 %v3139
        %3229 = vmatpush1.msra.mxu0 %v3138
        %3230 = vmatprep.subr.mxu0 %v3123
        %3231 = vmatpush1.msra.mxu0 %v3122
        %3232 = vmatprep.subr.mxu0 %v3107
        %3233 = vmatpush1.msra.mxu0 %v3106
        %3234 = vmatprep.subr.mxu0 %v3091
        %3235 = vmatpush1.msra.mxu0 %v3090
        %3236 = vmatprep.subr.mxu0 %v3075
        %3237 = vmatpush1.msra.mxu0 %v3074
        %3238 = vmatprep.subr.mxu0 %v3059
        %3239 = vmatpush1.msra.mxu0 %v3058
        %3240 = vmatprep.subr.mxu0 %v3043
        %3241 = vmatpush1.msra.mxu0 %v3042
        %3242 = vmatprep.subr.mxu0 %v3027
        %3243 = vmatpush1.msra.mxu0 %v3026
        %3244 = vmatprep.subr.mxu0 %v3011
        %3245 = vmatpush1.msra.mxu0 %v3010
        %3246 = vmatprep.subr.mxu0 %v2995
        %3247 = vmatpush1.msra.mxu0 %v2994
        %3248 = vmatprep.subr.mxu0 %v2979
        %3249 = vmatpush1.msra.mxu0 %v2978
        %3250 = vmatprep.subr.mxu0 %v2963
        %3251 = vmatpush1.msra.mxu0 %v2962
        %3252 = vmatprep.subr.mxu0 %v2947
        %3253 = vmatpush1.msra.mxu0 %v2946
        %3254 = vmatprep.subr.mxu0 %v2931
        %3255 = vmatpush1.msra.mxu0 %v2930
        %3256 = vmatprep.subr.mxu0 %v2915
        %3257 = vmatpush1.msra.mxu0 %v2914
        %3258 = vmatprep.subr.mxu0 0.0
        %3259 = vmatpush2.msra.mxu0 0.0
        %3260 = vmatprep.subr.mxu0 0.0
        %3261 = vmatpush2.msra.mxu0 0.0
        %3262 = vmatprep.subr.mxu0 0.0
        %3263 = vmatpush2.msra.mxu0 0.0
        %3264 = vmatprep.subr.mxu0 0.0
        %3265 = vmatpush2.msra.mxu0 0.0
        %3266 = vmatprep.subr.mxu0 0.0
        %3267 = vmatpush2.msra.mxu0 0.0
        %3268 = vmatprep.subr.mxu0 0.0
        %3269 = vmatpush2.msra.mxu0 0.0
        %3270 = vmatprep.subr.mxu0 0.0
        %3271 = vmatpush2.msra.mxu0 0.0
        %3272 = vmatprep.subr.mxu0 0.0
        %3273 = vmatpush2.msra.mxu0 0.0
        %3274 = vmatprep.subr.mxu0 0.0
        %3275 = vmatpush2.msra.mxu0 0.0
        %3276 = vmatprep.subr.mxu0 0.0
        %3277 = vmatpush2.msra.mxu0 0.0
        %3278 = vmatprep.subr.mxu0 0.0
        %3279 = vmatpush2.msra.mxu0 0.0
        %3280 = vmatprep.subr.mxu0 0.0
        %3281 = vmatpush2.msra.mxu0 0.0
        %3282 = vmatprep.subr.mxu0 0.0
        %3283 = vmatpush2.msra.mxu0 0.0
        %3284 = vmatprep.subr.mxu0 0.0
        %3285 = vmatpush2.msra.mxu0 0.0
        %3286 = vmatprep.subr.mxu0 0.0
        %3287 = vmatpush2.msra.mxu0 0.0
        %3288 = vmatprep.subr.mxu0 0.0
        %3289 = vmatpush2.msra.mxu0 0.0
        %3290 = vmatprep.mubr.f32.mxu0 0.0
        %3291 = vmatmul.mubr.f32.gmra.mxu0 %v3170
        %v3292 = vpop.f32.mrf.mxu0
        %v3293 = vadd.f32 %v3189, %v3292
        %v3294 = vpop.f32.mrf.mxu0
        %v3295 = vadd.f32 %v3189, %v3294
        %3296 = vmatprep.mubr.f32.mxu0 0.0
        %3297 = vmatmul.mubr.f32.gmra.mxu0 %v3171
        %v3298 = vpop.f32.mrf.mxu0
        %v3299 = vadd.f32 %v3194, %v3298
        %v3300 = vpop.f32.mrf.mxu0
        %v3301 = vadd.f32 %v3194, %v3300
        %3302 = vmatprep.mubr.f32.mxu0 0.0
        %3303 = vmatmul.mubr.f32.gmra.mxu0 %v3172
        %v3304 = vpop.f32.mrf.mxu0
        %v3305 = vadd.f32 %v3199, %v3304
        %v3306 = vpop.f32.mrf.mxu0
        %v3307 = vadd.f32 %v3199, %v3306
        %3308 = vmatprep.mubr.f32.mxu0 0.0
        %3309 = vmatmul.mubr.f32.gmra.mxu0 %v3173
        %v3310 = vpop.f32.mrf.mxu0
        %v3311 = vadd.f32 %v3204, %v3310
        %v3312 = vpop.f32.mrf.mxu0
        %v3313 = vadd.f32 %v3204, %v3312
        %3314 = vmatprep.mubr.f32.mxu0 0.0
        %3315 = vmatmul.mubr.f32.gmra.mxu0 %v3174
        %v3316 = vpop.f32.mrf.mxu0
        %v3317 = vadd.f32 %v3209, %v3316
        %v3318 = vpop.f32.mrf.mxu0
        %v3319 = vadd.f32 %v3209, %v3318
        %3320 = vmatprep.mubr.f32.mxu0 0.0
        %3321 = vmatmul.mubr.f32.gmra.mxu0 %v3175
        %v3322 = vpop.f32.mrf.mxu0
        %v3323 = vadd.f32 %v3214, %v3322
        %v3324 = vpop.f32.mrf.mxu0
        %v3325 = vadd.f32 %v3214, %v3324
        %3326 = vmatprep.mubr.f32.mxu0 0.0
        %3327 = vmatmul.mubr.f32.gmra.mxu0 %v3176
        %v3328 = vpop.f32.mrf.mxu0
        %v3329 = vadd.f32 %v3219, %v3328
        %v3330 = vpop.f32.mrf.mxu0
        %v3331 = vadd.f32 %v3219, %v3330
        %3332 = vmatprep.mubr.f32.mxu0 0.0
        %3333 = vmatmul.mubr.f32.gmra.mxu0 %v3177
        %v3334 = vpop.f32.mrf.mxu0
        %v3335 = vadd.f32 %v3224, %v3334
        %v3336 = vpop.f32.mrf.mxu0
        %v3337 = vadd.f32 %v3224, %v3336
        %3338 = vdwg.mxu0
        %3339 = vmatprep.subr.mxu0 %v3157
        %3340 = vmatpush1.msra.mxu0 %v3156
        %3341 = vmatprep.subr.mxu0 %v3141
        %3342 = vmatpush1.msra.mxu0 %v3140
        %3343 = vmatprep.subr.mxu0 %v3125
        %3344 = vmatpush1.msra.mxu0 %v3124
        %3345 = vmatprep.subr.mxu0 %v3109
        %3346 = vmatpush1.msra.mxu0 %v3108
        %3347 = vmatprep.subr.mxu0 %v3093
        %3348 = vmatpush1.msra.mxu0 %v3092
        %3349 = vmatprep.subr.mxu0 %v3077
        %3350 = vmatpush1.msra.mxu0 %v3076
        %3351 = vmatprep.subr.mxu0 %v3061
        %3352 = vmatpush1.msra.mxu0 %v3060
        %3353 = vmatprep.subr.mxu0 %v3045
        %3354 = vmatpush1.msra.mxu0 %v3044
        %3355 = vmatprep.subr.mxu0 %v3029
        %3356 = vmatpush1.msra.mxu0 %v3028
        %3357 = vmatprep.subr.mxu0 %v3013
        %3358 = vmatpush1.msra.mxu0 %v3012
        %3359 = vmatprep.subr.mxu0 %v2997
        %3360 = vmatpush1.msra.mxu0 %v2996
        %3361 = vmatprep.subr.mxu0 %v2981
        %3362 = vmatpush1.msra.mxu0 %v2980
        %3363 = vmatprep.subr.mxu0 %v2965
        %3364 = vmatpush1.msra.mxu0 %v2964
        %3365 = vmatprep.subr.mxu0 %v2949
        %3366 = vmatpush1.msra.mxu0 %v2948
        %3367 = vmatprep.subr.mxu0 %v2933
        %3368 = vmatpush1.msra.mxu0 %v2932
        %3369 = vmatprep.subr.mxu0 %v2917
        %3370 = vmatpush1.msra.mxu0 %v2916
        %3371 = vmatprep.subr.mxu0 0.0
        %3372 = vmatpush2.msra.mxu0 0.0
        %3373 = vmatprep.subr.mxu0 0.0
        %3374 = vmatpush2.msra.mxu0 0.0
        %3375 = vmatprep.subr.mxu0 0.0
        %3376 = vmatpush2.msra.mxu0 0.0
        %3377 = vmatprep.subr.mxu0 0.0
        %3378 = vmatpush2.msra.mxu0 0.0
        %3379 = vmatprep.subr.mxu0 0.0
        %3380 = vmatpush2.msra.mxu0 0.0
        %3381 = vmatprep.subr.mxu0 0.0
        %3382 = vmatpush2.msra.mxu0 0.0
        %3383 = vmatprep.subr.mxu0 0.0
        %3384 = vmatpush2.msra.mxu0 0.0
        %3385 = vmatprep.subr.mxu0 0.0
        %3386 = vmatpush2.msra.mxu0 0.0
        %3387 = vmatprep.subr.mxu0 0.0
        %3388 = vmatpush2.msra.mxu0 0.0
        %3389 = vmatprep.subr.mxu0 0.0
        %3390 = vmatpush2.msra.mxu0 0.0
        %3391 = vmatprep.subr.mxu0 0.0
        %3392 = vmatpush2.msra.mxu0 0.0
        %3393 = vmatprep.subr.mxu0 0.0
        %3394 = vmatpush2.msra.mxu0 0.0
        %3395 = vmatprep.subr.mxu0 0.0
        %3396 = vmatpush2.msra.mxu0 0.0
        %3397 = vmatprep.subr.mxu0 0.0
        %3398 = vmatpush2.msra.mxu0 0.0
        %3399 = vmatprep.subr.mxu0 0.0
        %3400 = vmatpush2.msra.mxu0 0.0
        %3401 = vmatprep.subr.mxu0 0.0
        %3402 = vmatpush2.msra.mxu0 0.0
        %3403 = vmatprep.mubr.f32.mxu0 0.0
        %3404 = vmatmul.mubr.f32.gmra.mxu0 %v3170
        %v3405 = vpop.f32.mrf.mxu0
        %v3406 = vadd.f32 %v3189, %v3405
        %v3407 = vpop.f32.mrf.mxu0
        %v3408 = vadd.f32 %v3189, %v3407
        %3409 = vmatprep.mubr.f32.mxu0 0.0
        %3410 = vmatmul.mubr.f32.gmra.mxu0 %v3171
        %v3411 = vpop.f32.mrf.mxu0
        %v3412 = vadd.f32 %v3194, %v3411
        %v3413 = vpop.f32.mrf.mxu0
        %v3414 = vadd.f32 %v3194, %v3413
        %3415 = vmatprep.mubr.f32.mxu0 0.0
        %3416 = vmatmul.mubr.f32.gmra.mxu0 %v3172
        %v3417 = vpop.f32.mrf.mxu0
        %v3418 = vadd.f32 %v3199, %v3417
        %v3419 = vpop.f32.mrf.mxu0
        %v3420 = vadd.f32 %v3199, %v3419
        %3421 = vmatprep.mubr.f32.mxu0 0.0
        %3422 = vmatmul.mubr.f32.gmra.mxu0 %v3173
        %v3423 = vpop.f32.mrf.mxu0
        %v3424 = vadd.f32 %v3204, %v3423
        %v3425 = vpop.f32.mrf.mxu0
        %v3426 = vadd.f32 %v3204, %v3425
        %3427 = vmatprep.mubr.f32.mxu0 0.0
        %3428 = vmatmul.mubr.f32.gmra.mxu0 %v3174
        %v3429 = vpop.f32.mrf.mxu0
        %v3430 = vadd.f32 %v3209, %v3429
        %v3431 = vpop.f32.mrf.mxu0
        %v3432 = vadd.f32 %v3209, %v3431
        %3433 = vmatprep.mubr.f32.mxu0 0.0
        %3434 = vmatmul.mubr.f32.gmra.mxu0 %v3175
        %v3435 = vpop.f32.mrf.mxu0
        %v3436 = vadd.f32 %v3214, %v3435
        %v3437 = vpop.f32.mrf.mxu0
        %v3438 = vadd.f32 %v3214, %v3437
        %3439 = vmatprep.mubr.f32.mxu0 0.0
        %3440 = vmatmul.mubr.f32.gmra.mxu0 %v3176
        %v3441 = vpop.f32.mrf.mxu0
        %v3442 = vadd.f32 %v3219, %v3441
        %v3443 = vpop.f32.mrf.mxu0
        %v3444 = vadd.f32 %v3219, %v3443
        %3445 = vmatprep.mubr.f32.mxu0 0.0
        %3446 = vmatmul.mubr.f32.gmra.mxu0 %v3177
        %v3447 = vpop.f32.mrf.mxu0
        %v3448 = vadd.f32 %v3224, %v3447
        %v3449 = vpop.f32.mrf.mxu0
        %v3450 = vadd.f32 %v3224, %v3449
        %3451 = vdwg.mxu0
        %3452 = vmatprep.subr.mxu0 %v3159
        %3453 = vmatpush1.msra.mxu0 %v3158
        %3454 = vmatprep.subr.mxu0 %v3143
        %3455 = vmatpush1.msra.mxu0 %v3142
        %3456 = vmatprep.subr.mxu0 %v3127
        %3457 = vmatpush1.msra.mxu0 %v3126
        %3458 = vmatprep.subr.mxu0 %v3111
        %3459 = vmatpush1.msra.mxu0 %v3110
        %3460 = vmatprep.subr.mxu0 %v3095
        %3461 = vmatpush1.msra.mxu0 %v3094
        %3462 = vmatprep.subr.mxu0 %v3079
        %3463 = vmatpush1.msra.mxu0 %v3078
        %3464 = vmatprep.subr.mxu0 %v3063
        %3465 = vmatpush1.msra.mxu0 %v3062
        %3466 = vmatprep.subr.mxu0 %v3047
        %3467 = vmatpush1.msra.mxu0 %v3046
        %3468 = vmatprep.subr.mxu0 %v3031
        %3469 = vmatpush1.msra.mxu0 %v3030
        %3470 = vmatprep.subr.mxu0 %v3015
        %3471 = vmatpush1.msra.mxu0 %v3014
        %3472 = vmatprep.subr.mxu0 %v2999
        %3473 = vmatpush1.msra.mxu0 %v2998
        %3474 = vmatprep.subr.mxu0 %v2983
        %3475 = vmatpush1.msra.mxu0 %v2982
        %3476 = vmatprep.subr.mxu0 %v2967
        %3477 = vmatpush1.msra.mxu0 %v2966
        %3478 = vmatprep.subr.mxu0 %v2951
        %3479 = vmatpush1.msra.mxu0 %v2950
        %3480 = vmatprep.subr.mxu0 %v2935
        %3481 = vmatpush1.msra.mxu0 %v2934
        %3482 = vmatprep.subr.mxu0 %v2919
        %3483 = vmatpush1.msra.mxu0 %v2918
        %3484 = vmatprep.subr.mxu0 0.0
        %3485 = vmatpush2.msra.mxu0 0.0
        %3486 = vmatprep.subr.mxu0 0.0
        %3487 = vmatpush2.msra.mxu0 0.0
        %3488 = vmatprep.subr.mxu0 0.0
        %3489 = vmatpush2.msra.mxu0 0.0
        %3490 = vmatprep.subr.mxu0 0.0
        %3491 = vmatpush2.msra.mxu0 0.0
        %3492 = vmatprep.subr.mxu0 0.0
        %3493 = vmatpush2.msra.mxu0 0.0
        %3494 = vmatprep.subr.mxu0 0.0
        %3495 = vmatpush2.msra.mxu0 0.0
        %3496 = vmatprep.subr.mxu0 0.0
        %3497 = vmatpush2.msra.mxu0 0.0
        %3498 = vmatprep.subr.mxu0 0.0
        %3499 = vmatpush2.msra.mxu0 0.0
        %3500 = vmatprep.subr.mxu0 0.0
        %3501 = vmatpush2.msra.mxu0 0.0
        %3502 = vmatprep.subr.mxu0 0.0
        %3503 = vmatpush2.msra.mxu0 0.0
        %3504 = vmatprep.subr.mxu0 0.0
        %3505 = vmatpush2.msra.mxu0 0.0
        %3506 = vmatprep.subr.mxu0 0.0
        %3507 = vmatpush2.msra.mxu0 0.0
        %3508 = vmatprep.subr.mxu0 0.0
        %3509 = vmatpush2.msra.mxu0 0.0
        %3510 = vmatprep.subr.mxu0 0.0
        %3511 = vmatpush2.msra.mxu0 0.0
        %3512 = vmatprep.subr.mxu0 0.0
        %3513 = vmatpush2.msra.mxu0 0.0
        %3514 = vmatprep.subr.mxu0 0.0
        %3515 = vmatpush2.msra.mxu0 0.0
        %3516 = vmatprep.mubr.f32.mxu0 0.0
        %3517 = vmatmul.mubr.f32.gmra.mxu0 %v3170
        %v3518 = vpop.f32.mrf.mxu0
        %v3519 = vadd.f32 %v3189, %v3518
        %v3520 = vpop.f32.mrf.mxu0
        %v3521 = vadd.f32 %v3189, %v3520
        %3522 = vmatprep.mubr.f32.mxu0 0.0
        %3523 = vmatmul.mubr.f32.gmra.mxu0 %v3171
        %v3524 = vpop.f32.mrf.mxu0
        %v3525 = vadd.f32 %v3194, %v3524
        %v3526 = vpop.f32.mrf.mxu0
        %v3527 = vadd.f32 %v3194, %v3526
        %3528 = vmatprep.mubr.f32.mxu0 0.0
        %3529 = vmatmul.mubr.f32.gmra.mxu0 %v3172
        %v3530 = vpop.f32.mrf.mxu0
        %v3531 = vadd.f32 %v3199, %v3530
        %v3532 = vpop.f32.mrf.mxu0
        %v3533 = vadd.f32 %v3199, %v3532
        %3534 = vmatprep.mubr.f32.mxu0 0.0
        %3535 = vmatmul.mubr.f32.gmra.mxu0 %v3173
        %v3536 = vpop.f32.mrf.mxu0
        %v3537 = vadd.f32 %v3204, %v3536
        %v3538 = vpop.f32.mrf.mxu0
        %v3539 = vadd.f32 %v3204, %v3538
        %3540 = vmatprep.mubr.f32.mxu0 0.0
        %3541 = vmatmul.mubr.f32.gmra.mxu0 %v3174
        %v3542 = vpop.f32.mrf.mxu0
        %v3543 = vadd.f32 %v3209, %v3542
        %v3544 = vpop.f32.mrf.mxu0
        %v3545 = vadd.f32 %v3209, %v3544
        %3546 = vmatprep.mubr.f32.mxu0 0.0
        %3547 = vmatmul.mubr.f32.gmra.mxu0 %v3175
        %v3548 = vpop.f32.mrf.mxu0
        %v3549 = vadd.f32 %v3214, %v3548
        %v3550 = vpop.f32.mrf.mxu0
        %v3551 = vadd.f32 %v3214, %v3550
        %3552 = vmatprep.mubr.f32.mxu0 0.0
        %3553 = vmatmul.mubr.f32.gmra.mxu0 %v3176
        %v3554 = vpop.f32.mrf.mxu0
        %v3555 = vadd.f32 %v3219, %v3554
        %v3556 = vpop.f32.mrf.mxu0
        %v3557 = vadd.f32 %v3219, %v3556
        %3558 = vmatprep.mubr.f32.mxu0 0.0
        %3559 = vmatmul.mubr.f32.gmra.mxu0 %v3177
        %v3560 = vpop.f32.mrf.mxu0
        %v3561 = vadd.f32 %v3224, %v3560
        %v3562 = vpop.f32.mrf.mxu0
        %v3563 = vadd.f32 %v3224, %v3562
        %3564 = vdwg.mxu0
        %3565 = vmatprep.subr.mxu0 %v3161
        %3566 = vmatpush1.msra.mxu0 %v3160
        %3567 = vmatprep.subr.mxu0 %v3145
        %3568 = vmatpush1.msra.mxu0 %v3144
        %3569 = vmatprep.subr.mxu0 %v3129
        %3570 = vmatpush1.msra.mxu0 %v3128
        %3571 = vmatprep.subr.mxu0 %v3113
        %3572 = vmatpush1.msra.mxu0 %v3112
        %3573 = vmatprep.subr.mxu0 %v3097
        %3574 = vmatpush1.msra.mxu0 %v3096
        %3575 = vmatprep.subr.mxu0 %v3081
        %3576 = vmatpush1.msra.mxu0 %v3080
        %3577 = vmatprep.subr.mxu0 %v3065
        %3578 = vmatpush1.msra.mxu0 %v3064
        %3579 = vmatprep.subr.mxu0 %v3049
        %3580 = vmatpush1.msra.mxu0 %v3048
        %3581 = vmatprep.subr.mxu0 %v3033
        %3582 = vmatpush1.msra.mxu0 %v3032
        %3583 = vmatprep.subr.mxu0 %v3017
        %3584 = vmatpush1.msra.mxu0 %v3016
        %3585 = vmatprep.subr.mxu0 %v3001
        %3586 = vmatpush1.msra.mxu0 %v3000
        %3587 = vmatprep.subr.mxu0 %v2985
        %3588 = vmatpush1.msra.mxu0 %v2984
        %3589 = vmatprep.subr.mxu0 %v2969
        %3590 = vmatpush1.msra.mxu0 %v2968
        %3591 = vmatprep.subr.mxu0 %v2953
        %3592 = vmatpush1.msra.mxu0 %v2952
        %3593 = vmatprep.subr.mxu0 %v2937
        %3594 = vmatpush1.msra.mxu0 %v2936
        %3595 = vmatprep.subr.mxu0 %v2921
        %3596 = vmatpush1.msra.mxu0 %v2920
        %3597 = vmatprep.subr.mxu0 0.0
        %3598 = vmatpush2.msra.mxu0 0.0
        %3599 = vmatprep.subr.mxu0 0.0
        %3600 = vmatpush2.msra.mxu0 0.0
        %3601 = vmatprep.subr.mxu0 0.0
        %3602 = vmatpush2.msra.mxu0 0.0
        %3603 = vmatprep.subr.mxu0 0.0
        %3604 = vmatpush2.msra.mxu0 0.0
        %3605 = vmatprep.subr.mxu0 0.0
        %3606 = vmatpush2.msra.mxu0 0.0
        %3607 = vmatprep.subr.mxu0 0.0
        %3608 = vmatpush2.msra.mxu0 0.0
        %3609 = vmatprep.subr.mxu0 0.0
        %3610 = vmatpush2.msra.mxu0 0.0
        %3611 = vmatprep.subr.mxu0 0.0
        %3612 = vmatpush2.msra.mxu0 0.0
        %3613 = vmatprep.subr.mxu0 0.0
        %3614 = vmatpush2.msra.mxu0 0.0
        %3615 = vmatprep.subr.mxu0 0.0
        %3616 = vmatpush2.msra.mxu0 0.0
        %3617 = vmatprep.subr.mxu0 0.0
        %3618 = vmatpush2.msra.mxu0 0.0
        %3619 = vmatprep.subr.mxu0 0.0
        %3620 = vmatpush2.msra.mxu0 0.0
        %3621 = vmatprep.subr.mxu0 0.0
        %3622 = vmatpush2.msra.mxu0 0.0
        %3623 = vmatprep.subr.mxu0 0.0
        %3624 = vmatpush2.msra.mxu0 0.0
        %3625 = vmatprep.subr.mxu0 0.0
        %3626 = vmatpush2.msra.mxu0 0.0
        %3627 = vmatprep.subr.mxu0 0.0
        %3628 = vmatpush2.msra.mxu0 0.0
        %3629 = vmatprep.mubr.f32.mxu0 0.0
        %3630 = vmatmul.mubr.f32.gmra.mxu0 %v3170
        %v3631 = vpop.f32.mrf.mxu0
        %v3632 = vadd.f32 %v3189, %v3631
        %v3633 = vpop.f32.mrf.mxu0
        %v3634 = vadd.f32 %v3189, %v3633
        %3635 = vmatprep.mubr.f32.mxu0 0.0
        %3636 = vmatmul.mubr.f32.gmra.mxu0 %v3171
        %v3637 = vpop.f32.mrf.mxu0
        %v3638 = vadd.f32 %v3194, %v3637
        %v3639 = vpop.f32.mrf.mxu0
        %v3640 = vadd.f32 %v3194, %v3639
        %3641 = vmatprep.mubr.f32.mxu0 0.0
        %3642 = vmatmul.mubr.f32.gmra.mxu0 %v3172
        %v3643 = vpop.f32.mrf.mxu0
        %v3644 = vadd.f32 %v3199, %v3643
        %v3645 = vpop.f32.mrf.mxu0
        %v3646 = vadd.f32 %v3199, %v3645
        %3647 = vmatprep.mubr.f32.mxu0 0.0
        %3648 = vmatmul.mubr.f32.gmra.mxu0 %v3173
        %v3649 = vpop.f32.mrf.mxu0
        %v3650 = vadd.f32 %v3204, %v3649
        %v3651 = vpop.f32.mrf.mxu0
        %v3652 = vadd.f32 %v3204, %v3651
        %3653 = vmatprep.mubr.f32.mxu0 0.0
        %3654 = vmatmul.mubr.f32.gmra.mxu0 %v3174
        %v3655 = vpop.f32.mrf.mxu0
        %v3656 = vadd.f32 %v3209, %v3655
        %v3657 = vpop.f32.mrf.mxu0
        %v3658 = vadd.f32 %v3209, %v3657
        %3659 = vmatprep.mubr.f32.mxu0 0.0
        %3660 = vmatmul.mubr.f32.gmra.mxu0 %v3175
        %v3661 = vpop.f32.mrf.mxu0
        %v3662 = vadd.f32 %v3214, %v3661
        %v3663 = vpop.f32.mrf.mxu0
        %v3664 = vadd.f32 %v3214, %v3663
        %3665 = vmatprep.mubr.f32.mxu0 0.0
        %3666 = vmatmul.mubr.f32.gmra.mxu0 %v3176
        %v3667 = vpop.f32.mrf.mxu0
        %v3668 = vadd.f32 %v3219, %v3667
        %v3669 = vpop.f32.mrf.mxu0
        %v3670 = vadd.f32 %v3219, %v3669
        %3671 = vmatprep.mubr.f32.mxu0 0.0
        %3672 = vmatmul.mubr.f32.gmra.mxu0 %v3177
        %v3673 = vpop.f32.mrf.mxu0
        %v3674 = vadd.f32 %v3224, %v3673
        %v3675 = vpop.f32.mrf.mxu0
        %v3676 = vadd.f32 %v3224, %v3675
        %3677 = vdwg.mxu0
        %3678 = vmatprep.subr.mxu0 %v3163
        %3679 = vmatpush1.msra.mxu0 %v3162
        %3680 = vmatprep.subr.mxu0 %v3147
        %3681 = vmatpush1.msra.mxu0 %v3146
        %3682 = vmatprep.subr.mxu0 %v3131
        %3683 = vmatpush1.msra.mxu0 %v3130
        %3684 = vmatprep.subr.mxu0 %v3115
        %3685 = vmatpush1.msra.mxu0 %v3114
        %3686 = vmatprep.subr.mxu0 %v3099
        %3687 = vmatpush1.msra.mxu0 %v3098
        %3688 = vmatprep.subr.mxu0 %v3083
        %3689 = vmatpush1.msra.mxu0 %v3082
        %3690 = vmatprep.subr.mxu0 %v3067
        %3691 = vmatpush1.msra.mxu0 %v3066
        %3692 = vmatprep.subr.mxu0 %v3051
        %3693 = vmatpush1.msra.mxu0 %v3050
        %3694 = vmatprep.subr.mxu0 %v3035
        %3695 = vmatpush1.msra.mxu0 %v3034
        %3696 = vmatprep.subr.mxu0 %v3019
        %3697 = vmatpush1.msra.mxu0 %v3018
        %3698 = vmatprep.subr.mxu0 %v3003
        %3699 = vmatpush1.msra.mxu0 %v3002
        %3700 = vmatprep.subr.mxu0 %v2987
        %3701 = vmatpush1.msra.mxu0 %v2986
        %3702 = vmatprep.subr.mxu0 %v2971
        %3703 = vmatpush1.msra.mxu0 %v2970
        %3704 = vmatprep.subr.mxu0 %v2955
        %3705 = vmatpush1.msra.mxu0 %v2954
        %3706 = vmatprep.subr.mxu0 %v2939
        %3707 = vmatpush1.msra.mxu0 %v2938
        %3708 = vmatprep.subr.mxu0 %v2923
        %3709 = vmatpush1.msra.mxu0 %v2922
        %3710 = vmatprep.subr.mxu0 0.0
        %3711 = vmatpush2.msra.mxu0 0.0
        %3712 = vmatprep.subr.mxu0 0.0
        %3713 = vmatpush2.msra.mxu0 0.0
        %3714 = vmatprep.subr.mxu0 0.0
        %3715 = vmatpush2.msra.mxu0 0.0
        %3716 = vmatprep.subr.mxu0 0.0
        %3717 = vmatpush2.msra.mxu0 0.0
        %3718 = vmatprep.subr.mxu0 0.0
        %3719 = vmatpush2.msra.mxu0 0.0
        %3720 = vmatprep.subr.mxu0 0.0
        %3721 = vmatpush2.msra.mxu0 0.0
        %3722 = vmatprep.subr.mxu0 0.0
        %3723 = vmatpush2.msra.mxu0 0.0
        %3724 = vmatprep.subr.mxu0 0.0
        %3725 = vmatpush2.msra.mxu0 0.0
        %3726 = vmatprep.subr.mxu0 0.0
        %3727 = vmatpush2.msra.mxu0 0.0
        %3728 = vmatprep.subr.mxu0 0.0
        %3729 = vmatpush2.msra.mxu0 0.0
        %3730 = vmatprep.subr.mxu0 0.0
        %3731 = vmatpush2.msra.mxu0 0.0
        %3732 = vmatprep.subr.mxu0 0.0
        %3733 = vmatpush2.msra.mxu0 0.0
        %3734 = vmatprep.subr.mxu0 0.0
        %3735 = vmatpush2.msra.mxu0 0.0
        %3736 = vmatprep.subr.mxu0 0.0
        %3737 = vmatpush2.msra.mxu0 0.0
        %3738 = vmatprep.subr.mxu0 0.0
        %3739 = vmatpush2.msra.mxu0 0.0
        %3740 = vmatprep.subr.mxu0 0.0
        %3741 = vmatpush2.msra.mxu0 0.0
        %3742 = vmatprep.mubr.f32.mxu0 0.0
        %3743 = vmatmul.mubr.f32.gmra.mxu0 %v3170
        %v3744 = vpop.f32.mrf.mxu0
        %v3745 = vadd.f32 %v3189, %v3744
        %v3746 = vpop.f32.mrf.mxu0
        %v3747 = vadd.f32 %v3189, %v3746
        %3748 = vmatprep.mubr.f32.mxu0 0.0
        %3749 = vmatmul.mubr.f32.gmra.mxu0 %v3171
        %v3750 = vpop.f32.mrf.mxu0
        %v3751 = vadd.f32 %v3194, %v3750
        %v3752 = vpop.f32.mrf.mxu0
        %v3753 = vadd.f32 %v3194, %v3752
        %3754 = vmatprep.mubr.f32.mxu0 0.0
        %3755 = vmatmul.mubr.f32.gmra.mxu0 %v3172
        %v3756 = vpop.f32.mrf.mxu0
        %v3757 = vadd.f32 %v3199, %v3756
        %v3758 = vpop.f32.mrf.mxu0
        %v3759 = vadd.f32 %v3199, %v3758
        %3760 = vmatprep.mubr.f32.mxu0 0.0
        %3761 = vmatmul.mubr.f32.gmra.mxu0 %v3173
        %v3762 = vpop.f32.mrf.mxu0
        %v3763 = vadd.f32 %v3204, %v3762
        %v3764 = vpop.f32.mrf.mxu0
        %v3765 = vadd.f32 %v3204, %v3764
        %3766 = vmatprep.mubr.f32.mxu0 0.0
        %3767 = vmatmul.mubr.f32.gmra.mxu0 %v3174
        %v3768 = vpop.f32.mrf.mxu0
        %v3769 = vadd.f32 %v3209, %v3768
        %v3770 = vpop.f32.mrf.mxu0
        %v3771 = vadd.f32 %v3209, %v3770
        %3772 = vmatprep.mubr.f32.mxu0 0.0
        %3773 = vmatmul.mubr.f32.gmra.mxu0 %v3175
        %v3774 = vpop.f32.mrf.mxu0
        %v3775 = vadd.f32 %v3214, %v3774
        %v3776 = vpop.f32.mrf.mxu0
        %v3777 = vadd.f32 %v3214, %v3776
        %3778 = vmatprep.mubr.f32.mxu0 0.0
        %3779 = vmatmul.mubr.f32.gmra.mxu0 %v3176
        %v3780 = vpop.f32.mrf.mxu0
        %v3781 = vadd.f32 %v3219, %v3780
        %v3782 = vpop.f32.mrf.mxu0
        %v3783 = vadd.f32 %v3219, %v3782
        %3784 = vmatprep.mubr.f32.mxu0 0.0
        %3785 = vmatmul.mubr.f32.gmra.mxu0 %v3177
        %v3786 = vpop.f32.mrf.mxu0
        %v3787 = vadd.f32 %v3224, %v3786
        %v3788 = vpop.f32.mrf.mxu0
        %v3789 = vadd.f32 %v3224, %v3788
        %3790 = vdwg.mxu0
        %3791 = vmatprep.subr.mxu0 %v3165
        %3792 = vmatpush1.msra.mxu0 %v3164
        %3793 = vmatprep.subr.mxu0 %v3149
        %3794 = vmatpush1.msra.mxu0 %v3148
        %3795 = vmatprep.subr.mxu0 %v3133
        %3796 = vmatpush1.msra.mxu0 %v3132
        %3797 = vmatprep.subr.mxu0 %v3117
        %3798 = vmatpush1.msra.mxu0 %v3116
        %3799 = vmatprep.subr.mxu0 %v3101
        %3800 = vmatpush1.msra.mxu0 %v3100
        %3801 = vmatprep.subr.mxu0 %v3085
        %3802 = vmatpush1.msra.mxu0 %v3084
        %3803 = vmatprep.subr.mxu0 %v3069
        %3804 = vmatpush1.msra.mxu0 %v3068
        %3805 = vmatprep.subr.mxu0 %v3053
        %3806 = vmatpush1.msra.mxu0 %v3052
        %3807 = vmatprep.subr.mxu0 %v3037
        %3808 = vmatpush1.msra.mxu0 %v3036
        %3809 = vmatprep.subr.mxu0 %v3021
        %3810 = vmatpush1.msra.mxu0 %v3020
        %3811 = vmatprep.subr.mxu0 %v3005
        %3812 = vmatpush1.msra.mxu0 %v3004
        %3813 = vmatprep.subr.mxu0 %v2989
        %3814 = vmatpush1.msra.mxu0 %v2988
        %3815 = vmatprep.subr.mxu0 %v2973
        %3816 = vmatpush1.msra.mxu0 %v2972
        %3817 = vmatprep.subr.mxu0 %v2957
        %3818 = vmatpush1.msra.mxu0 %v2956
        %3819 = vmatprep.subr.mxu0 %v2941
        %3820 = vmatpush1.msra.mxu0 %v2940
        %3821 = vmatprep.subr.mxu0 %v2925
        %3822 = vmatpush1.msra.mxu0 %v2924
        %3823 = vmatprep.subr.mxu0 0.0
        %3824 = vmatpush2.msra.mxu0 0.0
        %3825 = vmatprep.subr.mxu0 0.0
        %3826 = vmatpush2.msra.mxu0 0.0
        %3827 = vmatprep.subr.mxu0 0.0
        %3828 = vmatpush2.msra.mxu0 0.0
        %3829 = vmatprep.subr.mxu0 0.0
        %3830 = vmatpush2.msra.mxu0 0.0
        %3831 = vmatprep.subr.mxu0 0.0
        %3832 = vmatpush2.msra.mxu0 0.0
        %3833 = vmatprep.subr.mxu0 0.0
        %3834 = vmatpush2.msra.mxu0 0.0
        %3835 = vmatprep.subr.mxu0 0.0
        %3836 = vmatpush2.msra.mxu0 0.0
        %3837 = vmatprep.subr.mxu0 0.0
        %3838 = vmatpush2.msra.mxu0 0.0
        %3839 = vmatprep.subr.mxu0 0.0
        %3840 = vmatpush2.msra.mxu0 0.0
        %3841 = vmatprep.subr.mxu0 0.0
        %3842 = vmatpush2.msra.mxu0 0.0
        %3843 = vmatprep.subr.mxu0 0.0
        %3844 = vmatpush2.msra.mxu0 0.0
        %3845 = vmatprep.subr.mxu0 0.0
        %3846 = vmatpush2.msra.mxu0 0.0
        %3847 = vmatprep.subr.mxu0 0.0
        %3848 = vmatpush2.msra.mxu0 0.0
        %3849 = vmatprep.subr.mxu0 0.0
        %3850 = vmatpush2.msra.mxu0 0.0
        %3851 = vmatprep.subr.mxu0 0.0
        %3852 = vmatpush2.msra.mxu0 0.0
        %3853 = vmatprep.subr.mxu0 0.0
        %3854 = vmatpush2.msra.mxu0 0.0
        %3855 = vmatprep.mubr.f32.mxu0 0.0
        %3856 = vmatmul.mubr.f32.gmra.mxu0 %v3170
        %v3857 = vpop.f32.mrf.mxu0
        %v3858 = vadd.f32 %v3189, %v3857
        %v3859 = vpop.f32.mrf.mxu0
        %v3860 = vadd.f32 %v3189, %v3859
        %3861 = vmatprep.mubr.f32.mxu0 0.0
        %3862 = vmatmul.mubr.f32.gmra.mxu0 %v3171
        %v3863 = vpop.f32.mrf.mxu0
        %v3864 = vadd.f32 %v3194, %v3863
        %v3865 = vpop.f32.mrf.mxu0
        %v3866 = vadd.f32 %v3194, %v3865
        %3867 = vmatprep.mubr.f32.mxu0 0.0
        %3868 = vmatmul.mubr.f32.gmra.mxu0 %v3172
        %v3869 = vpop.f32.mrf.mxu0
        %v3870 = vadd.f32 %v3199, %v3869
        %v3871 = vpop.f32.mrf.mxu0
        %v3872 = vadd.f32 %v3199, %v3871
        %3873 = vmatprep.mubr.f32.mxu0 0.0
        %3874 = vmatmul.mubr.f32.gmra.mxu0 %v3173
        %v3875 = vpop.f32.mrf.mxu0
        %v3876 = vadd.f32 %v3204, %v3875
        %v3877 = vpop.f32.mrf.mxu0
        %v3878 = vadd.f32 %v3204, %v3877
        %3879 = vmatprep.mubr.f32.mxu0 0.0
        %3880 = vmatmul.mubr.f32.gmra.mxu0 %v3174
        %v3881 = vpop.f32.mrf.mxu0
        %v3882 = vadd.f32 %v3209, %v3881
        %v3883 = vpop.f32.mrf.mxu0
        %v3884 = vadd.f32 %v3209, %v3883
        %3885 = vmatprep.mubr.f32.mxu0 0.0
        %3886 = vmatmul.mubr.f32.gmra.mxu0 %v3175
        %v3887 = vpop.f32.mrf.mxu0
        %v3888 = vadd.f32 %v3214, %v3887
        %v3889 = vpop.f32.mrf.mxu0
        %v3890 = vadd.f32 %v3214, %v3889
        %3891 = vmatprep.mubr.f32.mxu0 0.0
        %3892 = vmatmul.mubr.f32.gmra.mxu0 %v3176
        %v3893 = vpop.f32.mrf.mxu0
        %v3894 = vadd.f32 %v3219, %v3893
        %v3895 = vpop.f32.mrf.mxu0
        %v3896 = vadd.f32 %v3219, %v3895
        %3897 = vmatprep.mubr.f32.mxu0 0.0
        %3898 = vmatmul.mubr.f32.gmra.mxu0 %v3177
        %v3899 = vpop.f32.mrf.mxu0
        %v3900 = vadd.f32 %v3224, %v3899
        %v3901 = vpop.f32.mrf.mxu0
        %v3902 = vadd.f32 %v3224, %v3901
        %3903 = vdwg.mxu0
        %3904 = vmatprep.subr.mxu0 %v3167
        %3905 = vmatpush1.msra.mxu0 %v3166
        %3906 = vmatprep.subr.mxu0 %v3151
        %3907 = vmatpush1.msra.mxu0 %v3150
        %3908 = vmatprep.subr.mxu0 %v3135
        %3909 = vmatpush1.msra.mxu0 %v3134
        %3910 = vmatprep.subr.mxu0 %v3119
        %3911 = vmatpush1.msra.mxu0 %v3118
        %3912 = vmatprep.subr.mxu0 %v3103
        %3913 = vmatpush1.msra.mxu0 %v3102
        %3914 = vmatprep.subr.mxu0 %v3087
        %3915 = vmatpush1.msra.mxu0 %v3086
        %3916 = vmatprep.subr.mxu0 %v3071
        %3917 = vmatpush1.msra.mxu0 %v3070
        %3918 = vmatprep.subr.mxu0 %v3055
        %3919 = vmatpush1.msra.mxu0 %v3054
        %3920 = vmatprep.subr.mxu0 %v3039
        %3921 = vmatpush1.msra.mxu0 %v3038
        %3922 = vmatprep.subr.mxu0 %v3023
        %3923 = vmatpush1.msra.mxu0 %v3022
        %3924 = vmatprep.subr.mxu0 %v3007
        %3925 = vmatpush1.msra.mxu0 %v3006
        %3926 = vmatprep.subr.mxu0 %v2991
        %3927 = vmatpush1.msra.mxu0 %v2990
        %3928 = vmatprep.subr.mxu0 %v2975
        %3929 = vmatpush1.msra.mxu0 %v2974
        %3930 = vmatprep.subr.mxu0 %v2959
        %3931 = vmatpush1.msra.mxu0 %v2958
        %3932 = vmatprep.subr.mxu0 %v2943
        %3933 = vmatpush1.msra.mxu0 %v2942
        %3934 = vmatprep.subr.mxu0 %v2927
        %3935 = vmatpush1.msra.mxu0 %v2926
        %3936 = vmatprep.subr.mxu0 0.0
        %3937 = vmatpush2.msra.mxu0 0.0
        %3938 = vmatprep.subr.mxu0 0.0
        %3939 = vmatpush2.msra.mxu0 0.0
        %3940 = vmatprep.subr.mxu0 0.0
        %3941 = vmatpush2.msra.mxu0 0.0
        %3942 = vmatprep.subr.mxu0 0.0
        %3943 = vmatpush2.msra.mxu0 0.0
        %3944 = vmatprep.subr.mxu0 0.0
        %3945 = vmatpush2.msra.mxu0 0.0
        %3946 = vmatprep.subr.mxu0 0.0
        %3947 = vmatpush2.msra.mxu0 0.0
        %3948 = vmatprep.subr.mxu0 0.0
        %3949 = vmatpush2.msra.mxu0 0.0
        %3950 = vmatprep.subr.mxu0 0.0
        %3951 = vmatpush2.msra.mxu0 0.0
        %3952 = vmatprep.subr.mxu0 0.0
        %3953 = vmatpush2.msra.mxu0 0.0
        %3954 = vmatprep.subr.mxu0 0.0
        %3955 = vmatpush2.msra.mxu0 0.0
        %3956 = vmatprep.subr.mxu0 0.0
        %3957 = vmatpush2.msra.mxu0 0.0
        %3958 = vmatprep.subr.mxu0 0.0
        %3959 = vmatpush2.msra.mxu0 0.0
        %3960 = vmatprep.subr.mxu0 0.0
        %3961 = vmatpush2.msra.mxu0 0.0
        %3962 = vmatprep.subr.mxu0 0.0
        %3963 = vmatpush2.msra.mxu0 0.0
        %3964 = vmatprep.subr.mxu0 0.0
        %3965 = vmatpush2.msra.mxu0 0.0
        %3966 = vmatprep.subr.mxu0 0.0
        %3967 = vmatpush2.msra.mxu0 0.0
        %3968 = vmatprep.mubr.f32.mxu0 0.0
        %3969 = vmatmul.mubr.f32.gmra.mxu0 %v3170
        %v3970 = vpop.f32.mrf.mxu0
        %v3971 = vadd.f32 %v3189, %v3970
        %v3972 = vpop.f32.mrf.mxu0
        %v3973 = vadd.f32 %v3189, %v3972
        %3974 = vmatprep.mubr.f32.mxu0 0.0
        %3975 = vmatmul.mubr.f32.gmra.mxu0 %v3171
        %v3976 = vpop.f32.mrf.mxu0
        %v3977 = vadd.f32 %v3194, %v3976
        %v3978 = vpop.f32.mrf.mxu0
        %v3979 = vadd.f32 %v3194, %v3978
        %3980 = vmatprep.mubr.f32.mxu0 0.0
        %3981 = vmatmul.mubr.f32.gmra.mxu0 %v3172
        %v3982 = vpop.f32.mrf.mxu0
        %v3983 = vadd.f32 %v3199, %v3982
        %v3984 = vpop.f32.mrf.mxu0
        %v3985 = vadd.f32 %v3199, %v3984
        %3986 = vmatprep.mubr.f32.mxu0 0.0
        %3987 = vmatmul.mubr.f32.gmra.mxu0 %v3173
        %v3988 = vpop.f32.mrf.mxu0
        %v3989 = vadd.f32 %v3204, %v3988
        %v3990 = vpop.f32.mrf.mxu0
        %v3991 = vadd.f32 %v3204, %v3990
        %3992 = vmatprep.mubr.f32.mxu0 0.0
        %3993 = vmatmul.mubr.f32.gmra.mxu0 %v3174
        %v3994 = vpop.f32.mrf.mxu0
        %v3995 = vadd.f32 %v3209, %v3994
        %v3996 = vpop.f32.mrf.mxu0
        %v3997 = vadd.f32 %v3209, %v3996
        %3998 = vmatprep.mubr.f32.mxu0 0.0
        %3999 = vmatmul.mubr.f32.gmra.mxu0 %v3175
        %v4000 = vpop.f32.mrf.mxu0
        %v4001 = vadd.f32 %v3214, %v4000
        %v4002 = vpop.f32.mrf.mxu0
        %v4003 = vadd.f32 %v3214, %v4002
        %4004 = vmatprep.mubr.f32.mxu0 0.0
        %4005 = vmatmul.mubr.f32.gmra.mxu0 %v3176
        %v4006 = vpop.f32.mrf.mxu0
        %v4007 = vadd.f32 %v3219, %v4006
        %v4008 = vpop.f32.mrf.mxu0
        %v4009 = vadd.f32 %v3219, %v4008
        %4010 = vmatprep.mubr.f32.mxu0 0.0
        %4011 = vmatmul.mubr.f32.gmra.mxu0 %v3177
        %v4012 = vpop.f32.mrf.mxu0
        %v4013 = vadd.f32 %v3224, %v4012
        %v4014 = vpop.f32.mrf.mxu0
        %v4015 = vadd.f32 %v3224, %v4014
        %4016 = vdwg.mxu0
        %4017 = vmatprep.subr.mxu0 %v3169
        %4018 = vmatpush1.msra.mxu0 %v3168
        %4019 = vmatprep.subr.mxu0 %v3153
        %4020 = vmatpush1.msra.mxu0 %v3152
        %4021 = vmatprep.subr.mxu0 %v3137
        %4022 = vmatpush1.msra.mxu0 %v3136
        %4023 = vmatprep.subr.mxu0 %v3121
        %4024 = vmatpush1.msra.mxu0 %v3120
        %4025 = vmatprep.subr.mxu0 %v3105
        %4026 = vmatpush1.msra.mxu0 %v3104
        %4027 = vmatprep.subr.mxu0 %v3089
        %4028 = vmatpush1.msra.mxu0 %v3088
        %4029 = vmatprep.subr.mxu0 %v3073
        %4030 = vmatpush1.msra.mxu0 %v3072
        %4031 = vmatprep.subr.mxu0 %v3057
        %4032 = vmatpush1.msra.mxu0 %v3056
        %4033 = vmatprep.subr.mxu0 %v3041
        %4034 = vmatpush1.msra.mxu0 %v3040
        %4035 = vmatprep.subr.mxu0 %v3025
        %4036 = vmatpush1.msra.mxu0 %v3024
        %4037 = vmatprep.subr.mxu0 %v3009
        %4038 = vmatpush1.msra.mxu0 %v3008
        %4039 = vmatprep.subr.mxu0 %v2993
        %4040 = vmatpush1.msra.mxu0 %v2992
        %4041 = vmatprep.subr.mxu0 %v2977
        %4042 = vmatpush1.msra.mxu0 %v2976
        %4043 = vmatprep.subr.mxu0 %v2961
        %4044 = vmatpush1.msra.mxu0 %v2960
        %4045 = vmatprep.subr.mxu0 %v2945
        %4046 = vmatpush1.msra.mxu0 %v2944
        %4047 = vmatprep.subr.mxu0 %v2929
        %4048 = vmatpush1.msra.mxu0 %v2928
        %4049 = vmatprep.subr.mxu0 0.0
        %4050 = vmatpush2.msra.mxu0 0.0
        %4051 = vmatprep.subr.mxu0 0.0
        %4052 = vmatpush2.msra.mxu0 0.0
        %4053 = vmatprep.subr.mxu0 0.0
        %4054 = vmatpush2.msra.mxu0 0.0
        %4055 = vmatprep.subr.mxu0 0.0
        %4056 = vmatpush2.msra.mxu0 0.0
        %4057 = vmatprep.subr.mxu0 0.0
        %4058 = vmatpush2.msra.mxu0 0.0
        %4059 = vmatprep.subr.mxu0 0.0
        %4060 = vmatpush2.msra.mxu0 0.0
        %4061 = vmatprep.subr.mxu0 0.0
        %4062 = vmatpush2.msra.mxu0 0.0
        %4063 = vmatprep.subr.mxu0 0.0
        %4064 = vmatpush2.msra.mxu0 0.0
        %4065 = vmatprep.subr.mxu0 0.0
        %4066 = vmatpush2.msra.mxu0 0.0
        %4067 = vmatprep.subr.mxu0 0.0
        %4068 = vmatpush2.msra.mxu0 0.0
        %4069 = vmatprep.subr.mxu0 0.0
        %4070 = vmatpush2.msra.mxu0 0.0
        %4071 = vmatprep.subr.mxu0 0.0
        %4072 = vmatpush2.msra.mxu0 0.0
        %4073 = vmatprep.subr.mxu0 0.0
        %4074 = vmatpush2.msra.mxu0 0.0
        %4075 = vmatprep.subr.mxu0 0.0
        %4076 = vmatpush2.msra.mxu0 0.0
        %4077 = vmatprep.subr.mxu0 0.0
        %4078 = vmatpush2.msra.mxu0 0.0
        %4079 = vmatprep.subr.mxu0 0.0
        %4080 = vmatpush2.msra.mxu0 0.0
        %4081 = vmatprep.mubr.f32.mxu0 0.0
        %4082 = vmatmul.mubr.f32.gmra.mxu0 %v3170
        %v4083 = vpop.f32.mrf.mxu0
        %v4084 = vadd.f32 %v3189, %v4083
        %v4085 = vpop.f32.mrf.mxu0
        %v4086 = vadd.f32 %v3189, %v4085
        %4087 = vmatprep.mubr.f32.mxu0 0.0
        %4088 = vmatmul.mubr.f32.gmra.mxu0 %v3171
        %v4089 = vpop.f32.mrf.mxu0
        %v4090 = vadd.f32 %v3194, %v4089
        %v4091 = vpop.f32.mrf.mxu0
        %v4092 = vadd.f32 %v3194, %v4091
        %4093 = vmatprep.mubr.f32.mxu0 0.0
        %4094 = vmatmul.mubr.f32.gmra.mxu0 %v3172
        %v4095 = vpop.f32.mrf.mxu0
        %v4096 = vadd.f32 %v3199, %v4095
        %v4097 = vpop.f32.mrf.mxu0
        %v4098 = vadd.f32 %v3199, %v4097
        %4099 = vmatprep.mubr.f32.mxu0 0.0
        %4100 = vmatmul.mubr.f32.gmra.mxu0 %v3173
        %v4101 = vpop.f32.mrf.mxu0
        %v4102 = vadd.f32 %v3204, %v4101
        %v4103 = vpop.f32.mrf.mxu0
        %v4104 = vadd.f32 %v3204, %v4103
        %4105 = vmatprep.mubr.f32.mxu0 0.0
        %4106 = vmatmul.mubr.f32.gmra.mxu0 %v3174
        %v4107 = vpop.f32.mrf.mxu0
        %v4108 = vadd.f32 %v3209, %v4107
        %v4109 = vpop.f32.mrf.mxu0
        %v4110 = vadd.f32 %v3209, %v4109
        %4111 = vmatprep.mubr.f32.mxu0 0.0
        %4112 = vmatmul.mubr.f32.gmra.mxu0 %v3175
        %v4113 = vpop.f32.mrf.mxu0
        %v4114 = vadd.f32 %v3214, %v4113
        %v4115 = vpop.f32.mrf.mxu0
        %v4116 = vadd.f32 %v3214, %v4115
        %4117 = vmatprep.mubr.f32.mxu0 0.0
        %4118 = vmatmul.mubr.f32.gmra.mxu0 %v3176
        %v4119 = vpop.f32.mrf.mxu0
        %v4120 = vadd.f32 %v3219, %v4119
        %v4121 = vpop.f32.mrf.mxu0
        %v4122 = vadd.f32 %v3219, %v4121
        %4123 = vmatprep.mubr.f32.mxu0 0.0
        %4124 = vmatmul.mubr.f32.gmra.mxu0 %v3177
        %v4125 = vpop.f32.mrf.mxu0
        %v4126 = vadd.f32 %v3224, %v4125
        %v4127 = vpop.f32.mrf.mxu0
        %v4128 = vadd.f32 %v3224, %v4127
        %4129 = vdwg.mxu0
        %v4130 = vmax.f32 %v3293, 0.0
        %v4131 = vmax.f32 %v3295, 0.0
        %v4132 = vmax.f32 %v3406, 0.0
        %v4133 = vmax.f32 %v3408, 0.0
        %v4134 = vmax.f32 %v3519, 0.0
        %v4135 = vmax.f32 %v3521, 0.0
        %v4136 = vmax.f32 %v3632, 0.0
        %v4137 = vmax.f32 %v3634, 0.0
        %v4138 = vmax.f32 %v3745, 0.0
        %v4139 = vmax.f32 %v3747, 0.0
        %v4140 = vmax.f32 %v3858, 0.0
        %v4141 = vmax.f32 %v3860, 0.0
        %v4142 = vmax.f32 %v3971, 0.0
        %v4143 = vmax.f32 %v3973, 0.0
        %v4144 = vmax.f32 %v4084, 0.0
        %v4145 = vmax.f32 %v4086, 0.0
        %v4146 = vmax.f32 %v3299, 0.0
        %v4147 = vmax.f32 %v3301, 0.0
        %v4148 = vmax.f32 %v3412, 0.0
        %v4149 = vmax.f32 %v3414, 0.0
        %v4150 = vmax.f32 %v3525, 0.0
        %v4151 = vmax.f32 %v3527, 0.0
        %v4152 = vmax.f32 %v3638, 0.0
        %v4153 = vmax.f32 %v3640, 0.0
        %v4154 = vmax.f32 %v3751, 0.0
        %v4155 = vmax.f32 %v3753, 0.0
        %v4156 = vmax.f32 %v3864, 0.0
        %v4157 = vmax.f32 %v3866, 0.0
        %v4158 = vmax.f32 %v3977, 0.0
        %v4159 = vmax.f32 %v3979, 0.0
        %v4160 = vmax.f32 %v4090, 0.0
        %v4161 = vmax.f32 %v4092, 0.0
        %v4162 = vmax.f32 %v3305, 0.0
        %v4163 = vmax.f32 %v3307, 0.0
        %v4164 = vmax.f32 %v3418, 0.0
        %v4165 = vmax.f32 %v3420, 0.0
        %v4166 = vmax.f32 %v3531, 0.0
        %v4167 = vmax.f32 %v3533, 0.0
        %v4168 = vmax.f32 %v3644, 0.0
        %v4169 = vmax.f32 %v3646, 0.0
        %v4170 = vmax.f32 %v3757, 0.0
        %v4171 = vmax.f32 %v3759, 0.0
        %v4172 = vmax.f32 %v3870, 0.0
        %v4173 = vmax.f32 %v3872, 0.0
        %v4174 = vmax.f32 %v3983, 0.0
        %v4175 = vmax.f32 %v3985, 0.0
        %v4176 = vmax.f32 %v4096, 0.0
        %v4177 = vmax.f32 %v4098, 0.0
        %v4178 = vmax.f32 %v3311, 0.0
        %v4179 = vmax.f32 %v3313, 0.0
        %v4180 = vmax.f32 %v3424, 0.0
        %v4181 = vmax.f32 %v3426, 0.0
        %v4182 = vmax.f32 %v3537, 0.0
        %v4183 = vmax.f32 %v3539, 0.0
        %v4184 = vmax.f32 %v3650, 0.0
        %v4185 = vmax.f32 %v3652, 0.0
        %v4186 = vmax.f32 %v3763, 0.0
        %v4187 = vmax.f32 %v3765, 0.0
        %v4188 = vmax.f32 %v3876, 0.0
        %v4189 = vmax.f32 %v3878, 0.0
        %v4190 = vmax.f32 %v3989, 0.0
        %v4191 = vmax.f32 %v3991, 0.0
        %v4192 = vmax.f32 %v4102, 0.0
        %v4193 = vmax.f32 %v4104, 0.0
        %v4194 = vmax.f32 %v3317, 0.0
        %v4195 = vmax.f32 %v3319, 0.0
        %v4196 = vmax.f32 %v3430, 0.0
        %v4197 = vmax.f32 %v3432, 0.0
        %v4198 = vmax.f32 %v3543, 0.0
        %v4199 = vmax.f32 %v3545, 0.0
        %v4200 = vmax.f32 %v3656, 0.0
        %v4201 = vmax.f32 %v3658, 0.0
        %v4202 = vmax.f32 %v3769, 0.0
        %v4203 = vmax.f32 %v3771, 0.0
        %v4204 = vmax.f32 %v3882, 0.0
        %v4205 = vmax.f32 %v3884, 0.0
        %v4206 = vmax.f32 %v3995, 0.0
        %v4207 = vmax.f32 %v3997, 0.0
        %v4208 = vmax.f32 %v4108, 0.0
        %v4209 = vmax.f32 %v4110, 0.0
        %v4210 = vmax.f32 %v3323, 0.0
        %v4211 = vmax.f32 %v3325, 0.0
        %v4212 = vmax.f32 %v3436, 0.0
        %v4213 = vmax.f32 %v3438, 0.0
        %v4214 = vmax.f32 %v3549, 0.0
        %v4215 = vmax.f32 %v3551, 0.0
        %v4216 = vmax.f32 %v3662, 0.0
        %v4217 = vmax.f32 %v3664, 0.0
        %v4218 = vmax.f32 %v3775, 0.0
        %v4219 = vmax.f32 %v3777, 0.0
        %v4220 = vmax.f32 %v3888, 0.0
        %v4221 = vmax.f32 %v3890, 0.0
        %v4222 = vmax.f32 %v4001, 0.0
        %v4223 = vmax.f32 %v4003, 0.0
        %v4224 = vmax.f32 %v4114, 0.0
        %v4225 = vmax.f32 %v4116, 0.0
        %v4226 = vmax.f32 %v3329, 0.0
        %v4227 = vmax.f32 %v3331, 0.0
        %v4228 = vmax.f32 %v3442, 0.0
        %v4229 = vmax.f32 %v3444, 0.0
        %v4230 = vmax.f32 %v3555, 0.0
        %v4231 = vmax.f32 %v3557, 0.0
        %v4232 = vmax.f32 %v3668, 0.0
        %v4233 = vmax.f32 %v3670, 0.0
        %v4234 = vmax.f32 %v3781, 0.0
        %v4235 = vmax.f32 %v3783, 0.0
        %v4236 = vmax.f32 %v3894, 0.0
        %v4237 = vmax.f32 %v3896, 0.0
        %v4238 = vmax.f32 %v4007, 0.0
        %v4239 = vmax.f32 %v4009, 0.0
        %v4240 = vmax.f32 %v4120, 0.0
        %v4241 = vmax.f32 %v4122, 0.0
        %v4242 = vmax.f32 %v3335, 0.0
        %v4243 = vmax.f32 %v3337, 0.0
        %v4244 = vmax.f32 %v3448, 0.0
        %v4245 = vmax.f32 %v3450, 0.0
        %v4246 = vmax.f32 %v3561, 0.0
        %v4247 = vmax.f32 %v3563, 0.0
        %v4248 = vmax.f32 %v3674, 0.0
        %v4249 = vmax.f32 %v3676, 0.0
        %v4250 = vmax.f32 %v3787, 0.0
        %v4251 = vmax.f32 %v3789, 0.0
        %v4252 = vmax.f32 %v3900, 0.0
        %v4253 = vmax.f32 %v3902, 0.0
        %v4254 = vmax.f32 %v4013, 0.0
        %v4255 = vmax.f32 %v4015, 0.0
        %v4256 = vmax.f32 %v4126, 0.0
        %v4257 = vmax.f32 %v4128, 0.0
        %v4258 = vld [vmem:[%s7] sm:$0xff]
        %v4259 = vld [vmem:[%s7 + $0x8] sm:$0xff]
        %v4260 = vld [vmem:[%s7 + $0x10] sm:$0xff]
        %v4261 = vld [vmem:[%s7 + $0x18] sm:$0xff]
        %v4262 = vld [vmem:[%s7 + $0x20] sm:$0xff]
        %v4263 = vld [vmem:[%s7 + $0x28] sm:$0xff]
        %v4264 = vld [vmem:[%s7 + $0x30] sm:$0xff]
        %v4265 = vld [vmem:[%s7 + $0x38] sm:$0xff]
        %4267 = vset.pattern.permute.xlu0 0
        %4268 = vperm.xlu0 %4267, %v4258
        %v4269 = vpop.permute.xlu0 %4268
        %4272 = vset.pattern.permute.xlu0 0
        %4273 = vperm.xlu0 %4272, %v4259
        %v4274 = vpop.permute.xlu0 %4273
        %4277 = vset.pattern.permute.xlu0 0
        %4278 = vperm.xlu0 %4277, %v4260
        %v4279 = vpop.permute.xlu0 %4278
        %4282 = vset.pattern.permute.xlu0 0
        %4283 = vperm.xlu0 %4282, %v4261
        %v4284 = vpop.permute.xlu0 %4283
        %4287 = vset.pattern.permute.xlu0 0
        %4288 = vperm.xlu0 %4287, %v4262
        %v4289 = vpop.permute.xlu0 %4288
        %4292 = vset.pattern.permute.xlu0 0
        %4293 = vperm.xlu0 %4292, %v4263
        %v4294 = vpop.permute.xlu0 %4293
        %4297 = vset.pattern.permute.xlu0 0
        %4298 = vperm.xlu0 %4297, %v4264
        %v4299 = vpop.permute.xlu0 %4298
        %4302 = vset.pattern.permute.xlu0 0
        %4303 = vperm.xlu0 %4302, %v4265
        %v4304 = vpop.permute.xlu0 %4303
        %v4306 = vmul.f32 %v4130, %v4269
        %v4307 = vmul.f32 %v4131, %v4269
        %v4308 = vmul.f32 %v4132, %v4269
        %v4309 = vmul.f32 %v4133, %v4269
        %v4310 = vmul.f32 %v4134, %v4269
        %v4311 = vmul.f32 %v4135, %v4269
        %v4312 = vmul.f32 %v4136, %v4269
        %v4313 = vmul.f32 %v4137, %v4269
        %v4314 = vmul.f32 %v4138, %v4269
        %v4315 = vmul.f32 %v4139, %v4269
        %v4316 = vmul.f32 %v4140, %v4269
        %v4317 = vmul.f32 %v4141, %v4269
        %v4318 = vmul.f32 %v4142, %v4269
        %v4319 = vmul.f32 %v4143, %v4269
        %v4320 = vmul.f32 %v4144, %v4269
        %v4321 = vmul.f32 %v4145, %v4269
        %v4322 = vmul.f32 %v4146, %v4274
        %v4323 = vmul.f32 %v4147, %v4274
        %v4324 = vmul.f32 %v4148, %v4274
        %v4325 = vmul.f32 %v4149, %v4274
        %v4326 = vmul.f32 %v4150, %v4274
        %v4327 = vmul.f32 %v4151, %v4274
        %v4328 = vmul.f32 %v4152, %v4274
        %v4329 = vmul.f32 %v4153, %v4274
        %v4330 = vmul.f32 %v4154, %v4274
        %v4331 = vmul.f32 %v4155, %v4274
        %v4332 = vmul.f32 %v4156, %v4274
        %v4333 = vmul.f32 %v4157, %v4274
        %v4334 = vmul.f32 %v4158, %v4274
        %v4335 = vmul.f32 %v4159, %v4274
        %v4336 = vmul.f32 %v4160, %v4274
        %v4337 = vmul.f32 %v4161, %v4274
        %v4338 = vmul.f32 %v4162, %v4279
        %v4339 = vmul.f32 %v4163, %v4279
        %v4340 = vmul.f32 %v4164, %v4279
        %v4341 = vmul.f32 %v4165, %v4279
        %v4342 = vmul.f32 %v4166, %v4279
        %v4343 = vmul.f32 %v4167, %v4279
        %v4344 = vmul.f32 %v4168, %v4279
        %v4345 = vmul.f32 %v4169, %v4279
        %v4346 = vmul.f32 %v4170, %v4279
        %v4347 = vmul.f32 %v4171, %v4279
        %v4348 = vmul.f32 %v4172, %v4279
        %v4349 = vmul.f32 %v4173, %v4279
        %v4350 = vmul.f32 %v4174, %v4279
        %v4351 = vmul.f32 %v4175, %v4279
        %v4352 = vmul.f32 %v4176, %v4279
        %v4353 = vmul.f32 %v4177, %v4279
        %v4354 = vmul.f32 %v4178, %v4284
        %v4355 = vmul.f32 %v4179, %v4284
        %v4356 = vmul.f32 %v4180, %v4284
        %v4357 = vmul.f32 %v4181, %v4284
        %v4358 = vmul.f32 %v4182, %v4284
        %v4359 = vmul.f32 %v4183, %v4284
        %v4360 = vmul.f32 %v4184, %v4284
        %v4361 = vmul.f32 %v4185, %v4284
        %v4362 = vmul.f32 %v4186, %v4284
        %v4363 = vmul.f32 %v4187, %v4284
        %v4364 = vmul.f32 %v4188, %v4284
        %v4365 = vmul.f32 %v4189, %v4284
        %v4366 = vmul.f32 %v4190, %v4284
        %v4367 = vmul.f32 %v4191, %v4284
        %v4368 = vmul.f32 %v4192, %v4284
        %v4369 = vmul.f32 %v4193, %v4284
        %v4370 = vmul.f32 %v4194, %v4289
        %v4371 = vmul.f32 %v4195, %v4289
        %v4372 = vmul.f32 %v4196, %v4289
        %v4373 = vmul.f32 %v4197, %v4289
        %v4374 = vmul.f32 %v4198, %v4289
        %v4375 = vmul.f32 %v4199, %v4289
        %v4376 = vmul.f32 %v4200, %v4289
        %v4377 = vmul.f32 %v4201, %v4289
        %v4378 = vmul.f32 %v4202, %v4289
        %v4379 = vmul.f32 %v4203, %v4289
        %v4380 = vmul.f32 %v4204, %v4289
        %v4381 = vmul.f32 %v4205, %v4289
        %v4382 = vmul.f32 %v4206, %v4289
        %v4383 = vmul.f32 %v4207, %v4289
        %v4384 = vmul.f32 %v4208, %v4289
        %v4385 = vmul.f32 %v4209, %v4289
        %v4386 = vmul.f32 %v4210, %v4294
        %v4387 = vmul.f32 %v4211, %v4294
        %v4388 = vmul.f32 %v4212, %v4294
        %v4389 = vmul.f32 %v4213, %v4294
        %v4390 = vmul.f32 %v4214, %v4294
        %v4391 = vmul.f32 %v4215, %v4294
        %v4392 = vmul.f32 %v4216, %v4294
        %v4393 = vmul.f32 %v4217, %v4294
        %v4394 = vmul.f32 %v4218, %v4294
        %v4395 = vmul.f32 %v4219, %v4294
        %v4396 = vmul.f32 %v4220, %v4294
        %v4397 = vmul.f32 %v4221, %v4294
        %v4398 = vmul.f32 %v4222, %v4294
        %v4399 = vmul.f32 %v4223, %v4294
        %v4400 = vmul.f32 %v4224, %v4294
        %v4401 = vmul.f32 %v4225, %v4294
        %v4402 = vmul.f32 %v4226, %v4299
        %v4403 = vmul.f32 %v4227, %v4299
        %v4404 = vmul.f32 %v4228, %v4299
        %v4405 = vmul.f32 %v4229, %v4299
        %v4406 = vmul.f32 %v4230, %v4299
        %v4407 = vmul.f32 %v4231, %v4299
        %v4408 = vmul.f32 %v4232, %v4299
        %v4409 = vmul.f32 %v4233, %v4299
        %v4410 = vmul.f32 %v4234, %v4299
        %v4411 = vmul.f32 %v4235, %v4299
        %v4412 = vmul.f32 %v4236, %v4299
        %v4413 = vmul.f32 %v4237, %v4299
        %v4414 = vmul.f32 %v4238, %v4299
        %v4415 = vmul.f32 %v4239, %v4299
        %v4416 = vmul.f32 %v4240, %v4299
        %v4417 = vmul.f32 %v4241, %v4299
        %v4418 = vmul.f32 %v4242, %v4304
        %v4419 = vmul.f32 %v4243, %v4304
        %v4420 = vmul.f32 %v4244, %v4304
        %v4421 = vmul.f32 %v4245, %v4304
        %v4422 = vmul.f32 %v4246, %v4304
        %v4423 = vmul.f32 %v4247, %v4304
        %v4424 = vmul.f32 %v4248, %v4304
        %v4425 = vmul.f32 %v4249, %v4304
        %v4426 = vmul.f32 %v4250, %v4304
        %v4427 = vmul.f32 %v4251, %v4304
        %v4428 = vmul.f32 %v4252, %v4304
        %v4429 = vmul.f32 %v4253, %v4304
        %v4430 = vmul.f32 %v4254, %v4304
        %v4431 = vmul.f32 %v4255, %v4304
        %v4432 = vmul.f32 %v4256, %v4304
        %v4433 = vmul.f32 %v4257, %v4304
        %v4434 = vadd.f32 %v4306, %v4322
        %v4435 = vadd.f32 %v4434, %v4338
        %v4436 = vadd.f32 %v4435, %v4354
        %v4437 = vadd.f32 %v4436, %v4370
        %v4438 = vadd.f32 %v4437, %v4386
        %v4439 = vadd.f32 %v4438, %v4402
        %v4440 = vadd.f32 %v4439, %v4418
        %v4441 = vrot.slane %v4440, 4
        %v4442 = vadd.f32 %v4440, %v4441
        %v4443 = vrot.slane %v4442, 2
        %v4444 = vadd.f32 %v4442, %v4443
        %v4445 = vrot.slane %v4444, 1
        %v4446 = vadd.f32 %v4444, %v4445
        %v4447 = vadd.f32 %v4307, %v4323
        %v4448 = vadd.f32 %v4447, %v4339
        %v4449 = vadd.f32 %v4448, %v4355
        %v4450 = vadd.f32 %v4449, %v4371
        %v4451 = vadd.f32 %v4450, %v4387
        %v4452 = vadd.f32 %v4451, %v4403
        %v4453 = vadd.f32 %v4452, %v4419
        %v4454 = vrot.slane %v4453, 4
        %v4455 = vadd.f32 %v4453, %v4454
        %v4456 = vrot.slane %v4455, 2
        %v4457 = vadd.f32 %v4455, %v4456
        %v4458 = vrot.slane %v4457, 1
        %v4459 = vadd.f32 %v4457, %v4458
        %v4460 = vadd.f32 %v4308, %v4324
        %v4461 = vadd.f32 %v4460, %v4340
        %v4462 = vadd.f32 %v4461, %v4356
        %v4463 = vadd.f32 %v4462, %v4372
        %v4464 = vadd.f32 %v4463, %v4388
        %v4465 = vadd.f32 %v4464, %v4404
        %v4466 = vadd.f32 %v4465, %v4420
        %v4467 = vrot.slane %v4466, 4
        %v4468 = vadd.f32 %v4466, %v4467
        %v4469 = vrot.slane %v4468, 2
        %v4470 = vadd.f32 %v4468, %v4469
        %v4471 = vrot.slane %v4470, 1
        %v4472 = vadd.f32 %v4470, %v4471
        %v4473 = vadd.f32 %v4309, %v4325
        %v4474 = vadd.f32 %v4473, %v4341
        %v4475 = vadd.f32 %v4474, %v4357
        %v4476 = vadd.f32 %v4475, %v4373
        %v4477 = vadd.f32 %v4476, %v4389
        %v4478 = vadd.f32 %v4477, %v4405
        %v4479 = vadd.f32 %v4478, %v4421
        %v4480 = vrot.slane %v4479, 4
        %v4481 = vadd.f32 %v4479, %v4480
        %v4482 = vrot.slane %v4481, 2
        %v4483 = vadd.f32 %v4481, %v4482
        %v4484 = vrot.slane %v4483, 1
        %v4485 = vadd.f32 %v4483, %v4484
        %v4486 = vadd.f32 %v4310, %v4326
        %v4487 = vadd.f32 %v4486, %v4342
        %v4488 = vadd.f32 %v4487, %v4358
        %v4489 = vadd.f32 %v4488, %v4374
        %v4490 = vadd.f32 %v4489, %v4390
        %v4491 = vadd.f32 %v4490, %v4406
        %v4492 = vadd.f32 %v4491, %v4422
        %v4493 = vrot.slane %v4492, 4
        %v4494 = vadd.f32 %v4492, %v4493
        %v4495 = vrot.slane %v4494, 2
        %v4496 = vadd.f32 %v4494, %v4495
        %v4497 = vrot.slane %v4496, 1
        %v4498 = vadd.f32 %v4496, %v4497
        %v4499 = vadd.f32 %v4311, %v4327
        %v4500 = vadd.f32 %v4499, %v4343
        %v4501 = vadd.f32 %v4500, %v4359
        %v4502 = vadd.f32 %v4501, %v4375
        %v4503 = vadd.f32 %v4502, %v4391
        %v4504 = vadd.f32 %v4503, %v4407
        %v4505 = vadd.f32 %v4504, %v4423
        %v4506 = vrot.slane %v4505, 4
        %v4507 = vadd.f32 %v4505, %v4506
        %v4508 = vrot.slane %v4507, 2
        %v4509 = vadd.f32 %v4507, %v4508
        %v4510 = vrot.slane %v4509, 1
        %v4511 = vadd.f32 %v4509, %v4510
        %v4512 = vadd.f32 %v4312, %v4328
        %v4513 = vadd.f32 %v4512, %v4344
        %v4514 = vadd.f32 %v4513, %v4360
        %v4515 = vadd.f32 %v4514, %v4376
        %v4516 = vadd.f32 %v4515, %v4392
        %v4517 = vadd.f32 %v4516, %v4408
        %v4518 = vadd.f32 %v4517, %v4424
        %v4519 = vrot.slane %v4518, 4
        %v4520 = vadd.f32 %v4518, %v4519
        %v4521 = vrot.slane %v4520, 2
        %v4522 = vadd.f32 %v4520, %v4521
        %v4523 = vrot.slane %v4522, 1
        %v4524 = vadd.f32 %v4522, %v4523
        %v4525 = vadd.f32 %v4313, %v4329
        %v4526 = vadd.f32 %v4525, %v4345
        %v4527 = vadd.f32 %v4526, %v4361
        %v4528 = vadd.f32 %v4527, %v4377
        %v4529 = vadd.f32 %v4528, %v4393
        %v4530 = vadd.f32 %v4529, %v4409
        %v4531 = vadd.f32 %v4530, %v4425
        %v4532 = vrot.slane %v4531, 4
        %v4533 = vadd.f32 %v4531, %v4532
        %v4534 = vrot.slane %v4533, 2
        %v4535 = vadd.f32 %v4533, %v4534
        %v4536 = vrot.slane %v4535, 1
        %v4537 = vadd.f32 %v4535, %v4536
        %v4538 = vadd.f32 %v4314, %v4330
        %v4539 = vadd.f32 %v4538, %v4346
        %v4540 = vadd.f32 %v4539, %v4362
        %v4541 = vadd.f32 %v4540, %v4378
        %v4542 = vadd.f32 %v4541, %v4394
        %v4543 = vadd.f32 %v4542, %v4410
        %v4544 = vadd.f32 %v4543, %v4426
        %v4545 = vrot.slane %v4544, 4
        %v4546 = vadd.f32 %v4544, %v4545
        %v4547 = vrot.slane %v4546, 2
        %v4548 = vadd.f32 %v4546, %v4547
        %v4549 = vrot.slane %v4548, 1
        %v4550 = vadd.f32 %v4548, %v4549
        %v4551 = vadd.f32 %v4315, %v4331
        %v4552 = vadd.f32 %v4551, %v4347
        %v4553 = vadd.f32 %v4552, %v4363
        %v4554 = vadd.f32 %v4553, %v4379
        %v4555 = vadd.f32 %v4554, %v4395
        %v4556 = vadd.f32 %v4555, %v4411
        %v4557 = vadd.f32 %v4556, %v4427
        %v4558 = vrot.slane %v4557, 4
        %v4559 = vadd.f32 %v4557, %v4558
        %v4560 = vrot.slane %v4559, 2
        %v4561 = vadd.f32 %v4559, %v4560
        %v4562 = vrot.slane %v4561, 1
        %v4563 = vadd.f32 %v4561, %v4562
        %v4564 = vadd.f32 %v4316, %v4332
        %v4565 = vadd.f32 %v4564, %v4348
        %v4566 = vadd.f32 %v4565, %v4364
        %v4567 = vadd.f32 %v4566, %v4380
        %v4568 = vadd.f32 %v4567, %v4396
        %v4569 = vadd.f32 %v4568, %v4412
        %v4570 = vadd.f32 %v4569, %v4428
        %v4571 = vrot.slane %v4570, 4
        %v4572 = vadd.f32 %v4570, %v4571
        %v4573 = vrot.slane %v4572, 2
        %v4574 = vadd.f32 %v4572, %v4573
        %v4575 = vrot.slane %v4574, 1
        %v4576 = vadd.f32 %v4574, %v4575
        %v4577 = vadd.f32 %v4317, %v4333
        %v4578 = vadd.f32 %v4577, %v4349
        %v4579 = vadd.f32 %v4578, %v4365
        %v4580 = vadd.f32 %v4579, %v4381
        %v4581 = vadd.f32 %v4580, %v4397
        %v4582 = vadd.f32 %v4581, %v4413
        %v4583 = vadd.f32 %v4582, %v4429
        %v4584 = vrot.slane %v4583, 4
        %v4585 = vadd.f32 %v4583, %v4584
        %v4586 = vrot.slane %v4585, 2
        %v4587 = vadd.f32 %v4585, %v4586
        %v4588 = vrot.slane %v4587, 1
        %v4589 = vadd.f32 %v4587, %v4588
        %v4590 = vadd.f32 %v4318, %v4334
        %v4591 = vadd.f32 %v4590, %v4350
        %v4592 = vadd.f32 %v4591, %v4366
        %v4593 = vadd.f32 %v4592, %v4382
        %v4594 = vadd.f32 %v4593, %v4398
        %v4595 = vadd.f32 %v4594, %v4414
        %v4596 = vadd.f32 %v4595, %v4430
        %v4597 = vrot.slane %v4596, 4
        %v4598 = vadd.f32 %v4596, %v4597
        %v4599 = vrot.slane %v4598, 2
        %v4600 = vadd.f32 %v4598, %v4599
        %v4601 = vrot.slane %v4600, 1
        %v4602 = vadd.f32 %v4600, %v4601
        %v4603 = vadd.f32 %v4319, %v4335
        %v4604 = vadd.f32 %v4603, %v4351
        %v4605 = vadd.f32 %v4604, %v4367
        %v4606 = vadd.f32 %v4605, %v4383
        %v4607 = vadd.f32 %v4606, %v4399
        %v4608 = vadd.f32 %v4607, %v4415
        %v4609 = vadd.f32 %v4608, %v4431
        %v4610 = vrot.slane %v4609, 4
        %v4611 = vadd.f32 %v4609, %v4610
        %v4612 = vrot.slane %v4611, 2
        %v4613 = vadd.f32 %v4611, %v4612
        %v4614 = vrot.slane %v4613, 1
        %v4615 = vadd.f32 %v4613, %v4614
        %v4616 = vadd.f32 %v4320, %v4336
        %v4617 = vadd.f32 %v4616, %v4352
        %v4618 = vadd.f32 %v4617, %v4368
        %v4619 = vadd.f32 %v4618, %v4384
        %v4620 = vadd.f32 %v4619, %v4400
        %v4621 = vadd.f32 %v4620, %v4416
        %v4622 = vadd.f32 %v4621, %v4432
        %v4623 = vrot.slane %v4622, 4
        %v4624 = vadd.f32 %v4622, %v4623
        %v4625 = vrot.slane %v4624, 2
        %v4626 = vadd.f32 %v4624, %v4625
        %v4627 = vrot.slane %v4626, 1
        %v4628 = vadd.f32 %v4626, %v4627
        %v4629 = vadd.f32 %v4321, %v4337
        %v4630 = vadd.f32 %v4629, %v4353
        %v4631 = vadd.f32 %v4630, %v4369
        %v4632 = vadd.f32 %v4631, %v4385
        %v4633 = vadd.f32 %v4632, %v4401
        %v4634 = vadd.f32 %v4633, %v4417
        %v4635 = vadd.f32 %v4634, %v4433
        %v4636 = vrot.slane %v4635, 4
        %v4637 = vadd.f32 %v4635, %v4636
        %v4638 = vrot.slane %v4637, 2
        %v4639 = vadd.f32 %v4637, %v4638
        %v4640 = vrot.slane %v4639, 1
        %v4641 = vadd.f32 %v4639, %v4640
        %v4642 = vld [vmem:[#allocation2] sm:$0x1]
        %4644 = vset.pattern.permute.xlu0 0
        %4645 = vperm.xlu0 %4644, %v4642
        %v4646 = vpop.permute.xlu0 %4645
        %v4648 = vlaneseq
        %v4649 = vshrl.u32 %v4648, 7
        %v4650 = vsub.s32 0, %v4649
        %v4651 = vrot.slane %v4646, %v4650
        %v4652 = vadd.f32 %v4446, %v4651
        %v4653 = vadd.f32 %v4459, %v4651
        %v4654 = vadd.f32 %v4472, %v4651
        %v4655 = vadd.f32 %v4485, %v4651
        %v4656 = vadd.f32 %v4498, %v4651
        %v4657 = vadd.f32 %v4511, %v4651
        %v4658 = vadd.f32 %v4524, %v4651
        %v4659 = vadd.f32 %v4537, %v4651
        %v4660 = vadd.f32 %v4550, %v4651
        %v4661 = vadd.f32 %v4563, %v4651
        %v4662 = vadd.f32 %v4576, %v4651
        %v4663 = vadd.f32 %v4589, %v4651
        %v4664 = vadd.f32 %v4602, %v4651
        %v4665 = vadd.f32 %v4615, %v4651
        %v4666 = vadd.f32 %v4628, %v4651
        %v4667 = vadd.f32 %v4641, %v4651
        %v4684 = vcombine.low %v4652, %v4653
        %v4685 = vcombine.low %v4654, %v4655
        %v4686 = vcombine.low %v4656, %v4657
        %v4687 = vcombine.low %v4658, %v4659
        %v4689 = vunpack.c.l.s4 1966171168
        %v4690 = vunpack.c.0.s8 %v4689
        %v4691 = vlaneseq
        %v4692 = vshrl.u32 %v4691, 7
        %v4693 = vsub.s32 %v4690, %v4692
        %v4694 = vrot.slane %v4684, %v4693
        %v4696 = vunpack.c.l.s4 1966171168
        %v4697 = vunpack.c.0.s8 %v4696
        %v4698 = vlaneseq
        %v4699 = vshrl.u32 %v4698, 7
        %v4700 = vsub.s32 %v4697, %v4699
        %v4701 = vrot.slane %v4685, %v4700
        %v4703 = vunpack.c.l.s4 1966171168
        %v4704 = vunpack.c.0.s8 %v4703
        %v4705 = vlaneseq
        %v4706 = vshrl.u32 %v4705, 7
        %v4707 = vsub.s32 %v4704, %v4706
        %v4708 = vrot.slane %v4686, %v4707
        %v4710 = vunpack.c.l.s4 1966171168
        %v4711 = vunpack.c.0.s8 %v4710
        %v4712 = vlaneseq
        %v4713 = vshrl.u32 %v4712, 7
        %v4714 = vsub.s32 %v4711, %v4713
        %v4715 = vrot.slane %v4687, %v4714
        %v4716 = vcombine.low %v4694, %v4701
        %v4717 = vcombine.low %v4708, %v4715
        %v4719 = vunpack.c.l.s4 1966171168
        %v4720 = vunpack.c.0.s8 %v4719
        %v4721 = vlaneseq
        %v4722 = vshrl.u32 %v4721, 7
        %v4723 = vsub.s32 %v4720, %v4722
        %v4724 = vrot.slane %v4716, %v4723
        %v4726 = vunpack.c.l.s4 1966171168
        %v4727 = vunpack.c.0.s8 %v4726
        %v4728 = vlaneseq
        %v4729 = vshrl.u32 %v4728, 7
        %v4730 = vsub.s32 %v4727, %v4729
        %v4731 = vrot.slane %v4717, %v4730
        %v4732 = vcombine.low %v4724, %v4731
        %v4733 = vcombine.low %v4660, %v4661
        %v4734 = vcombine.low %v4662, %v4663
        %v4735 = vcombine.low %v4664, %v4665
        %v4736 = vcombine.low %v4666, %v4667
        %v4738 = vunpack.c.l.s4 1966171168
        %v4739 = vunpack.c.0.s8 %v4738
        %v4740 = vlaneseq
        %v4741 = vshrl.u32 %v4740, 7
        %v4742 = vsub.s32 %v4739, %v4741
        %v4743 = vrot.slane %v4733, %v4742
        %v4745 = vunpack.c.l.s4 1966171168
        %v4746 = vunpack.c.0.s8 %v4745
        %v4747 = vlaneseq
        %v4748 = vshrl.u32 %v4747, 7
        %v4749 = vsub.s32 %v4746, %v4748
        %v4750 = vrot.slane %v4734, %v4749
        %v4752 = vunpack.c.l.s4 1966171168
        %v4753 = vunpack.c.0.s8 %v4752
        %v4754 = vlaneseq
        %v4755 = vshrl.u32 %v4754, 7
        %v4756 = vsub.s32 %v4753, %v4755
        %v4757 = vrot.slane %v4735, %v4756
        %v4759 = vunpack.c.l.s4 1966171168
        %v4760 = vunpack.c.0.s8 %v4759
        %v4761 = vlaneseq
        %v4762 = vshrl.u32 %v4761, 7
        %v4763 = vsub.s32 %v4760, %v4762
        %v4764 = vrot.slane %v4736, %v4763
        %v4765 = vcombine.low %v4743, %v4750
        %v4766 = vcombine.low %v4757, %v4764
        %v4768 = vunpack.c.l.s4 1966171168
        %v4769 = vunpack.c.0.s8 %v4768
        %v4770 = vlaneseq
        %v4771 = vshrl.u32 %v4770, 7
        %v4772 = vsub.s32 %v4769, %v4771
        %v4773 = vrot.slane %v4765, %v4772
        %v4775 = vunpack.c.l.s4 1966171168
        %v4776 = vunpack.c.0.s8 %v4775
        %v4777 = vlaneseq
        %v4778 = vshrl.u32 %v4777, 7
        %v4779 = vsub.s32 %v4776, %v4778
        %v4780 = vrot.slane %v4766, %v4779
        %v4781 = vcombine.low %v4773, %v4780
        %4784 = vst [vmem:[%s328] sm:$0xff] %v4732
        %4785 = vst [vmem:[%s328 + $0x8] sm:$0xff] %v4781
        %s4786 = sand.u32 %s227, 1
        %s4787 = scalar_lea.sflag [#allocation4], %s4786
        %s4788 = sand.u32 %s227, 1
        %s4789 = smul.addr %s4788, 16
        %s4790 = scalar_lea.vmem [#allocation3], %s4789
        // Predicated region
        $region57: #{tpu_custom_call.1} parent=55 // pred_check
          %p4791 = pneg %p237
        $region58: #{tpu_custom_call.1} parent=55 // pred_check_branch
          %4793 = sbr.rel (%p4791) target = $region60
        $region59: #{tpu_custom_call.1} parent=55 // pred_region
          %s4794 = smul.u32 16, %s25
          %s4796 = ssub.s32 256, 256
          %4797 = vsyncadd %s4787, %s4796
          %s4798 = smul.addr %s4794, 16
          %s4799 = scalar_lea.hbm %s9, %s4798
          %s4801 = sshll.u32 %s4790, 4
          %s4802 = int_to_ptr.vmem [resolvable:$true] %s4801
          %4804 = dma.vmem_to_hbm [thread:$0]  %s4802, 256, %s4799, %s4787
        $region60: #{tpu_custom_call.1} parent=55 // pred_fallthru
          _
      $region56: #{tpu_custom_call.1} parent=5 // pred_fallthru
        _
      %p4805 = scmp.le.s32.totalorder 2, %s20
      // Predicated region
      $region61: #{tpu_custom_call.1} parent=5 // pred_check
        %p4806 = pneg %p4805
      $region62: #{tpu_custom_call.1} parent=5 // pred_check_branch
        %4808 = sbr.rel (%p4806) target = $region64
      $region63: #{tpu_custom_call.1} parent=5 // pred_region
        %s4809 = ssub.s32 %s20, 2
        // Predicated region
        $region65: #{tpu_custom_call.1} parent=63 // pred_check
          %p4810 = pneg %p243
        $region66: #{tpu_custom_call.1} parent=63 // pred_check_branch
          %4812 = sbr.rel (%p4810) target = $region68
        $region67: #{tpu_custom_call.1} parent=63 // pred_region
          %s4813 = sand.u32 %s228, 1
          %s4814 = scalar_lea.sflag [#allocation4], %s4813
          %s4815 = sand.u32 %s228, 1
          %s4816 = smul.addr %s4815, 16
          %s4817 = scalar_lea.vmem [#allocation3], %s4816
          %4818 = dma.done %s4814, 256
        $region68: #{tpu_custom_call.1} parent=63 // pred_fallthru
          _
      $region64: #{tpu_custom_call.1} parent=5 // pred_fallthru
        _
    $region6: #{tpu_custom_call.1} parent=1 // loop_footer
      %s24 = sadd.s32 1, %s20
    $region7: #{tpu_custom_call.1} parent=1 // loop_footer_branch
      %19 = sbr.rel target = $region3
    $region8: #{tpu_custom_call.1} parent=1 // loop_exit
      _
    %4819 = vsyncpa [#allocation4], 1
    %s4820 = scalar_lea.sflag [#allocation4], 1
    %4821 = vsyncpa %s4820, 1

</llo_original>
